<compile_context>
chip_gen: v7x
topology: tpu7x:2x2x1
jax: 0.10.0
libtpu: 0.0.40
codegen_flags: <defaults>
</compile_context>

<pallas_src>
import numpy as np
import jax
import jax.numpy as jnp
from jax import lax
from jax.experimental import pallas as pl
from jax.experimental.pallas import tpu as pltpu


# ----------------------------------------------------------------------------
# Kernel: one image per grid step, everything VMEM/vreg resident.
# ----------------------------------------------------------------------------
def _net_kernel(xs_ref, band1_ref, b1_ref, w2_ref, b2_ref, psel_ref,
                w3_ref, b3_ref, wl_ref, bl_ref, o_ref):
    f32 = jnp.float32

    # ---- conv1 + pool1 + relu1 -------------------------------------------
    # xs_ref[0, a, ih, di*28+w] = x[2*ih + a + di, w]  (a = pooled-row parity).
    # band1[di*28+w, b*256 + jw*16 + co] holds the 5x5 weights (b = col parity,
    # lanes 192..255 of each half are zero padding -> 128-aligned halves).
    acc0 = jnp.dot(xs_ref[0, 0], band1_ref[...], preferred_element_type=f32)  # (12, 512)
    acc1 = jnp.dot(xs_ref[0, 1], band1_ref[...], preferred_element_type=f32)  # (12, 512)
    acc = jnp.maximum(acc0, acc1)                       # max-pool over output rows
    acc = jnp.maximum(acc[:, :256], acc[:, 256:])       # max-pool over output cols
    pooled1 = jnp.maximum(acc + b1_ref[...], 0.0)       # (12, 256), lane = jw*16+ci

    # ---- conv2: 5 banded matmuls (one per row tap di), K = 192 used ---------
    # w2_ref[di][jw*16+ci, b*128 + pj*32 + co2];  out2 lane = b*128 + pj*32 + co2
    out2 = jnp.dot(pooled1[0:8, :], w2_ref[0], preferred_element_type=f32)     # (8, 256)
    for di in range(1, 5):
        out2 = out2 + jnp.dot(pooled1[di:di + 8, :], w2_ref[di],
                              preferred_element_type=f32)

    # ---- pool2 + relu2 ------------------------------------------------------
    # rows: constant 0/1 parity-selection matmuls; cols: 128-aligned lane halves.
    r_even = jnp.dot(psel_ref[0], out2, preferred_element_type=f32)            # (4, 256)
    r_odd = jnp.dot(psel_ref[1], out2, preferred_element_type=f32)             # (4, 256)
    rmax = jnp.maximum(r_even, r_odd)
    cmax = jnp.maximum(rmax[:, :128], rmax[:, 128:])                           # (4, 128)
    pooled2 = jnp.maximum(cmax + b2_ref[...], 0.0)      # (4, 128), lane = pj*32+co2

    # ---- flatten + fc3 + relu3 ---------------------------------------------
    # torch flatten permutation is folded into w3 on the host:
    #   w3[po, pj*32+co2, out] = fc3_w[out, co2*16 + po*4 + pj]
    h = jnp.dot(pooled2[0:1, :], w3_ref[0], preferred_element_type=f32)        # (1, 512)
    for po in range(1, 4):
        h = h + jnp.dot(pooled2[po:po + 1, :], w3_ref[po],
                        preferred_element_type=f32)
    h = jnp.maximum(h + b3_ref[...], 0.0)

    # ---- logits -------------------------------------------------------------
    y = jnp.dot(h, wl_ref[...], preferred_element_type=f32) + bl_ref[...]      # (1, 10)
    o_ref[0] = y.astype(o_ref.dtype)


# ----------------------------------------------------------------------------
# Host-side, one-time weight preprocessing (pure permutations / zero padding).
# ----------------------------------------------------------------------------
def prepare_params(params):
    w1 = np.asarray(params["conv1_w"], np.float32)[:, 0]      # (16, 5, 5)
    b1 = np.asarray(params["conv1_b"], np.float32)            # (16,)
    w2 = np.asarray(params["conv2_w"], np.float32)            # (32, 16, 5, 5)
    b2 = np.asarray(params["conv2_b"], np.float32)            # (32,)
    w3 = np.asarray(params["fc3_w"], np.float32)               # (512, 512) (out, in)
    b3 = np.asarray(params["fc3_b"], np.float32)                # (512,)
    wl = np.asarray(params["log_w"], np.float32)                # (10, 512)
    bl = np.asarray(params["log_b"], np.float32)                 # (10,)

    # conv1 band: row = di*28 + w ; col = b*256 + jw*16 + co.
    band1 = np.zeros((5, 28, 2, 256), np.float32)
    for di in range(5):
        for b in range(2):
            for jw in range(12):
                for dj in range(5):
                    band1[di, 2 * jw + b + dj, b, jw * 16:(jw + 1) * 16] = w1[:, di, dj]
    band1 = band1.reshape(140, 512)

    b1pad = np.zeros((1, 256), np.float32)
    b1pad[0, :192] = np.tile(b1, 12)                           # lane = jw*16 + co

    # conv2 band, one (256, 256) matrix per row tap di:
    #   row = jw*16 + ci ; col = b*128 + pj*32 + co2   (rows >= 192 stay zero).
    w2band = np.zeros((5, 256, 2, 4, 32), np.float32)
    for di in range(5):
        for b in range(2):
            for pj in range(4):
                for dj in range(5):
                    jw = 2 * pj + b + dj
                    w2band[di, jw * 16:(jw + 1) * 16, b, pj, :] = w2[:, :, di, dj].T
    w2band = w2band.reshape(5, 256, 256)

    b2tile = np.tile(b2, 4).reshape(1, 128)                    # lane = pj*32 + co2

    # Batch-independent pool2 row-parity selector: psel[a, po, 2*po+a] = 1.
    psel = np.zeros((2, 4, 8), np.float32)
    for a in range(2):
        for po in range(4):
            psel[a, po, 2 * po + a] = 1.0

    # fc3 weight with the torch flatten permutation folded in.
    w3p = w3.reshape(512, 32, 4, 4).transpose(2, 3, 1, 0).reshape(4, 128, 512)
    w3p = np.ascontiguousarray(w3p)

    return {
        "band1": jnp.asarray(band1),
        "b1": jnp.asarray(b1pad),
        "w2band": jnp.asarray(w2band),
        "b2": jnp.asarray(b2tile),
        "psel": jnp.asarray(psel),
        "w3": jnp.asarray(w3p),
        "b3": jnp.asarray(b3.reshape(1, 512)),
        "wl": jnp.asarray(np.ascontiguousarray(wl.T)),          # (512, 10) pre-transposed
        "bl": jnp.asarray(bl.reshape(1, 10)),
    }


# Static row-gather indices for the conv1 input slab: rows[a, ih, di] = 2*ih+a+di.
_ROWS = (2 * np.arange(12)[None, :, None]
         + np.arange(2)[:, None, None]
         + np.arange(5)[None, None, :])                        # (2, 12, 5), values 0..27


# ----------------------------------------------------------------------------
# Wrapper
# ----------------------------------------------------------------------------
def net_forward(x, prep):
    x = x.astype(jnp.float32)                                  # x.float()
    N = x.shape[0]
    assert x.shape[1:] == (1, 28, 28), "Net implies 1x28x28 inputs (fc3 = 32*4*4)"
    x2 = x[:, 0]                                               # (N, 28, 28)
    # Tiny host-side slab stack (~13 KB / image): xs[n, a, ih, di*28+w].
    xs = x2[:, _ROWS, :].reshape(N, 2, 12, 140)

    def rep(shape):
        return pl.BlockSpec(shape, lambda *_: (0,) * len(shape))

    flops_per_img = (2 * 2 * 12 * 140 * 512       # conv1
                     + 5 * 2 * 8 * 256 * 256      # conv2
                     + 2 * 2 * 4 * 8 * 256        # pool2 row selection
                     + 4 * 2 * 128 * 512          # fc3
                     + 2 * 512 * 10)              # logits
    weight_bytes = 4 * (140 * 512 + 256 + 5 * 256 * 256 + 128 + 2 * 4 * 8
                        + 4 * 128 * 512 + 512 + 512 * 10 + 10)

    out = pl.pallas_call(
        _net_kernel,
        out_shape=jax.ShapeDtypeStruct((N, 1, 10), jnp.float32),
        grid=(N,),
        in_specs=[
            pl.BlockSpec((1, 2, 12, 140), lambda n: (n, 0, 0, 0)),   # per-image input
            rep((140, 512)),          # band1
            rep((1, 256)),            # conv1 bias (padded)
            rep((5, 256, 256)),       # conv2 bands
            rep((1, 128)),            # conv2 bias (tiled)
            rep((2, 4, 8)),           # pool2 row-parity selector
            rep((4, 128, 512)),       # fc3 weight (flatten folded in)
            rep((1, 512)),            # fc3 bias
            rep((512, 10)),           # logits weight (pre-transposed)
            rep((1, 10)),             # logits bias
        ],
        out_specs=pl.BlockSpec((1, 1, 10), lambda n: (n, 0, 0)),
        compiler_params=pltpu.CompilerParams(
            dimension_semantics=("parallel",),
            vmem_limit_bytes=32 * 1024 * 1024),
        cost_estimate=pl.CostEstimate(
            flops=N * flops_per_img,
            transcendentals=0,
            bytes_accessed=weight_bytes + N * (2 * 12 * 140 * 4 + 10 * 4)),
    )(xs, prep["band1"], prep["b1"], prep["w2band"], prep["b2"], prep["psel"],
      prep["w3"], prep["b3"], prep["wl"], prep["bl"])
    return out.reshape(N, 10)


# ----------------------------------------------------------------------------
# Pure-JAX reference (mirrors the PyTorch forward) for a correctness check.
# ----------------------------------------------------------------------------
def reference_forward(x, params):
    x = x.astype(jnp.float32)
    dn = ("NCHW", "OIHW", "NCHW")
    y = lax.conv_general_dilated(x, params["conv1_w"], (1, 1), "VALID",
                                 dimension_numbers=dn)
    y = y + params["conv1_b"][None, :, None, None]
    y = lax.reduce_window(y, -jnp.inf, lax.max, (1, 1, 2, 2), (1, 1, 2, 2), "VALID")
    y = jnp.maximum(y, 0.0)
    y = lax.conv_general_dilated(y, params["conv2_w"], (1, 1), "VALID",
                                 dimension_numbers=dn)
    y = y + params["conv2_b"][None, :, None, None]
    y = lax.reduce_window(y, -jnp.inf, lax.max, (1, 1, 2, 2), (1, 1, 2, 2), "VALID")
    y = jnp.maximum(y, 0.0)
    y = y.reshape(y.shape[0], -1)
    y = jnp.maximum(y @ params["fc3_w"].T + params["fc3_b"], 0.0)
    return y @ params["log_w"].T + params["log_b"]


# ----------------------------------------------------------------------------
# Main
# ----------------------------------------------------------------------------
if __name__ == "__main__":
    key = jax.random.PRNGKey(0)
    ks = jax.random.split(key, 9)

    # MNIST-style input implied by fc3 = Linear(32*4*4, 512): 1x28x28, batch=2.
    x = jax.random.normal(ks[0], (2, 1, 28, 28), jnp.float32)

    params = {
        "conv1_w": jax.random.normal(ks[1], (16, 1, 5, 5), jnp.float32) * 0.1,
        "conv1_b": jax.random.normal(ks[2], (16,), jnp.float32) * 0.1,
        "conv2_w": jax.random.normal(ks[3], (32, 16, 5, 5), jnp.float32) * 0.05,
        "conv2_b": jax.random.normal(ks[4], (32,), jnp.float32) * 0.05,
        "fc3_w":   jax.random.normal(ks[5], (512, 512), jnp.float32) * 0.03,
        "fc3_b":   jax.random.normal(ks[6], (512,), jnp.float32) * 0.03,
        "log_w":   jax.random.normal(ks[7], (10, 512), jnp.float32) * 0.03,
        "log_b":   jax.random.normal(ks[8], (10,), jnp.float32) * 0.03,
    }

    prep = prepare_params(params)              # one-time host weight prep (not jitted)

    y = jax.jit(net_forward)(x, prep)
    jax.block_until_ready(y)
    assert y.shape == (2, 10) and y.dtype == jnp.float32

    y_ref = jax.jit(reference_forward)(x, params)
    jax.block_until_ready(y_ref)
    max_err = float(jnp.max(jnp.abs(y - y_ref)))
    assert max_err < 8e-2, f"kernel mismatch vs reference: max_err={max_err}"

    print("KERNEL_OK")
</pallas_src>

<mosaic_0001>
module attributes {stable_mosaic.version = 11 : i64} {
  func.func @_net_kernel(%arg0: i32, %arg1: memref<1x2x12x140xf32, #tpu.memory_space<vmem>>, %arg2: memref<140x512xf32, #tpu.memory_space<vmem>>, %arg3: memref<1x256xf32, #tpu.memory_space<vmem>>, %arg4: memref<5x256x256xf32, #tpu.memory_space<vmem>>, %arg5: memref<1x128xf32, #tpu.memory_space<vmem>>, %arg6: memref<2x4x8xf32, #tpu.memory_space<vmem>>, %arg7: memref<4x128x512xf32, #tpu.memory_space<vmem>>, %arg8: memref<1x512xf32, #tpu.memory_space<vmem>>, %arg9: memref<512x10xf32, #tpu.memory_space<vmem>>, %arg10: memref<1x10xf32, #tpu.memory_space<vmem>>, %arg11: memref<1x1x10xf32, #tpu.memory_space<vmem>>) attributes {dimension_semantics = [#tpu.dimension_semantics<parallel>], iteration_bounds = array<i64: 2>, scalar_prefetch = 0 : i64, scratch_operands = 0 : i64, tpu.core_type = #tpu.core_type<tc>, window_params = [{transform_indices = @transform_0, window_bounds = array<i64: 1, 2, 12, 140>}, {pipeline_mode = #tpu.pipeline_mode<synchronous>, transform_indices = @transform_1, window_bounds = array<i64: 140, 512>}, {pipeline_mode = #tpu.pipeline_mode<synchronous>, transform_indices = @transform_2, window_bounds = array<i64: 1, 256>}, {pipeline_mode = #tpu.pipeline_mode<synchronous>, transform_indices = @transform_3, window_bounds = array<i64: 5, 256, 256>}, {pipeline_mode = #tpu.pipeline_mode<synchronous>, transform_indices = @transform_4, window_bounds = array<i64: 1, 128>}, {pipeline_mode = #tpu.pipeline_mode<synchronous>, transform_indices = @transform_5, window_bounds = array<i64: 2, 4, 8>}, {pipeline_mode = #tpu.pipeline_mode<synchronous>, transform_indices = @transform_6, window_bounds = array<i64: 4, 128, 512>}, {pipeline_mode = #tpu.pipeline_mode<synchronous>, transform_indices = @transform_7, window_bounds = array<i64: 1, 512>}, {pipeline_mode = #tpu.pipeline_mode<synchronous>, transform_indices = @transform_8, window_bounds = array<i64: 512, 10>}, {pipeline_mode = #tpu.pipeline_mode<synchronous>, transform_indices = @transform_9, window_bounds = array<i64: 1, 10>}, {transform_indices = @transform_10, window_bounds = array<i64: 1, 1, 10>}]} {
    %c0 = arith.constant 0 : index
    %c0_0 = arith.constant 0 : index
    %c0_1 = arith.constant 0 : index
    %c0_2 = arith.constant 0 : index
    %0 = vector.load %arg1[%c0, %c0_0, %c0_1, %c0_2] : memref<1x2x12x140xf32, #tpu.memory_space<vmem>>, vector<1x1x12x140xf32>
    %1 = vector.shape_cast %0 : vector<1x1x12x140xf32> to vector<12x140xf32>
    %c0_3 = arith.constant 0 : index
    %c0_4 = arith.constant 0 : index
    %2 = vector.load %arg2[%c0_3, %c0_4] : memref<140x512xf32, #tpu.memory_space<vmem>>, vector<140x512xf32>
    %cst = arith.constant dense<0.000000e+00> : vector<12x512xf32>
    %3 = tpu.matmul %1, %2, %cst {dimension_numbers = #tpu.dot_dimension_numbers<[1], [0], [0], [1], [0, 0, 1, 1], [], []>} : vector<12x140xf32>, vector<140x512xf32>, vector<12x512xf32> -> vector<12x512xf32>
    %c0_5 = arith.constant 0 : index
    %c1 = arith.constant 1 : index
    %c0_6 = arith.constant 0 : index
    %c0_7 = arith.constant 0 : index
    %4 = vector.load %arg1[%c0_5, %c1, %c0_6, %c0_7] : memref<1x2x12x140xf32, #tpu.memory_space<vmem>>, vector<1x1x12x140xf32>
    %5 = vector.shape_cast %4 : vector<1x1x12x140xf32> to vector<12x140xf32>
    %c0_8 = arith.constant 0 : index
    %c0_9 = arith.constant 0 : index
    %6 = vector.load %arg2[%c0_8, %c0_9] : memref<140x512xf32, #tpu.memory_space<vmem>>, vector<140x512xf32>
    %cst_10 = arith.constant dense<0.000000e+00> : vector<12x512xf32>
    %7 = tpu.matmul %5, %6, %cst_10 {dimension_numbers = #tpu.dot_dimension_numbers<[1], [0], [0], [1], [0, 0, 1, 1], [], []>} : vector<12x140xf32>, vector<140x512xf32>, vector<12x512xf32> -> vector<12x512xf32>
    %8 = arith.maximumf %3, %7 : vector<12x512xf32>
    %9 = vector.extract_strided_slice %8 {offsets = [0, 0], sizes = [12, 256], strides = [1, 1]} : vector<12x512xf32> to vector<12x256xf32>
    %10 = vector.extract_strided_slice %8 {offsets = [0, 256], sizes = [12, 256], strides = [1, 1]} : vector<12x512xf32> to vector<12x256xf32>
    %11 = arith.maximumf %9, %10 : vector<12x256xf32>
    %c0_11 = arith.constant 0 : index
    %c0_12 = arith.constant 0 : index
    %12 = vector.load %arg3[%c0_11, %c0_12] : memref<1x256xf32, #tpu.memory_space<vmem>>, vector<1x256xf32>
    %13 = vector.broadcast %12 : vector<1x256xf32> to vector<12x256xf32>
    %14 = arith.addf %11, %13 : vector<12x256xf32>
    %cst_13 = arith.constant 0.000000e+00 : f32
    %15 = vector.broadcast %cst_13 : f32 to vector<12x256xf32>
    %16 = arith.maximumf %14, %15 : vector<12x256xf32>
    %17 = vector.extract_strided_slice %16 {offsets = [0, 0], sizes = [8, 256], strides = [1, 1]} : vector<12x256xf32> to vector<8x256xf32>
    %c0_14 = arith.constant 0 : index
    %c0_15 = arith.constant 0 : index
    %c0_16 = arith.constant 0 : index
    %18 = vector.load %arg4[%c0_14, %c0_15, %c0_16] : memref<5x256x256xf32, #tpu.memory_space<vmem>>, vector<1x256x256xf32>
    %19 = vector.shape_cast %18 : vector<1x256x256xf32> to vector<256x256xf32>
    %cst_17 = arith.constant dense<0.000000e+00> : vector<8x256xf32>
    %20 = tpu.matmul %17, %19, %cst_17 {dimension_numbers = #tpu.dot_dimension_numbers<[1], [0], [0], [1], [0, 0, 1, 1], [], []>} : vector<8x256xf32>, vector<256x256xf32>, vector<8x256xf32> -> vector<8x256xf32>
    %21 = vector.extract_strided_slice %16 {offsets = [1, 0], sizes = [8, 256], strides = [1, 1]} : vector<12x256xf32> to vector<8x256xf32>
    %c1_18 = arith.constant 1 : index
    %c0_19 = arith.constant 0 : index
    %c0_20 = arith.constant 0 : index
    %22 = vector.load %arg4[%c1_18, %c0_19, %c0_20] : memref<5x256x256xf32, #tpu.memory_space<vmem>>, vector<1x256x256xf32>
    %23 = vector.shape_cast %22 : vector<1x256x256xf32> to vector<256x256xf32>
    %cst_21 = arith.constant dense<0.000000e+00> : vector<8x256xf32>
    %24 = tpu.matmul %21, %23, %cst_21 {dimension_numbers = #tpu.dot_dimension_numbers<[1], [0], [0], [1], [0, 0, 1, 1], [], []>} : vector<8x256xf32>, vector<256x256xf32>, vector<8x256xf32> -> vector<8x256xf32>
    %25 = arith.addf %20, %24 : vector<8x256xf32>
    %26 = vector.extract_strided_slice %16 {offsets = [2, 0], sizes = [8, 256], strides = [1, 1]} : vector<12x256xf32> to vector<8x256xf32>
    %c2 = arith.constant 2 : index
    %c0_22 = arith.constant 0 : index
    %c0_23 = arith.constant 0 : index
    %27 = vector.load %arg4[%c2, %c0_22, %c0_23] : memref<5x256x256xf32, #tpu.memory_space<vmem>>, vector<1x256x256xf32>
    %28 = vector.shape_cast %27 : vector<1x256x256xf32> to vector<256x256xf32>
    %cst_24 = arith.constant dense<0.000000e+00> : vector<8x256xf32>
    %29 = tpu.matmul %26, %28, %cst_24 {dimension_numbers = #tpu.dot_dimension_numbers<[1], [0], [0], [1], [0, 0, 1, 1], [], []>} : vector<8x256xf32>, vector<256x256xf32>, vector<8x256xf32> -> vector<8x256xf32>
    %30 = arith.addf %25, %29 : vector<8x256xf32>
    %31 = vector.extract_strided_slice %16 {offsets = [3, 0], sizes = [8, 256], strides = [1, 1]} : vector<12x256xf32> to vector<8x256xf32>
    %c3 = arith.constant 3 : index
    %c0_25 = arith.constant 0 : index
    %c0_26 = arith.constant 0 : index
    %32 = vector.load %arg4[%c3, %c0_25, %c0_26] : memref<5x256x256xf32, #tpu.memory_space<vmem>>, vector<1x256x256xf32>
    %33 = vector.shape_cast %32 : vector<1x256x256xf32> to vector<256x256xf32>
    %cst_27 = arith.constant dense<0.000000e+00> : vector<8x256xf32>
    %34 = tpu.matmul %31, %33, %cst_27 {dimension_numbers = #tpu.dot_dimension_numbers<[1], [0], [0], [1], [0, 0, 1, 1], [], []>} : vector<8x256xf32>, vector<256x256xf32>, vector<8x256xf32> -> vector<8x256xf32>
    %35 = arith.addf %30, %34 : vector<8x256xf32>
    %36 = vector.extract_strided_slice %16 {offsets = [4, 0], sizes = [8, 256], strides = [1, 1]} : vector<12x256xf32> to vector<8x256xf32>
    %c4 = arith.constant 4 : index
    %c0_28 = arith.constant 0 : index
    %c0_29 = arith.constant 0 : index
    %37 = vector.load %arg4[%c4, %c0_28, %c0_29] : memref<5x256x256xf32, #tpu.memory_space<vmem>>, vector<1x256x256xf32>
    %38 = vector.shape_cast %37 : vector<1x256x256xf32> to vector<256x256xf32>
    %cst_30 = arith.constant dense<0.000000e+00> : vector<8x256xf32>
    %39 = tpu.matmul %36, %38, %cst_30 {dimension_numbers = #tpu.dot_dimension_numbers<[1], [0], [0], [1], [0, 0, 1, 1], [], []>} : vector<8x256xf32>, vector<256x256xf32>, vector<8x256xf32> -> vector<8x256xf32>
    %40 = arith.addf %35, %39 : vector<8x256xf32>
    %c0_31 = arith.constant 0 : index
    %c0_32 = arith.constant 0 : index
    %c0_33 = arith.constant 0 : index
    %41 = vector.load %arg6[%c0_31, %c0_32, %c0_33] : memref<2x4x8xf32, #tpu.memory_space<vmem>>, vector<1x4x8xf32>
    %42 = vector.shape_cast %41 : vector<1x4x8xf32> to vector<4x8xf32>
    %cst_34 = arith.constant dense<0.000000e+00> : vector<4x256xf32>
    %43 = tpu.matmul %42, %40, %cst_34 {dimension_numbers = #tpu.dot_dimension_numbers<[1], [0], [0], [1], [0, 0, 1, 1], [], []>} : vector<4x8xf32>, vector<8x256xf32>, vector<4x256xf32> -> vector<4x256xf32>
    %c1_35 = arith.constant 1 : index
    %c0_36 = arith.constant 0 : index
    %c0_37 = arith.constant 0 : index
    %44 = vector.load %arg6[%c1_35, %c0_36, %c0_37] : memref<2x4x8xf32, #tpu.memory_space<vmem>>, vector<1x4x8xf32>
    %45 = vector.shape_cast %44 : vector<1x4x8xf32> to vector<4x8xf32>
    %cst_38 = arith.constant dense<0.000000e+00> : vector<4x256xf32>
    %46 = tpu.matmul %45, %40, %cst_38 {dimension_numbers = #tpu.dot_dimension_numbers<[1], [0], [0], [1], [0, 0, 1, 1], [], []>} : vector<4x8xf32>, vector<8x256xf32>, vector<4x256xf32> -> vector<4x256xf32>
    %47 = arith.maximumf %43, %46 : vector<4x256xf32>
    %48 = vector.extract_strided_slice %47 {offsets = [0, 0], sizes = [4, 128], strides = [1, 1]} : vector<4x256xf32> to vector<4x128xf32>
    %49 = vector.extract_strided_slice %47 {offsets = [0, 128], sizes = [4, 128], strides = [1, 1]} : vector<4x256xf32> to vector<4x128xf32>
    %50 = arith.maximumf %48, %49 : vector<4x128xf32>
    %c0_39 = arith.constant 0 : index
    %c0_40 = arith.constant 0 : index
    %51 = vector.load %arg5[%c0_39, %c0_40] : memref<1x128xf32, #tpu.memory_space<vmem>>, vector<1x128xf32>
    %52 = vector.broadcast %51 : vector<1x128xf32> to vector<4x128xf32>
    %53 = arith.addf %50, %52 : vector<4x128xf32>
    %cst_41 = arith.constant 0.000000e+00 : f32
    %54 = vector.broadcast %cst_41 : f32 to vector<4x128xf32>
    %55 = arith.maximumf %53, %54 : vector<4x128xf32>
    %56 = vector.extract_strided_slice %55 {offsets = [0, 0], sizes = [1, 128], strides = [1, 1]} : vector<4x128xf32> to vector<1x128xf32>
    %c0_42 = arith.constant 0 : index
    %c0_43 = arith.constant 0 : index
    %c0_44 = arith.constant 0 : index
    %57 = vector.load %arg7[%c0_42, %c0_43, %c0_44] : memref<4x128x512xf32, #tpu.memory_space<vmem>>, vector<1x128x512xf32>
    %58 = vector.shape_cast %57 : vector<1x128x512xf32> to vector<128x512xf32>
    %cst_45 = arith.constant dense<0.000000e+00> : vector<1x512xf32>
    %59 = tpu.matmul %56, %58, %cst_45 {dimension_numbers = #tpu.dot_dimension_numbers<[1], [0], [0], [1], [0, 0, 1, 1], [], []>} : vector<1x128xf32>, vector<128x512xf32>, vector<1x512xf32> -> vector<1x512xf32>
    %60 = vector.extract_strided_slice %55 {offsets = [1, 0], sizes = [1, 128], strides = [1, 1]} : vector<4x128xf32> to vector<1x128xf32>
    %c1_46 = arith.constant 1 : index
    %c0_47 = arith.constant 0 : index
    %c0_48 = arith.constant 0 : index
    %61 = vector.load %arg7[%c1_46, %c0_47, %c0_48] : memref<4x128x512xf32, #tpu.memory_space<vmem>>, vector<1x128x512xf32>
    %62 = vector.shape_cast %61 : vector<1x128x512xf32> to vector<128x512xf32>
    %cst_49 = arith.constant dense<0.000000e+00> : vector<1x512xf32>
    %63 = tpu.matmul %60, %62, %cst_49 {dimension_numbers = #tpu.dot_dimension_numbers<[1], [0], [0], [1], [0, 0, 1, 1], [], []>} : vector<1x128xf32>, vector<128x512xf32>, vector<1x512xf32> -> vector<1x512xf32>
    %64 = arith.addf %59, %63 : vector<1x512xf32>
    %65 = vector.extract_strided_slice %55 {offsets = [2, 0], sizes = [1, 128], strides = [1, 1]} : vector<4x128xf32> to vector<1x128xf32>
    %c2_50 = arith.constant 2 : index
    %c0_51 = arith.constant 0 : index
    %c0_52 = arith.constant 0 : index
    %66 = vector.load %arg7[%c2_50, %c0_51, %c0_52] : memref<4x128x512xf32, #tpu.memory_space<vmem>>, vector<1x128x512xf32>
    %67 = vector.shape_cast %66 : vector<1x128x512xf32> to vector<128x512xf32>
    %cst_53 = arith.constant dense<0.000000e+00> : vector<1x512xf32>
    %68 = tpu.matmul %65, %67, %cst_53 {dimension_numbers = #tpu.dot_dimension_numbers<[1], [0], [0], [1], [0, 0, 1, 1], [], []>} : vector<1x128xf32>, vector<128x512xf32>, vector<1x512xf32> -> vector<1x512xf32>
    %69 = arith.addf %64, %68 : vector<1x512xf32>
    %70 = vector.extract_strided_slice %55 {offsets = [3, 0], sizes = [1, 128], strides = [1, 1]} : vector<4x128xf32> to vector<1x128xf32>
    %c3_54 = arith.constant 3 : index
    %c0_55 = arith.constant 0 : index
    %c0_56 = arith.constant 0 : index
    %71 = vector.load %arg7[%c3_54, %c0_55, %c0_56] : memref<4x128x512xf32, #tpu.memory_space<vmem>>, vector<1x128x512xf32>
    %72 = vector.shape_cast %71 : vector<1x128x512xf32> to vector<128x512xf32>
    %cst_57 = arith.constant dense<0.000000e+00> : vector<1x512xf32>
    %73 = tpu.matmul %70, %72, %cst_57 {dimension_numbers = #tpu.dot_dimension_numbers<[1], [0], [0], [1], [0, 0, 1, 1], [], []>} : vector<1x128xf32>, vector<128x512xf32>, vector<1x512xf32> -> vector<1x512xf32>
    %74 = arith.addf %69, %73 : vector<1x512xf32>
    %c0_58 = arith.constant 0 : index
    %c0_59 = arith.constant 0 : index
    %75 = vector.load %arg8[%c0_58, %c0_59] : memref<1x512xf32, #tpu.memory_space<vmem>>, vector<1x512xf32>
    %76 = arith.addf %74, %75 : vector<1x512xf32>
    %cst_60 = arith.constant 0.000000e+00 : f32
    %77 = vector.broadcast %cst_60 : f32 to vector<1x512xf32>
    %78 = arith.maximumf %76, %77 : vector<1x512xf32>
    %c0_61 = arith.constant 0 : index
    %c0_62 = arith.constant 0 : index
    %79 = vector.load %arg9[%c0_61, %c0_62] : memref<512x10xf32, #tpu.memory_space<vmem>>, vector<512x10xf32>
    %cst_63 = arith.constant dense<0.000000e+00> : vector<1x10xf32>
    %80 = tpu.matmul %78, %79, %cst_63 {dimension_numbers = #tpu.dot_dimension_numbers<[1], [0], [0], [1], [0, 0, 1, 1], [], []>} : vector<1x512xf32>, vector<512x10xf32>, vector<1x10xf32> -> vector<1x10xf32>
    %c0_64 = arith.constant 0 : index
    %c0_65 = arith.constant 0 : index
    %81 = vector.load %arg10[%c0_64, %c0_65] : memref<1x10xf32, #tpu.memory_space<vmem>>, vector<1x10xf32>
    %82 = arith.addf %80, %81 : vector<1x10xf32>
    %c0_66 = arith.constant 0 : index
    %c0_67 = arith.constant 0 : index
    %c0_68 = arith.constant 0 : index
    %83 = vector.load %arg11[%c0_66, %c0_67, %c0_68] : memref<1x1x10xf32, #tpu.memory_space<vmem>>, vector<1x1x10xf32>
    %84 = vector.shape_cast %83 : vector<1x1x10xf32> to vector<1x10xf32>
    %85 = vector.shape_cast %82 : vector<1x10xf32> to vector<1x1x10xf32>
    tpu.vector_store %arg11[%c0_66, %c0_67, %c0_68], %85 {strides = array<i32>} : memref<1x1x10xf32, #tpu.memory_space<vmem>>, vector<1x1x10xf32>,
    return
  }
  func.func @transform_0(%arg0: i32) -> (i32, i32, i32, i32) {
    %c0_i32 = arith.constant 0 : i32
    %c0_i32_0 = arith.constant 0 : i32
    %c0_i32_1 = arith.constant 0 : i32
    %c0_i32_2 = arith.constant 0 : i32
    return %arg0, %c0_i32, %c0_i32_0, %c0_i32_1 : i32, i32, i32, i32
  }
  func.func @transform_1(%arg0: i32) -> (i32, i32) {
    %c0_i32 = arith.constant 0 : i32
    %c0_i32_0 = arith.constant 0 : i32
    %c0_i32_1 = arith.constant 0 : i32
    return %c0_i32, %c0_i32_0 : i32, i32
  }
  func.func @transform_2(%arg0: i32) -> (i32, i32) {
    %c0_i32 = arith.constant 0 : i32
    %c0_i32_0 = arith.constant 0 : i32
    %c0_i32_1 = arith.constant 0 : i32
    return %c0_i32, %c0_i32_0 : i32, i32
  }
  func.func @transform_3(%arg0: i32) -> (i32, i32, i32) {
    %c0_i32 = arith.constant 0 : i32
    %c0_i32_0 = arith.constant 0 : i32
    %c0_i32_1 = arith.constant 0 : i32
    %c0_i32_2 = arith.constant 0 : i32
    return %c0_i32, %c0_i32_0, %c0_i32_1 : i32, i32, i32
  }
  func.func @transform_4(%arg0: i32) -> (i32, i32) {
    %c0_i32 = arith.constant 0 : i32
    %c0_i32_0 = arith.constant 0 : i32
    %c0_i32_1 = arith.constant 0 : i32
    return %c0_i32, %c0_i32_0 : i32, i32
  }
  func.func @transform_5(%arg0: i32) -> (i32, i32, i32) {
    %c0_i32 = arith.constant 0 : i32
    %c0_i32_0 = arith.constant 0 : i32
    %c0_i32_1 = arith.constant 0 : i32
    %c0_i32_2 = arith.constant 0 : i32
    return %c0_i32, %c0_i32_0, %c0_i32_1 : i32, i32, i32
  }
  func.func @transform_6(%arg0: i32) -> (i32, i32, i32) {
    %c0_i32 = arith.constant 0 : i32
    %c0_i32_0 = arith.constant 0 : i32
    %c0_i32_1 = arith.constant 0 : i32
    %c0_i32_2 = arith.constant 0 : i32
    return %c0_i32, %c0_i32_0, %c0_i32_1 : i32, i32, i32
  }
  func.func @transform_7(%arg0: i32) -> (i32, i32) {
    %c0_i32 = arith.constant 0 : i32
    %c0_i32_0 = arith.constant 0 : i32
    %c0_i32_1 = arith.constant 0 : i32
    return %c0_i32, %c0_i32_0 : i32, i32
  }
  func.func @transform_8(%arg0: i32) -> (i32, i32) {
    %c0_i32 = arith.constant 0 : i32
    %c0_i32_0 = arith.constant 0 : i32
    %c0_i32_1 = arith.constant 0 : i32
    return %c0_i32, %c0_i32_0 : i32, i32
  }
  func.func @transform_9(%arg0: i32) -> (i32, i32) {
    %c0_i32 = arith.constant 0 : i32
    %c0_i32_0 = arith.constant 0 : i32
    %c0_i32_1 = arith.constant 0 : i32
    return %c0_i32, %c0_i32_0 : i32, i32
  }
  func.func @transform_10(%arg0: i32) -> (i32, i32, i32) {
    %c0_i32 = arith.constant 0 : i32
    %c0_i32_0 = arith.constant 0 : i32
    %c0_i32_1 = arith.constant 0 : i32
    return %arg0, %c0_i32, %c0_i32_0 : i32, i32, i32
  }
}

</mosaic_0001>

<llo_original>
// kernel: net_forward.1
$region0: #{net_forward.1}
  #allocation0 [shape = 'u32[]', space=smem, size = 0x4, offset = 0x4, fixed_abs, tag = 'smem constant byte address 0x4 - core index']
  #allocation1 [shape = 'u32[144,128]{1,0:T(1,128)}', space=vmem, size = 0x12000, scoped, tag = 'internal scratch']
  %s0 = inlined_call_operand.vmem [shape: f32[2,2,12,140], index: 0, kind: input, shape index: {}]
  %s1 = inlined_call_operand.hbm [shape: f32[140,512], index: 1, kind: input, shape index: {}]
  %s2 = inlined_call_operand.vmem [shape: f32[1,256], index: 2, kind: input, shape index: {}]
  %s3 = inlined_call_operand.vmem [shape: f32[5,256,256], index: 3, kind: input, shape index: {}]
  %s4 = inlined_call_operand.vmem [shape: f32[1,128], index: 4, kind: input, shape index: {}]
  %s5 = inlined_call_operand.vmem [shape: f32[2,4,8], index: 5, kind: input, shape index: {}]
  %s6 = inlined_call_operand.hbm [shape: f32[4,128,512], index: 6, kind: input, shape index: {}]
  %s7 = inlined_call_operand.vmem [shape: f32[1,512], index: 7, kind: input, shape index: {}]
  %s8 = inlined_call_operand.vmem [shape: f32[512,10], index: 8, kind: input, shape index: {}]
  %s9 = inlined_call_operand.vmem [shape: f32[1,10], index: 9, kind: input, shape index: {}]
  %s10 = inlined_call_operand.hbm [shape: f32[2,1,10], index: 10, kind: output, shape index: {}]
  %s11 = sld [smem:[#allocation0]]
  $region81: #{net_forward.1} parent=0
    _
  %s13 = ssub.s32 1, %s11
  %s14 = scalar_select 0, %s13, %s11
  $region1: #{net_forward.1} parent=0
    #allocation2 [shape = 'u8[294912]{0}', space=vmem, size = 0x48000, scoped, tag = 'input window, operand 1, single buffered']
    #allocation3 [shape = 's32[2]{0}', space=sflag, size = 0x8, scoped, tag = 'scoped memory for net_forward.1']
    #allocation4 [shape = 's32[2]{0}', space=sflag, size = 0x8, scoped, tag = 'scoped memory for net_forward.1']
    #allocation5 [shape = 'u8[1048576]{0}', space=vmem, size = 0x100000, scoped, tag = 'input window, operand 6, single buffered']
    #allocation6 [shape = 's32[1]{0}', space=sflag, size = 0x4, scoped, tag = 'scoped memory for net_forward.1']
    #allocation7 [shape = 'u8[1024]{0}', space=vmem, size = 0x400, scoped, tag = 'output window, operand 0']
    %15 = vsyncpa [#allocation3], 0
    %16 = vsyncpa [#allocation6], 0
    %17 = vsyncpa [#allocation4], 0
    %s18 = scalar_lea.sflag [#allocation4], 1
    %19 = vsyncpa %s18, 0
    loop: start=0, step=1, limit=4
    $region2: #{net_forward.1} parent=1 // loop_pre_header
      _
    $region3: #{net_forward.1} parent=1 // loop_header
      %s21 = sphi 0, %s25
      %p22 = scmp.ge.s32.totalorder %s21, 4
      %s31 = sphi 0, %s33
      %s34 = sphi 0, %s31
      %s35 = sphi 0, %s34
      %s51 = sphi 0, %s35
      %s55 = sphi 0, %s55
      %s57 = sphi 0, %s55
      %s58 = sphi 0, %s57
      %s72 = sphi 0, %s58
      %s76 = sphi 0, %s76
      %s78 = sphi 0, %s76
      %s79 = sphi 0, %s78
      %s93 = sphi 0, %s79
      %s97 = sphi 0, %s97
      %s99 = sphi 0, %s97
      %s100 = sphi 0, %s99
      %s114 = sphi 0, %s100
      %s118 = sphi 0, %s118
      %s120 = sphi 0, %s118
      %s121 = sphi 0, %s120
      %s135 = sphi 0, %s121
      %s139 = sphi 0, %s139
      %s141 = sphi 0, %s139
      %s142 = sphi 0, %s141
      %s156 = sphi 0, %s142
      %s160 = sphi 0, %s160
      %s162 = sphi 0, %s160
      %s163 = sphi 0, %s162
      %s177 = sphi 0, %s163
      %s181 = sphi 0, %s181
      %s183 = sphi 0, %s181
      %s184 = sphi 0, %s183
      %s198 = sphi 0, %s184
      %s202 = sphi 0, %s202
      %s204 = sphi 0, %s202
      %s205 = sphi 0, %s204
      %s219 = sphi 0, %s205
      %s223 = sphi 0, %s223
      %s225 = sphi 0, %s223
      %s226 = sphi 0, %s225
      %s240 = sphi 0, %s226
      %s246 = sphi 0, %s248
      %s249 = sphi 0, %s246
      %s250 = sphi 0, %s249
      %s266 = sphi 0, %s250
    $region4: #{net_forward.1} parent=1 // loop_header_branch
      %24 = sbr.rel (%p22) target = $region8
    $region5: #{net_forward.1} parent=1 // loop_body
      %s26 = ssub.s32 %s21, 1
      %s27 = ssub.s32 %s21, 2
      %s28 = sadd.s32 %s21, 1
      %s29 = ssub.s32 %s21, %s28
      %p30 = scmp.eq.s32.totalorder %s29, 0
      %s32 = sadd.s32 %s31, 1
      %s33 = scalar_select %p30, %s31, %s32
      %p36 = pneg %p30
      %p37 = scmp.eq.s32.totalorder %s21, 1
      %p38 = por %p36, %p37
      %p39 = scmp.ne.s32.totalorder %s31, %s34
      %p40 = scmp.eq.s32.totalorder %s21, 0
      %p41 = por %p39, %p40
      %p42 = scmp.ne.s32.totalorder %s31, %s34
      %p43 = scmp.eq.s32.totalorder %s26, 1
      %p44 = por %p42, %p43
      %p45 = scmp.ne.s32.totalorder %s34, %s35
      %p46 = scmp.eq.s32.totalorder %s26, 0
      %p47 = por %p45, %p46
      %p48 = scmp.ne.s32.totalorder %s34, %s35
      %p49 = scmp.eq.s32.totalorder %s27, 1
      %p50 = por %p48, %p49
      %p52 = scmp.ne.s32.totalorder %s35, %s51
      %p53 = scmp.eq.s32.totalorder %s27, 0
      %p54 = por %p52, %p53
      %s56 = sadd.s32 %s55, 1
      %p59 = scmp.eq.s32.totalorder %s21, 1
      %p60 = scmp.ne.s32.totalorder %s55, %s57
      %p61 = scmp.eq.s32.totalorder %s21, 0
      %p62 = por %p60, %p61
      %p63 = scmp.ne.s32.totalorder %s55, %s57
      %p64 = scmp.eq.s32.totalorder %s26, 1
      %p65 = por %p63, %p64
      %p66 = scmp.ne.s32.totalorder %s57, %s58
      %p67 = scmp.eq.s32.totalorder %s26, 0
      %p68 = por %p66, %p67
      %p69 = scmp.ne.s32.totalorder %s57, %s58
      %p70 = scmp.eq.s32.totalorder %s27, 1
      %p71 = por %p69, %p70
      %p73 = scmp.ne.s32.totalorder %s58, %s72
      %p74 = scmp.eq.s32.totalorder %s27, 0
      %p75 = por %p73, %p74
      %s77 = sadd.s32 %s76, 1
      %p80 = scmp.eq.s32.totalorder %s21, 1
      %p81 = scmp.ne.s32.totalorder %s76, %s78
      %p82 = scmp.eq.s32.totalorder %s21, 0
      %p83 = por %p81, %p82
      %p84 = scmp.ne.s32.totalorder %s76, %s78
      %p85 = scmp.eq.s32.totalorder %s26, 1
      %p86 = por %p84, %p85
      %p87 = scmp.ne.s32.totalorder %s78, %s79
      %p88 = scmp.eq.s32.totalorder %s26, 0
      %p89 = por %p87, %p88
      %p90 = scmp.ne.s32.totalorder %s78, %s79
      %p91 = scmp.eq.s32.totalorder %s27, 1
      %p92 = por %p90, %p91
      %p94 = scmp.ne.s32.totalorder %s79, %s93
      %p95 = scmp.eq.s32.totalorder %s27, 0
      %p96 = por %p94, %p95
      %s98 = sadd.s32 %s97, 1
      %p101 = scmp.eq.s32.totalorder %s21, 1
      %p102 = scmp.ne.s32.totalorder %s97, %s99
      %p103 = scmp.eq.s32.totalorder %s21, 0
      %p104 = por %p102, %p103
      %p105 = scmp.ne.s32.totalorder %s97, %s99
      %p106 = scmp.eq.s32.totalorder %s26, 1
      %p107 = por %p105, %p106
      %p108 = scmp.ne.s32.totalorder %s99, %s100
      %p109 = scmp.eq.s32.totalorder %s26, 0
      %p110 = por %p108, %p109
      %p111 = scmp.ne.s32.totalorder %s99, %s100
      %p112 = scmp.eq.s32.totalorder %s27, 1
      %p113 = por %p111, %p112
      %p115 = scmp.ne.s32.totalorder %s100, %s114
      %p116 = scmp.eq.s32.totalorder %s27, 0
      %p117 = por %p115, %p116
      %s119 = sadd.s32 %s118, 1
      %p122 = scmp.eq.s32.totalorder %s21, 1
      %p123 = scmp.ne.s32.totalorder %s118, %s120
      %p124 = scmp.eq.s32.totalorder %s21, 0
      %p125 = por %p123, %p124
      %p126 = scmp.ne.s32.totalorder %s118, %s120
      %p127 = scmp.eq.s32.totalorder %s26, 1
      %p128 = por %p126, %p127
      %p129 = scmp.ne.s32.totalorder %s120, %s121
      %p130 = scmp.eq.s32.totalorder %s26, 0
      %p131 = por %p129, %p130
      %p132 = scmp.ne.s32.totalorder %s120, %s121
      %p133 = scmp.eq.s32.totalorder %s27, 1
      %p134 = por %p132, %p133
      %p136 = scmp.ne.s32.totalorder %s121, %s135
      %p137 = scmp.eq.s32.totalorder %s27, 0
      %p138 = por %p136, %p137
      %s140 = sadd.s32 %s139, 1
      %p143 = scmp.eq.s32.totalorder %s21, 1
      %p144 = scmp.ne.s32.totalorder %s139, %s141
      %p145 = scmp.eq.s32.totalorder %s21, 0
      %p146 = por %p144, %p145
      %p147 = scmp.ne.s32.totalorder %s139, %s141
      %p148 = scmp.eq.s32.totalorder %s26, 1
      %p149 = por %p147, %p148
      %p150 = scmp.ne.s32.totalorder %s141, %s142
      %p151 = scmp.eq.s32.totalorder %s26, 0
      %p152 = por %p150, %p151
      %p153 = scmp.ne.s32.totalorder %s141, %s142
      %p154 = scmp.eq.s32.totalorder %s27, 1
      %p155 = por %p153, %p154
      %p157 = scmp.ne.s32.totalorder %s142, %s156
      %p158 = scmp.eq.s32.totalorder %s27, 0
      %p159 = por %p157, %p158
      %s161 = sadd.s32 %s160, 1
      %p164 = scmp.eq.s32.totalorder %s21, 1
      %p165 = scmp.ne.s32.totalorder %s160, %s162
      %p166 = scmp.eq.s32.totalorder %s21, 0
      %p167 = por %p165, %p166
      %p168 = scmp.ne.s32.totalorder %s160, %s162
      %p169 = scmp.eq.s32.totalorder %s26, 1
      %p170 = por %p168, %p169
      %p171 = scmp.ne.s32.totalorder %s162, %s163
      %p172 = scmp.eq.s32.totalorder %s26, 0
      %p173 = por %p171, %p172
      %p174 = scmp.ne.s32.totalorder %s162, %s163
      %p175 = scmp.eq.s32.totalorder %s27, 1
      %p176 = por %p174, %p175
      %p178 = scmp.ne.s32.totalorder %s163, %s177
      %p179 = scmp.eq.s32.totalorder %s27, 0
      %p180 = por %p178, %p179
      %s182 = sadd.s32 %s181, 1
      %p185 = scmp.eq.s32.totalorder %s21, 1
      %p186 = scmp.ne.s32.totalorder %s181, %s183
      %p187 = scmp.eq.s32.totalorder %s21, 0
      %p188 = por %p186, %p187
      %p189 = scmp.ne.s32.totalorder %s181, %s183
      %p190 = scmp.eq.s32.totalorder %s26, 1
      %p191 = por %p189, %p190
      %p192 = scmp.ne.s32.totalorder %s183, %s184
      %p193 = scmp.eq.s32.totalorder %s26, 0
      %p194 = por %p192, %p193
      %p195 = scmp.ne.s32.totalorder %s183, %s184
      %p196 = scmp.eq.s32.totalorder %s27, 1
      %p197 = por %p195, %p196
      %p199 = scmp.ne.s32.totalorder %s184, %s198
      %p200 = scmp.eq.s32.totalorder %s27, 0
      %p201 = por %p199, %p200
      %s203 = sadd.s32 %s202, 1
      %p206 = scmp.eq.s32.totalorder %s21, 1
      %p207 = scmp.ne.s32.totalorder %s202, %s204
      %p208 = scmp.eq.s32.totalorder %s21, 0
      %p209 = por %p207, %p208
      %p210 = scmp.ne.s32.totalorder %s202, %s204
      %p211 = scmp.eq.s32.totalorder %s26, 1
      %p212 = por %p210, %p211
      %p213 = scmp.ne.s32.totalorder %s204, %s205
      %p214 = scmp.eq.s32.totalorder %s26, 0
      %p215 = por %p213, %p214
      %p216 = scmp.ne.s32.totalorder %s204, %s205
      %p217 = scmp.eq.s32.totalorder %s27, 1
      %p218 = por %p216, %p217
      %p220 = scmp.ne.s32.totalorder %s205, %s219
      %p221 = scmp.eq.s32.totalorder %s27, 0
      %p222 = por %p220, %p221
      %s224 = sadd.s32 %s223, 1
      %p227 = scmp.eq.s32.totalorder %s21, 1
      %p228 = scmp.ne.s32.totalorder %s223, %s225
      %p229 = scmp.eq.s32.totalorder %s21, 0
      %p230 = por %p228, %p229
      %p231 = scmp.ne.s32.totalorder %s223, %s225
      %p232 = scmp.eq.s32.totalorder %s26, 1
      %p233 = por %p231, %p232
      %p234 = scmp.ne.s32.totalorder %s225, %s226
      %p235 = scmp.eq.s32.totalorder %s26, 0
      %p236 = por %p234, %p235
      %p237 = scmp.ne.s32.totalorder %s225, %s226
      %p238 = scmp.eq.s32.totalorder %s27, 1
      %p239 = por %p237, %p238
      %p241 = scmp.ne.s32.totalorder %s226, %s240
      %p242 = scmp.eq.s32.totalorder %s27, 0
      %p243 = por %p241, %p242
      %s244 = ssub.s32 %s21, %s28
      %p245 = scmp.eq.s32.totalorder %s244, 0
      %s247 = sadd.s32 %s246, 1
      %s248 = scalar_select %p245, %s246, %s247
      %p251 = pneg %p245
      %p252 = scmp.eq.s32.totalorder %s21, 1
      %p253 = por %p251, %p252
      %p254 = scmp.ne.s32.totalorder %s246, %s249
      %p255 = scmp.eq.s32.totalorder %s21, 0
      %p256 = por %p254, %p255
      %p257 = scmp.ne.s32.totalorder %s246, %s249
      %p258 = scmp.eq.s32.totalorder %s26, 1
      %p259 = por %p257, %p258
      %p260 = scmp.ne.s32.totalorder %s249, %s250
      %p261 = scmp.eq.s32.totalorder %s26, 0
      %p262 = por %p260, %p261
      %p263 = scmp.ne.s32.totalorder %s249, %s250
      %p264 = scmp.eq.s32.totalorder %s27, 1
      %p265 = por %p263, %p264
      %p267 = scmp.ne.s32.totalorder %s250, %s266
      %p268 = scmp.eq.s32.totalorder %s27, 0
      %p269 = por %p267, %p268
      %p270 = scmp.le.s32.totalorder 1, %s21
      %p271 = scmp.lt.s32.totalorder %s21, 3
      %p272 = pnand %p270, %p271
      %p273 = pneg %p272
      // Predicated region
      $region9: #{net_forward.1} parent=5 // pred_check
        _
      $region10: #{net_forward.1} parent=5 // pred_check_branch
        %275 = sbr.rel (%p272) target = $region12
      $region11: #{net_forward.1} parent=5 // pred_region
        %s276 = ssub.s32 %s21, 1
        // Predicated region
        $region13: #{net_forward.1} parent=11 // pred_check
          %p277 = pneg %p68
        $region14: #{net_forward.1} parent=11 // pred_check_branch
          %279 = sbr.rel (%p277) target = $region16
        $region15: #{net_forward.1} parent=11 // pred_region
          %s281 = ssub.s32 9216, 9216
          %282 = vsyncadd [#allocation3], %s281
          %s283 = sshll.u32 [#allocation2], 4
          %s284 = int_to_ptr.vmem [resolvable:$true] %s283
          %289 = dma.hbm_to_vmem [thread:$0]  %s1, 9216, %s284, [#allocation3], 512, 512, 32
        $region16: #{net_forward.1} parent=11 // pred_fallthru
          _
        // Predicated region
        $region17: #{net_forward.1} parent=11 // pred_check
          %p290 = pneg %p89
        $region18: #{net_forward.1} parent=11 // pred_check_branch
          %292 = sbr.rel (%p290) target = $region20
        $region19: #{net_forward.1} parent=11 // pred_region
          _
        $region20: #{net_forward.1} parent=11 // pred_fallthru
          _
        // Predicated region
        $region21: #{net_forward.1} parent=11 // pred_check
          %p293 = pneg %p110
        $region22: #{net_forward.1} parent=11 // pred_check_branch
          %295 = sbr.rel (%p293) target = $region24
        $region23: #{net_forward.1} parent=11 // pred_region
          _
        $region24: #{net_forward.1} parent=11 // pred_fallthru
          _
        // Predicated region
        $region25: #{net_forward.1} parent=11 // pred_check
          %p296 = pneg %p131
        $region26: #{net_forward.1} parent=11 // pred_check_branch
          %298 = sbr.rel (%p296) target = $region28
        $region27: #{net_forward.1} parent=11 // pred_region
          _
        $region28: #{net_forward.1} parent=11 // pred_fallthru
          _
        // Predicated region
        $region29: #{net_forward.1} parent=11 // pred_check
          %p299 = pneg %p152
        $region30: #{net_forward.1} parent=11 // pred_check_branch
          %301 = sbr.rel (%p299) target = $region32
        $region31: #{net_forward.1} parent=11 // pred_region
          _
        $region32: #{net_forward.1} parent=11 // pred_fallthru
          _
        // Predicated region
        $region33: #{net_forward.1} parent=11 // pred_check
          %p302 = pneg %p173
        $region34: #{net_forward.1} parent=11 // pred_check_branch
          %304 = sbr.rel (%p302) target = $region36
        $region35: #{net_forward.1} parent=11 // pred_region
          %s306 = ssub.s32 32768, 32768
          %307 = vsyncadd [#allocation6], %s306
          %s308 = sshll.u32 [#allocation5], 4
          %s309 = int_to_ptr.vmem [resolvable:$true] %s308
          %314 = dma.hbm_to_vmem [thread:$0]  %s6, 32768, %s309, [#allocation6], 512, 512, 32
        $region36: #{net_forward.1} parent=11 // pred_fallthru
          _
        // Predicated region
        $region37: #{net_forward.1} parent=11 // pred_check
          %p315 = pneg %p194
        $region38: #{net_forward.1} parent=11 // pred_check_branch
          %317 = sbr.rel (%p315) target = $region40
        $region39: #{net_forward.1} parent=11 // pred_region
          _
        $region40: #{net_forward.1} parent=11 // pred_fallthru
          _
        // Predicated region
        $region41: #{net_forward.1} parent=11 // pred_check
          %p318 = pneg %p215
        $region42: #{net_forward.1} parent=11 // pred_check_branch
          %320 = sbr.rel (%p318) target = $region44
        $region43: #{net_forward.1} parent=11 // pred_region
          _
        $region44: #{net_forward.1} parent=11 // pred_fallthru
          _
        // Predicated region
        $region45: #{net_forward.1} parent=11 // pred_check
          %p321 = pneg %p236
        $region46: #{net_forward.1} parent=11 // pred_check_branch
          %323 = sbr.rel (%p321) target = $region48
        $region47: #{net_forward.1} parent=11 // pred_region
          _
        $region48: #{net_forward.1} parent=11 // pred_fallthru
          _
      $region12: #{net_forward.1} parent=5 // pred_fallthru
        _
      %p324 = scmp.lt.s32.totalorder %s21, 2
      // Predicated region
      $region49: #{net_forward.1} parent=5 // pred_check
        %p325 = pneg %p324
      $region50: #{net_forward.1} parent=5 // pred_check_branch
        %327 = sbr.rel (%p325) target = $region52
      $region51: #{net_forward.1} parent=5 // pred_region
        // Predicated region
        $region53: #{net_forward.1} parent=51 // pred_check
          %p328 = pneg %p41
        $region54: #{net_forward.1} parent=51 // pred_check_branch
          %330 = sbr.rel (%p328) target = $region56
        $region55: #{net_forward.1} parent=51 // pred_region
          %p331 = scmp.lt.s32.totalorder %s21, 1
          %s332 = scalar_select %p331, %s21, 1
          %s333 = smul.addr %s332, 8
          %s334 = smul.addr %s333, 8
          %s335 = scalar_lea.vmem %s0, %s334
        $region56: #{net_forward.1} parent=51 // pred_fallthru
          _
      $region52: #{net_forward.1} parent=5 // pred_fallthru
        _
      %p336 = scmp.le.s32.totalorder 1, %s21
      %p337 = scmp.lt.s32.totalorder %s21, 3
      %p338 = pnand %p336, %p337
      %p339 = pneg %p338
      // Predicated region
      $region57: #{net_forward.1} parent=5 // pred_check
        _
      $region58: #{net_forward.1} parent=5 // pred_check_branch
        %341 = sbr.rel (%p338) target = $region60
      $region59: #{net_forward.1} parent=5 // pred_region
        %s342 = ssub.s32 %s21, 1
        // Predicated region
        $region61: #{net_forward.1} parent=59 // pred_check
          %p343 = pneg %p68
        $region62: #{net_forward.1} parent=59 // pred_check_branch
          %345 = sbr.rel (%p343) target = $region64
        $region63: #{net_forward.1} parent=59 // pred_region
          %346 = dma.done [#allocation3], 9216
        $region64: #{net_forward.1} parent=59 // pred_fallthru
          _
        // Predicated region
        $region65: #{net_forward.1} parent=59 // pred_check
          %p347 = pneg %p173
        $region66: #{net_forward.1} parent=59 // pred_check_branch
          %349 = sbr.rel (%p347) target = $region68
        $region67: #{net_forward.1} parent=59 // pred_region
          %350 = dma.done [#allocation6], 32768
        $region68: #{net_forward.1} parent=59 // pred_fallthru
          _
        %p351 = scmp.lt.s32.totalorder %s26, 1
        %s352 = scalar_select %p351, %s26, 1
        %s353 = smul.addr %s352, 8
        %s354 = smul.addr %s353, 8
        %s355 = scalar_lea.vmem %s0, %s354
        %p356 = pneg %p47
        %p357 = pneg %p44
        %p358 = pneg %p68
        %p359 = pneg %p65
        %p360 = pneg %p89
        %p361 = pneg %p86
        %p362 = pneg %p110
        %p363 = pneg %p107
        %p364 = pneg %p131
        %p365 = pneg %p128
        %p366 = pneg %p152
        %p367 = pneg %p149
        %p368 = pneg %p173
        %p369 = pneg %p170
        %p370 = pneg %p194
        %p371 = pneg %p191
        %p372 = pneg %p215
        %p373 = pneg %p212
        %p374 = pneg %p236
        %p375 = pneg %p233
        %p376 = pneg %p262
        %p377 = pneg %p259
        %s378 = sand.u32 %s249, 1
        %s379 = scalar_lea.sflag [#allocation4], %s378
        %s380 = sand.u32 %s249, 1
        %s381 = scalar_lea.vmem [#allocation7], %s380
        %p382 = scmp.lt.s32.totalorder %s26, 1
        %s383 = scalar_select %p382, %s26, 1
        %s384 = smul.addr %s383, 8
        %s385 = smul.addr %s384, 8
        %s386 = scalar_lea.vmem %s0, %s385
        %v387 = vld [vmem:[%s386] sm:$0xff]
        %v388 = vld [vmem:[%s386 + $0x8] sm:$0xff]
        %v389 = vld [vmem:[%s386 + $0x10] sm:$0xf]
        %v390 = vld [vmem:[%s386 + $0x18] sm:$0xf]
        %v391 = vld [vmem:[#allocation2] sm:$0xff]
        %v392 = vld [vmem:[#allocation2 + $0x8] sm:$0xff]
        %v393 = vld [vmem:[#allocation2 + $0x10] sm:$0xff]
        %v394 = vld [vmem:[#allocation2 + $0x18] sm:$0xff]
        %v395 = vld [vmem:[#allocation2 + $0x20] sm:$0xff]
        %v396 = vld [vmem:[#allocation2 + $0x28] sm:$0xff]
        %v397 = vld [vmem:[#allocation2 + $0x30] sm:$0xff]
        %v398 = vld [vmem:[#allocation2 + $0x38] sm:$0xff]
        %v399 = vld [vmem:[#allocation2 + $0x40] sm:$0xff]
        %v400 = vld [vmem:[#allocation2 + $0x48] sm:$0xff]
        %v401 = vld [vmem:[#allocation2 + $0x50] sm:$0xff]
        %v402 = vld [vmem:[#allocation2 + $0x58] sm:$0xff]
        %v403 = vld [vmem:[#allocation2 + $0x60] sm:$0xff]
        %v404 = vld [vmem:[#allocation2 + $0x68] sm:$0xff]
        %v405 = vld [vmem:[#allocation2 + $0x70] sm:$0xff]
        %v406 = vld [vmem:[#allocation2 + $0x78] sm:$0xff]
        %v407 = vld [vmem:[#allocation2 + $0x80] sm:$0xff]
        %v408 = vld [vmem:[#allocation2 + $0x88] sm:$0xff]
        %v409 = vld [vmem:[#allocation2 + $0x90] sm:$0xff]
        %v410 = vld [vmem:[#allocation2 + $0x98] sm:$0xff]
        %v411 = vld [vmem:[#allocation2 + $0xa0] sm:$0xff]
        %v412 = vld [vmem:[#allocation2 + $0xa8] sm:$0xff]
        %v413 = vld [vmem:[#allocation2 + $0xb0] sm:$0xff]
        %v414 = vld [vmem:[#allocation2 + $0xb8] sm:$0xff]
        %v415 = vld [vmem:[#allocation2 + $0xc0] sm:$0xff]
        %v416 = vld [vmem:[#allocation2 + $0xc8] sm:$0xff]
        %v417 = vld [vmem:[#allocation2 + $0xd0] sm:$0xff]
        %v418 = vld [vmem:[#allocation2 + $0xd8] sm:$0xff]
        %v419 = vld [vmem:[#allocation2 + $0xe0] sm:$0xff]
        %v420 = vld [vmem:[#allocation2 + $0xe8] sm:$0xff]
        %v421 = vld [vmem:[#allocation2 + $0xf0] sm:$0xff]
        %v422 = vld [vmem:[#allocation2 + $0xf8] sm:$0xff]
        %v423 = vld [vmem:[#allocation2 + $0x100] sm:$0xff]
        %v424 = vld [vmem:[#allocation2 + $0x108] sm:$0xff]
        %v425 = vld [vmem:[#allocation2 + $0x110] sm:$0xff]
        %v426 = vld [vmem:[#allocation2 + $0x118] sm:$0xff]
        %v427 = vld [vmem:[#allocation2 + $0x120] sm:$0xff]
        %v428 = vld [vmem:[#allocation2 + $0x128] sm:$0xff]
        %v429 = vld [vmem:[#allocation2 + $0x130] sm:$0xff]
        %v430 = vld [vmem:[#allocation2 + $0x138] sm:$0xff]
        %v431 = vld [vmem:[#allocation2 + $0x140] sm:$0xff]
        %v432 = vld [vmem:[#allocation2 + $0x148] sm:$0xff]
        %v433 = vld [vmem:[#allocation2 + $0x150] sm:$0xff]
        %v434 = vld [vmem:[#allocation2 + $0x158] sm:$0xff]
        %v435 = vld [vmem:[#allocation2 + $0x160] sm:$0xff]
        %v436 = vld [vmem:[#allocation2 + $0x168] sm:$0xff]
        %v437 = vld [vmem:[#allocation2 + $0x170] sm:$0xff]
        %v438 = vld [vmem:[#allocation2 + $0x178] sm:$0xff]
        %v439 = vld [vmem:[#allocation2 + $0x180] sm:$0xff]
        %v440 = vld [vmem:[#allocation2 + $0x188] sm:$0xff]
        %v441 = vld [vmem:[#allocation2 + $0x190] sm:$0xff]
        %v442 = vld [vmem:[#allocation2 + $0x198] sm:$0xff]
        %v443 = vld [vmem:[#allocation2 + $0x1a0] sm:$0xff]
        %v444 = vld [vmem:[#allocation2 + $0x1a8] sm:$0xff]
        %v445 = vld [vmem:[#allocation2 + $0x1b0] sm:$0xff]
        %v446 = vld [vmem:[#allocation2 + $0x1b8] sm:$0xff]
        %v447 = vld [vmem:[#allocation2 + $0x1c0] sm:$0xff]
        %v448 = vld [vmem:[#allocation2 + $0x1c8] sm:$0xff]
        %v449 = vld [vmem:[#allocation2 + $0x1d0] sm:$0xff]
        %v450 = vld [vmem:[#allocation2 + $0x1d8] sm:$0xff]
        %v451 = vld [vmem:[#allocation2 + $0x1e0] sm:$0xff]
        %v452 = vld [vmem:[#allocation2 + $0x1e8] sm:$0xff]
        %v453 = vld [vmem:[#allocation2 + $0x1f0] sm:$0xff]
        %v454 = vld [vmem:[#allocation2 + $0x1f8] sm:$0xff]
        %v455 = vld [vmem:[#allocation2 + $0x200] sm:$0xff]
        %v456 = vld [vmem:[#allocation2 + $0x208] sm:$0xff]
        %v457 = vld [vmem:[#allocation2 + $0x210] sm:$0xff]
        %v458 = vld [vmem:[#allocation2 + $0x218] sm:$0xff]
        %v459 = vld [vmem:[#allocation2 + $0x220] sm:$0xf]
        %v460 = vld [vmem:[#allocation2 + $0x228] sm:$0xf]
        %v461 = vld [vmem:[#allocation2 + $0x230] sm:$0xf]
        %v462 = vld [vmem:[#allocation2 + $0x238] sm:$0xf]
        %vm463 = vcmask 97280
        %v465 = vsel %vm463, %v388, 0
        %v468 = vsel %vm463, %v390, 0
        %vm470 = vcmask 1043456
        %v472 = vsel %vm470, %v459, 0
        %v475 = vsel %vm470, %v460, 0
        %v478 = vsel %vm470, %v461, 0
        %v481 = vsel %vm470, %v462, 0
        %483 = vmatprep.subr.mxu0 %v392
        %484 = vmatpush1.msra.mxu0 %v391
        %485 = vmatprep.subr.mxu0 %v396
        %486 = vmatpush1.msra.mxu0 %v395
        %487 = vmatprep.subr.mxu0 %v400
        %488 = vmatpush1.msra.mxu0 %v399
        %489 = vmatprep.subr.mxu0 %v404
        %490 = vmatpush1.msra.mxu0 %v403
        %491 = vmatprep.subr.mxu0 %v408
        %492 = vmatpush1.msra.mxu0 %v407
        %493 = vmatprep.subr.mxu0 %v412
        %494 = vmatpush1.msra.mxu0 %v411
        %495 = vmatprep.subr.mxu0 %v416
        %496 = vmatpush1.msra.mxu0 %v415
        %497 = vmatprep.subr.mxu0 %v420
        %498 = vmatpush1.msra.mxu0 %v419
        %499 = vmatprep.subr.mxu0 %v424
        %500 = vmatpush1.msra.mxu0 %v423
        %501 = vmatprep.subr.mxu0 %v428
        %502 = vmatpush1.msra.mxu0 %v427
        %503 = vmatprep.subr.mxu0 %v432
        %504 = vmatpush1.msra.mxu0 %v431
        %505 = vmatprep.subr.mxu0 %v436
        %506 = vmatpush1.msra.mxu0 %v435
        %507 = vmatprep.subr.mxu0 %v440
        %508 = vmatpush1.msra.mxu0 %v439
        %509 = vmatprep.subr.mxu0 %v444
        %510 = vmatpush1.msra.mxu0 %v443
        %511 = vmatprep.subr.mxu0 %v448
        %512 = vmatpush1.msra.mxu0 %v447
        %513 = vmatprep.subr.mxu0 %v452
        %514 = vmatpush1.msra.mxu0 %v451
        %515 = vmatprep.subr.mxu0 %v456
        %516 = vmatpush1.msra.mxu0 %v455
        %517 = vmatprep.subr.mxu0 %v475
        %518 = vmatpush1.msra.mxu0 %v472
        %519 = vmatprep.subr.mxu0 0.0
        %520 = vmatpush1.msra.mxu0 0.0
        %521 = vmatprep.subr.mxu0 0.0
        %522 = vmatpush1.msra.mxu0 0.0
        %523 = vmatprep.subr.mxu0 0.0
        %524 = vmatpush1.msra.mxu0 0.0
        %525 = vmatprep.subr.mxu0 0.0
        %526 = vmatpush1.msra.mxu0 0.0
        %527 = vmatprep.subr.mxu0 0.0
        %528 = vmatpush1.msra.mxu0 0.0
        %529 = vmatprep.subr.mxu0 0.0
        %530 = vmatpush1.msra.mxu0 0.0
        %531 = vmatprep.subr.mxu0 0.0
        %532 = vmatpush1.msra.mxu0 0.0
        %533 = vmatprep.subr.mxu0 0.0
        %534 = vmatpush1.msra.mxu0 0.0
        %535 = vmatprep.subr.mxu0 0.0
        %536 = vmatpush1.msra.mxu0 0.0
        %537 = vmatprep.subr.mxu0 0.0
        %538 = vmatpush1.msra.mxu0 0.0
        %539 = vmatprep.subr.mxu0 0.0
        %540 = vmatpush1.msra.mxu0 0.0
        %541 = vmatprep.subr.mxu0 0.0
        %542 = vmatpush1.msra.mxu0 0.0
        %543 = vmatprep.subr.mxu0 0.0
        %544 = vmatpush1.msra.mxu0 0.0
        %545 = vmatprep.subr.mxu0 0.0
        %546 = vmatpush1.msra.mxu0 0.0
        %547 = vmatprep.mubr.f32.mxu0 %v465
        %548 = vmatmul.mubr.f32.gmra.mrb[0].mxu0 %v387
        %v549 = vpop.f32.mrb[0].mxu0
        %v550 = vadd.f32 0.0, %v549
        %v551 = vpop.f32.mrb[0].mxu0
        %v552 = vadd.f32 0.0, %v551
        %553 = vmatprep.mubr.f32.mxu0 %v468
        %554 = vmatmul.mubr.f32.gmra.mrb[0].mxu0 %v389
        %v555 = vpop.f32.mrb[0].mxu0
        %v556 = vadd.f32 0.0, %v555
        %v557 = vpop.f32.mrb[0].mxu0
        %v558 = vadd.f32 0.0, %v557
        %559 = vdwg.mxu0
        %560 = vmatprep.subr.mxu0 %v394
        %561 = vmatpush1.msra.mxu0 %v393
        %562 = vmatprep.subr.mxu0 %v398
        %563 = vmatpush1.msra.mxu0 %v397
        %564 = vmatprep.subr.mxu0 %v402
        %565 = vmatpush1.msra.mxu0 %v401
        %566 = vmatprep.subr.mxu0 %v406
        %567 = vmatpush1.msra.mxu0 %v405
        %568 = vmatprep.subr.mxu0 %v410
        %569 = vmatpush1.msra.mxu0 %v409
        %570 = vmatprep.subr.mxu0 %v414
        %571 = vmatpush1.msra.mxu0 %v413
        %572 = vmatprep.subr.mxu0 %v418
        %573 = vmatpush1.msra.mxu0 %v417
        %574 = vmatprep.subr.mxu0 %v422
        %575 = vmatpush1.msra.mxu0 %v421
        %576 = vmatprep.subr.mxu0 %v426
        %577 = vmatpush1.msra.mxu0 %v425
        %578 = vmatprep.subr.mxu0 %v430
        %579 = vmatpush1.msra.mxu0 %v429
        %580 = vmatprep.subr.mxu0 %v434
        %581 = vmatpush1.msra.mxu0 %v433
        %582 = vmatprep.subr.mxu0 %v438
        %583 = vmatpush1.msra.mxu0 %v437
        %584 = vmatprep.subr.mxu0 %v442
        %585 = vmatpush1.msra.mxu0 %v441
        %586 = vmatprep.subr.mxu0 %v446
        %587 = vmatpush1.msra.mxu0 %v445
        %588 = vmatprep.subr.mxu0 %v450
        %589 = vmatpush1.msra.mxu0 %v449
        %590 = vmatprep.subr.mxu0 %v454
        %591 = vmatpush1.msra.mxu0 %v453
        %592 = vmatprep.subr.mxu0 %v458
        %593 = vmatpush1.msra.mxu0 %v457
        %594 = vmatprep.subr.mxu0 %v481
        %595 = vmatpush1.msra.mxu0 %v478
        %596 = vmatprep.subr.mxu0 0.0
        %597 = vmatpush1.msra.mxu0 0.0
        %598 = vmatprep.subr.mxu0 0.0
        %599 = vmatpush1.msra.mxu0 0.0
        %600 = vmatprep.subr.mxu0 0.0
        %601 = vmatpush1.msra.mxu0 0.0
        %602 = vmatprep.subr.mxu0 0.0
        %603 = vmatpush1.msra.mxu0 0.0
        %604 = vmatprep.subr.mxu0 0.0
        %605 = vmatpush1.msra.mxu0 0.0
        %606 = vmatprep.subr.mxu0 0.0
        %607 = vmatpush1.msra.mxu0 0.0
        %608 = vmatprep.subr.mxu0 0.0
        %609 = vmatpush1.msra.mxu0 0.0
        %610 = vmatprep.subr.mxu0 0.0
        %611 = vmatpush1.msra.mxu0 0.0
        %612 = vmatprep.subr.mxu0 0.0
        %613 = vmatpush1.msra.mxu0 0.0
        %614 = vmatprep.subr.mxu0 0.0
        %615 = vmatpush1.msra.mxu0 0.0
        %616 = vmatprep.subr.mxu0 0.0
        %617 = vmatpush1.msra.mxu0 0.0
        %618 = vmatprep.subr.mxu0 0.0
        %619 = vmatpush1.msra.mxu0 0.0
        %620 = vmatprep.subr.mxu0 0.0
        %621 = vmatpush1.msra.mxu0 0.0
        %622 = vmatprep.subr.mxu0 0.0
        %623 = vmatpush1.msra.mxu0 0.0
        %624 = vmatprep.mubr.f32.mxu0 %v465
        %625 = vmatmul.mubr.f32.gmra.mrb[0].mxu0 %v387
        %v626 = vpop.f32.mrb[0].mxu0
        %v627 = vadd.f32 0.0, %v626
        %v628 = vpop.f32.mrb[0].mxu0
        %v629 = vadd.f32 0.0, %v628
        %630 = vmatprep.mubr.f32.mxu0 %v468
        %631 = vmatmul.mubr.f32.gmra.mrb[0].mxu0 %v389
        %v632 = vpop.f32.mrb[0].mxu0
        %v633 = vadd.f32 0.0, %v632
        %v634 = vpop.f32.mrb[0].mxu0
        %v635 = vadd.f32 0.0, %v634
        %636 = vdwg.mxu0
        %s637 = scalar_lea.vmem %s386, 32
        %v638 = vld [vmem:[%s637] sm:$0xff]
        %v639 = vld [vmem:[%s637 + $0x8] sm:$0xff]
        %v640 = vld [vmem:[%s637 + $0x10] sm:$0xf]
        %v641 = vld [vmem:[%s637 + $0x18] sm:$0xf]
        %v643 = vsel %vm463, %v639, 0
        %v646 = vsel %vm463, %v641, 0
        %648 = vmatprep.subr.mxu0 %v392
        %649 = vmatpush1.msra.mxu0 %v391
        %650 = vmatprep.subr.mxu0 %v396
        %651 = vmatpush1.msra.mxu0 %v395
        %652 = vmatprep.subr.mxu0 %v400
        %653 = vmatpush1.msra.mxu0 %v399
        %654 = vmatprep.subr.mxu0 %v404
        %655 = vmatpush1.msra.mxu0 %v403
        %656 = vmatprep.subr.mxu0 %v408
        %657 = vmatpush1.msra.mxu0 %v407
        %658 = vmatprep.subr.mxu0 %v412
        %659 = vmatpush1.msra.mxu0 %v411
        %660 = vmatprep.subr.mxu0 %v416
        %661 = vmatpush1.msra.mxu0 %v415
        %662 = vmatprep.subr.mxu0 %v420
        %663 = vmatpush1.msra.mxu0 %v419
        %664 = vmatprep.subr.mxu0 %v424
        %665 = vmatpush1.msra.mxu0 %v423
        %666 = vmatprep.subr.mxu0 %v428
        %667 = vmatpush1.msra.mxu0 %v427
        %668 = vmatprep.subr.mxu0 %v432
        %669 = vmatpush1.msra.mxu0 %v431
        %670 = vmatprep.subr.mxu0 %v436
        %671 = vmatpush1.msra.mxu0 %v435
        %672 = vmatprep.subr.mxu0 %v440
        %673 = vmatpush1.msra.mxu0 %v439
        %674 = vmatprep.subr.mxu0 %v444
        %675 = vmatpush1.msra.mxu0 %v443
        %676 = vmatprep.subr.mxu0 %v448
        %677 = vmatpush1.msra.mxu0 %v447
        %678 = vmatprep.subr.mxu0 %v452
        %679 = vmatpush1.msra.mxu0 %v451
        %680 = vmatprep.subr.mxu0 %v456
        %681 = vmatpush1.msra.mxu0 %v455
        %682 = vmatprep.subr.mxu0 %v475
        %683 = vmatpush1.msra.mxu0 %v472
        %684 = vmatprep.subr.mxu0 0.0
        %685 = vmatpush1.msra.mxu0 0.0
        %686 = vmatprep.subr.mxu0 0.0
        %687 = vmatpush1.msra.mxu0 0.0
        %688 = vmatprep.subr.mxu0 0.0
        %689 = vmatpush1.msra.mxu0 0.0
        %690 = vmatprep.subr.mxu0 0.0
        %691 = vmatpush1.msra.mxu0 0.0
        %692 = vmatprep.subr.mxu0 0.0
        %693 = vmatpush1.msra.mxu0 0.0
        %694 = vmatprep.subr.mxu0 0.0
        %695 = vmatpush1.msra.mxu0 0.0
        %696 = vmatprep.subr.mxu0 0.0
        %697 = vmatpush1.msra.mxu0 0.0
        %698 = vmatprep.subr.mxu0 0.0
        %699 = vmatpush1.msra.mxu0 0.0
        %700 = vmatprep.subr.mxu0 0.0
        %701 = vmatpush1.msra.mxu0 0.0
        %702 = vmatprep.subr.mxu0 0.0
        %703 = vmatpush1.msra.mxu0 0.0
        %704 = vmatprep.subr.mxu0 0.0
        %705 = vmatpush1.msra.mxu0 0.0
        %706 = vmatprep.subr.mxu0 0.0
        %707 = vmatpush1.msra.mxu0 0.0
        %708 = vmatprep.subr.mxu0 0.0
        %709 = vmatpush1.msra.mxu0 0.0
        %710 = vmatprep.subr.mxu0 0.0
        %711 = vmatpush1.msra.mxu0 0.0
        %712 = vmatprep.mubr.f32.mxu0 %v643
        %713 = vmatmul.mubr.f32.gmra.mrb[0].mxu0 %v638
        %v714 = vpop.f32.mrb[0].mxu0
        %v715 = vadd.f32 0.0, %v714
        %v716 = vpop.f32.mrb[0].mxu0
        %v717 = vadd.f32 0.0, %v716
        %718 = vmatprep.mubr.f32.mxu0 %v646
        %719 = vmatmul.mubr.f32.gmra.mrb[0].mxu0 %v640
        %v720 = vpop.f32.mrb[0].mxu0
        %v721 = vadd.f32 0.0, %v720
        %v722 = vpop.f32.mrb[0].mxu0
        %v723 = vadd.f32 0.0, %v722
        %724 = vdwg.mxu0
        %725 = vmatprep.subr.mxu0 %v394
        %726 = vmatpush1.msra.mxu0 %v393
        %727 = vmatprep.subr.mxu0 %v398
        %728 = vmatpush1.msra.mxu0 %v397
        %729 = vmatprep.subr.mxu0 %v402
        %730 = vmatpush1.msra.mxu0 %v401
        %731 = vmatprep.subr.mxu0 %v406
        %732 = vmatpush1.msra.mxu0 %v405
        %733 = vmatprep.subr.mxu0 %v410
        %734 = vmatpush1.msra.mxu0 %v409
        %735 = vmatprep.subr.mxu0 %v414
        %736 = vmatpush1.msra.mxu0 %v413
        %737 = vmatprep.subr.mxu0 %v418
        %738 = vmatpush1.msra.mxu0 %v417
        %739 = vmatprep.subr.mxu0 %v422
        %740 = vmatpush1.msra.mxu0 %v421
        %741 = vmatprep.subr.mxu0 %v426
        %742 = vmatpush1.msra.mxu0 %v425
        %743 = vmatprep.subr.mxu0 %v430
        %744 = vmatpush1.msra.mxu0 %v429
        %745 = vmatprep.subr.mxu0 %v434
        %746 = vmatpush1.msra.mxu0 %v433
        %747 = vmatprep.subr.mxu0 %v438
        %748 = vmatpush1.msra.mxu0 %v437
        %749 = vmatprep.subr.mxu0 %v442
        %750 = vmatpush1.msra.mxu0 %v441
        %751 = vmatprep.subr.mxu0 %v446
        %752 = vmatpush1.msra.mxu0 %v445
        %753 = vmatprep.subr.mxu0 %v450
        %754 = vmatpush1.msra.mxu0 %v449
        %755 = vmatprep.subr.mxu0 %v454
        %756 = vmatpush1.msra.mxu0 %v453
        %757 = vmatprep.subr.mxu0 %v458
        %758 = vmatpush1.msra.mxu0 %v457
        %759 = vmatprep.subr.mxu0 %v481
        %760 = vmatpush1.msra.mxu0 %v478
        %761 = vmatprep.subr.mxu0 0.0
        %762 = vmatpush1.msra.mxu0 0.0
        %763 = vmatprep.subr.mxu0 0.0
        %764 = vmatpush1.msra.mxu0 0.0
        %765 = vmatprep.subr.mxu0 0.0
        %766 = vmatpush1.msra.mxu0 0.0
        %767 = vmatprep.subr.mxu0 0.0
        %768 = vmatpush1.msra.mxu0 0.0
        %769 = vmatprep.subr.mxu0 0.0
        %770 = vmatpush1.msra.mxu0 0.0
        %771 = vmatprep.subr.mxu0 0.0
        %772 = vmatpush1.msra.mxu0 0.0
        %773 = vmatprep.subr.mxu0 0.0
        %774 = vmatpush1.msra.mxu0 0.0
        %775 = vmatprep.subr.mxu0 0.0
        %776 = vmatpush1.msra.mxu0 0.0
        %777 = vmatprep.subr.mxu0 0.0
        %778 = vmatpush1.msra.mxu0 0.0
        %779 = vmatprep.subr.mxu0 0.0
        %780 = vmatpush1.msra.mxu0 0.0
        %781 = vmatprep.subr.mxu0 0.0
        %782 = vmatpush1.msra.mxu0 0.0
        %783 = vmatprep.subr.mxu0 0.0
        %784 = vmatpush1.msra.mxu0 0.0
        %785 = vmatprep.subr.mxu0 0.0
        %786 = vmatpush1.msra.mxu0 0.0
        %787 = vmatprep.subr.mxu0 0.0
        %788 = vmatpush1.msra.mxu0 0.0
        %789 = vmatprep.mubr.f32.mxu0 %v643
        %790 = vmatmul.mubr.f32.gmra.mrb[0].mxu0 %v638
        %v791 = vpop.f32.mrb[0].mxu0
        %v792 = vadd.f32 0.0, %v791
        %v793 = vpop.f32.mrb[0].mxu0
        %v794 = vadd.f32 0.0, %v793
        %795 = vmatprep.mubr.f32.mxu0 %v646
        %796 = vmatmul.mubr.f32.gmra.mrb[0].mxu0 %v640
        %v797 = vpop.f32.mrb[0].mxu0
        %v798 = vadd.f32 0.0, %v797
        %v799 = vpop.f32.mrb[0].mxu0
        %v800 = vadd.f32 0.0, %v799
        %801 = vdwg.mxu0
        %v802 = vmax.f32 %v550, %v715
        %v803 = vmax.f32 %v552, %v717
        %v804 = vmax.f32 %v627, %v792
        %v805 = vmax.f32 %v629, %v794
        %v806 = vmax.f32 %v556, %v721
        %v807 = vmax.f32 %v558, %v723
        %v808 = vmax.f32 %v633, %v798
        %v809 = vmax.f32 %v635, %v800
        %v810 = vmax.f32 %v802, %v804
        %v811 = vmax.f32 %v803, %v805
        %v812 = vmax.f32 %v806, %v808
        %v813 = vmax.f32 %v807, %v809
        %v814 = vld [vmem:[%s2] sm:$0x3]
        %v816 = vlaneseq
        %v817 = vshrl.u32 %v816, 7
        %v818 = vsub.s32 0, %v817
        %v819 = vrot.slane %v814, %v818
        %v820 = vlaneseq
        %v821 = vshrl.u32 %v820, 7
        %v822 = vsub.s32 1, %v821
        %v823 = vrot.slane %v814, %v822
        %v826 = vadd.f32 %v810, %v819
        %v827 = vadd.f32 %v811, %v823
        %v828 = vadd.f32 %v812, %v819
        %v829 = vadd.f32 %v813, %v823
        %v830 = vmax.f32 %v826, 0.0
        %v831 = vmax.f32 %v827, 0.0
        %v832 = vmax.f32 %v828, 0.0
        %v833 = vmax.f32 %v829, 0.0
        %v834 = vld [vmem:[%s3] sm:$0xff]
        %v835 = vld [vmem:[%s3 + $0x8] sm:$0xff]
        %v836 = vld [vmem:[%s3 + $0x10] sm:$0xff]
        %v837 = vld [vmem:[%s3 + $0x18] sm:$0xff]
        %v838 = vld [vmem:[%s3 + $0x20] sm:$0xff]
        %v839 = vld [vmem:[%s3 + $0x28] sm:$0xff]
        %v840 = vld [vmem:[%s3 + $0x30] sm:$0xff]
        %v841 = vld [vmem:[%s3 + $0x38] sm:$0xff]
        %v842 = vld [vmem:[%s3 + $0x40] sm:$0xff]
        %v843 = vld [vmem:[%s3 + $0x48] sm:$0xff]
        %v844 = vld [vmem:[%s3 + $0x50] sm:$0xff]
        %v845 = vld [vmem:[%s3 + $0x58] sm:$0xff]
        %v846 = vld [vmem:[%s3 + $0x60] sm:$0xff]
        %v847 = vld [vmem:[%s3 + $0x68] sm:$0xff]
        %v848 = vld [vmem:[%s3 + $0x70] sm:$0xff]
        %v849 = vld [vmem:[%s3 + $0x78] sm:$0xff]
        %v850 = vld [vmem:[%s3 + $0x80] sm:$0xff]
        %v851 = vld [vmem:[%s3 + $0x88] sm:$0xff]
        %v852 = vld [vmem:[%s3 + $0x90] sm:$0xff]
        %v853 = vld [vmem:[%s3 + $0x98] sm:$0xff]
        %v854 = vld [vmem:[%s3 + $0xa0] sm:$0xff]
        %v855 = vld [vmem:[%s3 + $0xa8] sm:$0xff]
        %v856 = vld [vmem:[%s3 + $0xb0] sm:$0xff]
        %v857 = vld [vmem:[%s3 + $0xb8] sm:$0xff]
        %v858 = vld [vmem:[%s3 + $0xc0] sm:$0xff]
        %v859 = vld [vmem:[%s3 + $0xc8] sm:$0xff]
        %v860 = vld [vmem:[%s3 + $0xd0] sm:$0xff]
        %v861 = vld [vmem:[%s3 + $0xd8] sm:$0xff]
        %v862 = vld [vmem:[%s3 + $0xe0] sm:$0xff]
        %v863 = vld [vmem:[%s3 + $0xe8] sm:$0xff]
        %v864 = vld [vmem:[%s3 + $0xf0] sm:$0xff]
        %v865 = vld [vmem:[%s3 + $0xf8] sm:$0xff]
        %v866 = vld [vmem:[%s3 + $0x100] sm:$0xff]
        %v867 = vld [vmem:[%s3 + $0x108] sm:$0xff]
        %v868 = vld [vmem:[%s3 + $0x110] sm:$0xff]
        %v869 = vld [vmem:[%s3 + $0x118] sm:$0xff]
        %v870 = vld [vmem:[%s3 + $0x120] sm:$0xff]
        %v871 = vld [vmem:[%s3 + $0x128] sm:$0xff]
        %v872 = vld [vmem:[%s3 + $0x130] sm:$0xff]
        %v873 = vld [vmem:[%s3 + $0x138] sm:$0xff]
        %v874 = vld [vmem:[%s3 + $0x140] sm:$0xff]
        %v875 = vld [vmem:[%s3 + $0x148] sm:$0xff]
        %v876 = vld [vmem:[%s3 + $0x150] sm:$0xff]
        %v877 = vld [vmem:[%s3 + $0x158] sm:$0xff]
        %v878 = vld [vmem:[%s3 + $0x160] sm:$0xff]
        %v879 = vld [vmem:[%s3 + $0x168] sm:$0xff]
        %v880 = vld [vmem:[%s3 + $0x170] sm:$0xff]
        %v881 = vld [vmem:[%s3 + $0x178] sm:$0xff]
        %v882 = vld [vmem:[%s3 + $0x180] sm:$0xff]
        %v883 = vld [vmem:[%s3 + $0x188] sm:$0xff]
        %v884 = vld [vmem:[%s3 + $0x190] sm:$0xff]
        %v885 = vld [vmem:[%s3 + $0x198] sm:$0xff]
        %v886 = vld [vmem:[%s3 + $0x1a0] sm:$0xff]
        %v887 = vld [vmem:[%s3 + $0x1a8] sm:$0xff]
        %v888 = vld [vmem:[%s3 + $0x1b0] sm:$0xff]
        %v889 = vld [vmem:[%s3 + $0x1b8] sm:$0xff]
        %v890 = vld [vmem:[%s3 + $0x1c0] sm:$0xff]
        %v891 = vld [vmem:[%s3 + $0x1c8] sm:$0xff]
        %v892 = vld [vmem:[%s3 + $0x1d0] sm:$0xff]
        %v893 = vld [vmem:[%s3 + $0x1d8] sm:$0xff]
        %v894 = vld [vmem:[%s3 + $0x1e0] sm:$0xff]
        %v895 = vld [vmem:[%s3 + $0x1e8] sm:$0xff]
        %v896 = vld [vmem:[%s3 + $0x1f0] sm:$0xff]
        %v897 = vld [vmem:[%s3 + $0x1f8] sm:$0xff]
        %s898 = scalar_lea.vmem %s3, 512
        %v899 = vld [vmem:[%s898] sm:$0xff]
        %v900 = vld [vmem:[%s898 + $0x8] sm:$0xff]
        %v901 = vld [vmem:[%s898 + $0x10] sm:$0xff]
        %v902 = vld [vmem:[%s898 + $0x18] sm:$0xff]
        %v903 = vld [vmem:[%s898 + $0x20] sm:$0xff]
        %v904 = vld [vmem:[%s898 + $0x28] sm:$0xff]
        %v905 = vld [vmem:[%s898 + $0x30] sm:$0xff]
        %v906 = vld [vmem:[%s898 + $0x38] sm:$0xff]
        %v907 = vld [vmem:[%s898 + $0x40] sm:$0xff]
        %v908 = vld [vmem:[%s898 + $0x48] sm:$0xff]
        %v909 = vld [vmem:[%s898 + $0x50] sm:$0xff]
        %v910 = vld [vmem:[%s898 + $0x58] sm:$0xff]
        %v911 = vld [vmem:[%s898 + $0x60] sm:$0xff]
        %v912 = vld [vmem:[%s898 + $0x68] sm:$0xff]
        %v913 = vld [vmem:[%s898 + $0x70] sm:$0xff]
        %v914 = vld [vmem:[%s898 + $0x78] sm:$0xff]
        %v915 = vld [vmem:[%s898 + $0x80] sm:$0xff]
        %v916 = vld [vmem:[%s898 + $0x88] sm:$0xff]
        %v917 = vld [vmem:[%s898 + $0x90] sm:$0xff]
        %v918 = vld [vmem:[%s898 + $0x98] sm:$0xff]
        %v919 = vld [vmem:[%s898 + $0xa0] sm:$0xff]
        %v920 = vld [vmem:[%s898 + $0xa8] sm:$0xff]
        %v921 = vld [vmem:[%s898 + $0xb0] sm:$0xff]
        %v922 = vld [vmem:[%s898 + $0xb8] sm:$0xff]
        %v923 = vld [vmem:[%s898 + $0xc0] sm:$0xff]
        %v924 = vld [vmem:[%s898 + $0xc8] sm:$0xff]
        %v925 = vld [vmem:[%s898 + $0xd0] sm:$0xff]
        %v926 = vld [vmem:[%s898 + $0xd8] sm:$0xff]
        %v927 = vld [vmem:[%s898 + $0xe0] sm:$0xff]
        %v928 = vld [vmem:[%s898 + $0xe8] sm:$0xff]
        %v929 = vld [vmem:[%s898 + $0xf0] sm:$0xff]
        %v930 = vld [vmem:[%s898 + $0xf8] sm:$0xff]
        %v931 = vld [vmem:[%s898 + $0x100] sm:$0xff]
        %v932 = vld [vmem:[%s898 + $0x108] sm:$0xff]
        %v933 = vld [vmem:[%s898 + $0x110] sm:$0xff]
        %v934 = vld [vmem:[%s898 + $0x118] sm:$0xff]
        %v935 = vld [vmem:[%s898 + $0x120] sm:$0xff]
        %v936 = vld [vmem:[%s898 + $0x128] sm:$0xff]
        %v937 = vld [vmem:[%s898 + $0x130] sm:$0xff]
        %v938 = vld [vmem:[%s898 + $0x138] sm:$0xff]
        %v939 = vld [vmem:[%s898 + $0x140] sm:$0xff]
        %v940 = vld [vmem:[%s898 + $0x148] sm:$0xff]
        %v941 = vld [vmem:[%s898 + $0x150] sm:$0xff]
        %v942 = vld [vmem:[%s898 + $0x158] sm:$0xff]
        %v943 = vld [vmem:[%s898 + $0x160] sm:$0xff]
        %v944 = vld [vmem:[%s898 + $0x168] sm:$0xff]
        %v945 = vld [vmem:[%s898 + $0x170] sm:$0xff]
        %v946 = vld [vmem:[%s898 + $0x178] sm:$0xff]
        %v947 = vld [vmem:[%s898 + $0x180] sm:$0xff]
        %v948 = vld [vmem:[%s898 + $0x188] sm:$0xff]
        %v949 = vld [vmem:[%s898 + $0x190] sm:$0xff]
        %v950 = vld [vmem:[%s898 + $0x198] sm:$0xff]
        %v951 = vld [vmem:[%s898 + $0x1a0] sm:$0xff]
        %v952 = vld [vmem:[%s898 + $0x1a8] sm:$0xff]
        %v953 = vld [vmem:[%s898 + $0x1b0] sm:$0xff]
        %v954 = vld [vmem:[%s898 + $0x1b8] sm:$0xff]
        %v955 = vld [vmem:[%s898 + $0x1c0] sm:$0xff]
        %v956 = vld [vmem:[%s898 + $0x1c8] sm:$0xff]
        %v957 = vld [vmem:[%s898 + $0x1d0] sm:$0xff]
        %v958 = vld [vmem:[%s898 + $0x1d8] sm:$0xff]
        %v959 = vld [vmem:[%s898 + $0x1e0] sm:$0xff]
        %v960 = vld [vmem:[%s898 + $0x1e8] sm:$0xff]
        %v961 = vld [vmem:[%s898 + $0x1f0] sm:$0xff]
        %v962 = vld [vmem:[%s898 + $0x1f8] sm:$0xff]
        %vm967 = vcmask 1046528
        %v968 = vrot.slane %v830, 1
        %v969 = vrot.slane %v832, 1
        %v970 = vsel %vm967, %v968, %v969
        %v971 = vrot.slane %v831, 1
        %v972 = vrot.slane %v833, 1
        %v973 = vsel %vm967, %v971, %v972
        %976 = vmatprep.subr.mxu0 %v900
        %977 = vmatpush1.msra.mxu0 %v899
        %978 = vmatprep.subr.mxu0 %v902
        %979 = vmatpush1.msra.mxu0 %v901
        %980 = vmatprep.subr.mxu0 %v904
        %981 = vmatpush1.msra.mxu0 %v903
        %982 = vmatprep.subr.mxu0 %v906
        %983 = vmatpush1.msra.mxu0 %v905
        %984 = vmatprep.subr.mxu0 %v908
        %985 = vmatpush1.msra.mxu0 %v907
        %986 = vmatprep.subr.mxu0 %v910
        %987 = vmatpush1.msra.mxu0 %v909
        %988 = vmatprep.subr.mxu0 %v912
        %989 = vmatpush1.msra.mxu0 %v911
        %990 = vmatprep.subr.mxu0 %v914
        %991 = vmatpush1.msra.mxu0 %v913
        %992 = vmatprep.subr.mxu0 %v916
        %993 = vmatpush1.msra.mxu0 %v915
        %994 = vmatprep.subr.mxu0 %v918
        %995 = vmatpush1.msra.mxu0 %v917
        %996 = vmatprep.subr.mxu0 %v920
        %997 = vmatpush1.msra.mxu0 %v919
        %998 = vmatprep.subr.mxu0 %v922
        %999 = vmatpush1.msra.mxu0 %v921
        %1000 = vmatprep.subr.mxu0 %v924
        %1001 = vmatpush1.msra.mxu0 %v923
        %1002 = vmatprep.subr.mxu0 %v926
        %1003 = vmatpush1.msra.mxu0 %v925
        %1004 = vmatprep.subr.mxu0 %v928
        %1005 = vmatpush1.msra.mxu0 %v927
        %1006 = vmatprep.subr.mxu0 %v930
        %1007 = vmatpush1.msra.mxu0 %v929
        %1008 = vmatprep.subr.mxu0 %v932
        %1009 = vmatpush1.msra.mxu0 %v931
        %1010 = vmatprep.subr.mxu0 %v934
        %1011 = vmatpush1.msra.mxu0 %v933
        %1012 = vmatprep.subr.mxu0 %v936
        %1013 = vmatpush1.msra.mxu0 %v935
        %1014 = vmatprep.subr.mxu0 %v938
        %1015 = vmatpush1.msra.mxu0 %v937
        %1016 = vmatprep.subr.mxu0 %v940
        %1017 = vmatpush1.msra.mxu0 %v939
        %1018 = vmatprep.subr.mxu0 %v942
        %1019 = vmatpush1.msra.mxu0 %v941
        %1020 = vmatprep.subr.mxu0 %v944
        %1021 = vmatpush1.msra.mxu0 %v943
        %1022 = vmatprep.subr.mxu0 %v946
        %1023 = vmatpush1.msra.mxu0 %v945
        %1024 = vmatprep.subr.mxu0 %v948
        %1025 = vmatpush1.msra.mxu0 %v947
        %1026 = vmatprep.subr.mxu0 %v950
        %1027 = vmatpush1.msra.mxu0 %v949
        %1028 = vmatprep.subr.mxu0 %v952
        %1029 = vmatpush1.msra.mxu0 %v951
        %1030 = vmatprep.subr.mxu0 %v954
        %1031 = vmatpush1.msra.mxu0 %v953
        %1032 = vmatprep.subr.mxu0 %v956
        %1033 = vmatpush1.msra.mxu0 %v955
        %1034 = vmatprep.subr.mxu0 %v958
        %1035 = vmatpush1.msra.mxu0 %v957
        %1036 = vmatprep.subr.mxu0 %v960
        %1037 = vmatpush1.msra.mxu0 %v959
        %1038 = vmatprep.subr.mxu0 %v962
        %1039 = vmatpush1.msra.mxu0 %v961
        %1040 = vmatprep.mubr.f32.mxu0 %v973
        %1041 = vmatmul.mubr.f32.gmra.mrb[0].mxu0 %v970
        %v1042 = vpop.f32.mrb[0].mxu0
        %v1043 = vadd.f32 0.0, %v1042
        %v1044 = vpop.f32.mrb[0].mxu0
        %v1045 = vadd.f32 0.0, %v1044
        %1046 = vdwg.mxu0
        %1047 = vmatprep.subr.mxu0 %v835
        %1048 = vmatpush1.msra.mxu0 %v834
        %1049 = vmatprep.subr.mxu0 %v837
        %1050 = vmatpush1.msra.mxu0 %v836
        %1051 = vmatprep.subr.mxu0 %v839
        %1052 = vmatpush1.msra.mxu0 %v838
        %1053 = vmatprep.subr.mxu0 %v841
        %1054 = vmatpush1.msra.mxu0 %v840
        %1055 = vmatprep.subr.mxu0 %v843
        %1056 = vmatpush1.msra.mxu0 %v842
        %1057 = vmatprep.subr.mxu0 %v845
        %1058 = vmatpush1.msra.mxu0 %v844
        %1059 = vmatprep.subr.mxu0 %v847
        %1060 = vmatpush1.msra.mxu0 %v846
        %1061 = vmatprep.subr.mxu0 %v849
        %1062 = vmatpush1.msra.mxu0 %v848
        %1063 = vmatprep.subr.mxu0 %v851
        %1064 = vmatpush1.msra.mxu0 %v850
        %1065 = vmatprep.subr.mxu0 %v853
        %1066 = vmatpush1.msra.mxu0 %v852
        %1067 = vmatprep.subr.mxu0 %v855
        %1068 = vmatpush1.msra.mxu0 %v854
        %1069 = vmatprep.subr.mxu0 %v857
        %1070 = vmatpush1.msra.mxu0 %v856
        %1071 = vmatprep.subr.mxu0 %v859
        %1072 = vmatpush1.msra.mxu0 %v858
        %1073 = vmatprep.subr.mxu0 %v861
        %1074 = vmatpush1.msra.mxu0 %v860
        %1075 = vmatprep.subr.mxu0 %v863
        %1076 = vmatpush1.msra.mxu0 %v862
        %1077 = vmatprep.subr.mxu0 %v865
        %1078 = vmatpush1.msra.mxu0 %v864
        %1079 = vmatprep.subr.mxu0 %v867
        %1080 = vmatpush1.msra.mxu0 %v866
        %1081 = vmatprep.subr.mxu0 %v869
        %1082 = vmatpush1.msra.mxu0 %v868
        %1083 = vmatprep.subr.mxu0 %v871
        %1084 = vmatpush1.msra.mxu0 %v870
        %1085 = vmatprep.subr.mxu0 %v873
        %1086 = vmatpush1.msra.mxu0 %v872
        %1087 = vmatprep.subr.mxu0 %v875
        %1088 = vmatpush1.msra.mxu0 %v874
        %1089 = vmatprep.subr.mxu0 %v877
        %1090 = vmatpush1.msra.mxu0 %v876
        %1091 = vmatprep.subr.mxu0 %v879
        %1092 = vmatpush1.msra.mxu0 %v878
        %1093 = vmatprep.subr.mxu0 %v881
        %1094 = vmatpush1.msra.mxu0 %v880
        %1095 = vmatprep.subr.mxu0 %v883
        %1096 = vmatpush1.msra.mxu0 %v882
        %1097 = vmatprep.subr.mxu0 %v885
        %1098 = vmatpush1.msra.mxu0 %v884
        %1099 = vmatprep.subr.mxu0 %v887
        %1100 = vmatpush1.msra.mxu0 %v886
        %1101 = vmatprep.subr.mxu0 %v889
        %1102 = vmatpush1.msra.mxu0 %v888
        %1103 = vmatprep.subr.mxu0 %v891
        %1104 = vmatpush1.msra.mxu0 %v890
        %1105 = vmatprep.subr.mxu0 %v893
        %1106 = vmatpush1.msra.mxu0 %v892
        %1107 = vmatprep.subr.mxu0 %v895
        %1108 = vmatpush1.msra.mxu0 %v894
        %1109 = vmatprep.subr.mxu0 %v897
        %1110 = vmatpush1.msra.mxu0 %v896
        %1111 = vmatprep.mubr.f32.mxu0 %v831
        %1112 = vmatmul.mubr.f32.gmra.mrb[0].mxu0 %v830
        %v1113 = vpop.f32.mrb[0].mxu0
        %v1114 = vadd.f32 %v1043, %v1113
        %v1115 = vpop.f32.mrb[0].mxu0
        %v1116 = vadd.f32 %v1045, %v1115
        %1117 = vdwg.mxu0
        %s1118 = scalar_lea.vmem %s3, 1024
        %v1119 = vld [vmem:[%s1118] sm:$0xff]
        %v1120 = vld [vmem:[%s1118 + $0x8] sm:$0xff]
        %v1121 = vld [vmem:[%s1118 + $0x10] sm:$0xff]
        %v1122 = vld [vmem:[%s1118 + $0x18] sm:$0xff]
        %v1123 = vld [vmem:[%s1118 + $0x20] sm:$0xff]
        %v1124 = vld [vmem:[%s1118 + $0x28] sm:$0xff]
        %v1125 = vld [vmem:[%s1118 + $0x30] sm:$0xff]
        %v1126 = vld [vmem:[%s1118 + $0x38] sm:$0xff]
        %v1127 = vld [vmem:[%s1118 + $0x40] sm:$0xff]
        %v1128 = vld [vmem:[%s1118 + $0x48] sm:$0xff]
        %v1129 = vld [vmem:[%s1118 + $0x50] sm:$0xff]
        %v1130 = vld [vmem:[%s1118 + $0x58] sm:$0xff]
        %v1131 = vld [vmem:[%s1118 + $0x60] sm:$0xff]
        %v1132 = vld [vmem:[%s1118 + $0x68] sm:$0xff]
        %v1133 = vld [vmem:[%s1118 + $0x70] sm:$0xff]
        %v1134 = vld [vmem:[%s1118 + $0x78] sm:$0xff]
        %v1135 = vld [vmem:[%s1118 + $0x80] sm:$0xff]
        %v1136 = vld [vmem:[%s1118 + $0x88] sm:$0xff]
        %v1137 = vld [vmem:[%s1118 + $0x90] sm:$0xff]
        %v1138 = vld [vmem:[%s1118 + $0x98] sm:$0xff]
        %v1139 = vld [vmem:[%s1118 + $0xa0] sm:$0xff]
        %v1140 = vld [vmem:[%s1118 + $0xa8] sm:$0xff]
        %v1141 = vld [vmem:[%s1118 + $0xb0] sm:$0xff]
        %v1142 = vld [vmem:[%s1118 + $0xb8] sm:$0xff]
        %v1143 = vld [vmem:[%s1118 + $0xc0] sm:$0xff]
        %v1144 = vld [vmem:[%s1118 + $0xc8] sm:$0xff]
        %v1145 = vld [vmem:[%s1118 + $0xd0] sm:$0xff]
        %v1146 = vld [vmem:[%s1118 + $0xd8] sm:$0xff]
        %v1147 = vld [vmem:[%s1118 + $0xe0] sm:$0xff]
        %v1148 = vld [vmem:[%s1118 + $0xe8] sm:$0xff]
        %v1149 = vld [vmem:[%s1118 + $0xf0] sm:$0xff]
        %v1150 = vld [vmem:[%s1118 + $0xf8] sm:$0xff]
        %v1151 = vld [vmem:[%s1118 + $0x100] sm:$0xff]
        %v1152 = vld [vmem:[%s1118 + $0x108] sm:$0xff]
        %v1153 = vld [vmem:[%s1118 + $0x110] sm:$0xff]
        %v1154 = vld [vmem:[%s1118 + $0x118] sm:$0xff]
        %v1155 = vld [vmem:[%s1118 + $0x120] sm:$0xff]
        %v1156 = vld [vmem:[%s1118 + $0x128] sm:$0xff]
        %v1157 = vld [vmem:[%s1118 + $0x130] sm:$0xff]
        %v1158 = vld [vmem:[%s1118 + $0x138] sm:$0xff]
        %v1159 = vld [vmem:[%s1118 + $0x140] sm:$0xff]
        %v1160 = vld [vmem:[%s1118 + $0x148] sm:$0xff]
        %v1161 = vld [vmem:[%s1118 + $0x150] sm:$0xff]
        %v1162 = vld [vmem:[%s1118 + $0x158] sm:$0xff]
        %v1163 = vld [vmem:[%s1118 + $0x160] sm:$0xff]
        %v1164 = vld [vmem:[%s1118 + $0x168] sm:$0xff]
        %v1165 = vld [vmem:[%s1118 + $0x170] sm:$0xff]
        %v1166 = vld [vmem:[%s1118 + $0x178] sm:$0xff]
        %v1167 = vld [vmem:[%s1118 + $0x180] sm:$0xff]
        %v1168 = vld [vmem:[%s1118 + $0x188] sm:$0xff]
        %v1169 = vld [vmem:[%s1118 + $0x190] sm:$0xff]
        %v1170 = vld [vmem:[%s1118 + $0x198] sm:$0xff]
        %v1171 = vld [vmem:[%s1118 + $0x1a0] sm:$0xff]
        %v1172 = vld [vmem:[%s1118 + $0x1a8] sm:$0xff]
        %v1173 = vld [vmem:[%s1118 + $0x1b0] sm:$0xff]
        %v1174 = vld [vmem:[%s1118 + $0x1b8] sm:$0xff]
        %v1175 = vld [vmem:[%s1118 + $0x1c0] sm:$0xff]
        %v1176 = vld [vmem:[%s1118 + $0x1c8] sm:$0xff]
        %v1177 = vld [vmem:[%s1118 + $0x1d0] sm:$0xff]
        %v1178 = vld [vmem:[%s1118 + $0x1d8] sm:$0xff]
        %v1179 = vld [vmem:[%s1118 + $0x1e0] sm:$0xff]
        %v1180 = vld [vmem:[%s1118 + $0x1e8] sm:$0xff]
        %v1181 = vld [vmem:[%s1118 + $0x1f0] sm:$0xff]
        %v1182 = vld [vmem:[%s1118 + $0x1f8] sm:$0xff]
        %vm1183 = vcmask 1045504
        %v1184 = vrot.slane %v830, 2
        %v1185 = vrot.slane %v832, 2
        %v1186 = vsel %vm1183, %v1184, %v1185
        %v1187 = vrot.slane %v831, 2
        %v1188 = vrot.slane %v833, 2
        %v1189 = vsel %vm1183, %v1187, %v1188
        %1192 = vmatprep.subr.mxu0 %v1120
        %1193 = vmatpush1.msra.mxu0 %v1119
        %1194 = vmatprep.subr.mxu0 %v1122
        %1195 = vmatpush1.msra.mxu0 %v1121
        %1196 = vmatprep.subr.mxu0 %v1124
        %1197 = vmatpush1.msra.mxu0 %v1123
        %1198 = vmatprep.subr.mxu0 %v1126
        %1199 = vmatpush1.msra.mxu0 %v1125
        %1200 = vmatprep.subr.mxu0 %v1128
        %1201 = vmatpush1.msra.mxu0 %v1127
        %1202 = vmatprep.subr.mxu0 %v1130
        %1203 = vmatpush1.msra.mxu0 %v1129
        %1204 = vmatprep.subr.mxu0 %v1132
        %1205 = vmatpush1.msra.mxu0 %v1131
        %1206 = vmatprep.subr.mxu0 %v1134
        %1207 = vmatpush1.msra.mxu0 %v1133
        %1208 = vmatprep.subr.mxu0 %v1136
        %1209 = vmatpush1.msra.mxu0 %v1135
        %1210 = vmatprep.subr.mxu0 %v1138
        %1211 = vmatpush1.msra.mxu0 %v1137
        %1212 = vmatprep.subr.mxu0 %v1140
        %1213 = vmatpush1.msra.mxu0 %v1139
        %1214 = vmatprep.subr.mxu0 %v1142
        %1215 = vmatpush1.msra.mxu0 %v1141
        %1216 = vmatprep.subr.mxu0 %v1144
        %1217 = vmatpush1.msra.mxu0 %v1143
        %1218 = vmatprep.subr.mxu0 %v1146
        %1219 = vmatpush1.msra.mxu0 %v1145
        %1220 = vmatprep.subr.mxu0 %v1148
        %1221 = vmatpush1.msra.mxu0 %v1147
        %1222 = vmatprep.subr.mxu0 %v1150
        %1223 = vmatpush1.msra.mxu0 %v1149
        %1224 = vmatprep.subr.mxu0 %v1152
        %1225 = vmatpush1.msra.mxu0 %v1151
        %1226 = vmatprep.subr.mxu0 %v1154
        %1227 = vmatpush1.msra.mxu0 %v1153
        %1228 = vmatprep.subr.mxu0 %v1156
        %1229 = vmatpush1.msra.mxu0 %v1155
        %1230 = vmatprep.subr.mxu0 %v1158
        %1231 = vmatpush1.msra.mxu0 %v1157
        %1232 = vmatprep.subr.mxu0 %v1160
        %1233 = vmatpush1.msra.mxu0 %v1159
        %1234 = vmatprep.subr.mxu0 %v1162
        %1235 = vmatpush1.msra.mxu0 %v1161
        %1236 = vmatprep.subr.mxu0 %v1164
        %1237 = vmatpush1.msra.mxu0 %v1163
        %1238 = vmatprep.subr.mxu0 %v1166
        %1239 = vmatpush1.msra.mxu0 %v1165
        %1240 = vmatprep.subr.mxu0 %v1168
        %1241 = vmatpush1.msra.mxu0 %v1167
        %1242 = vmatprep.subr.mxu0 %v1170
        %1243 = vmatpush1.msra.mxu0 %v1169
        %1244 = vmatprep.subr.mxu0 %v1172
        %1245 = vmatpush1.msra.mxu0 %v1171
        %1246 = vmatprep.subr.mxu0 %v1174
        %1247 = vmatpush1.msra.mxu0 %v1173
        %1248 = vmatprep.subr.mxu0 %v1176
        %1249 = vmatpush1.msra.mxu0 %v1175
        %1250 = vmatprep.subr.mxu0 %v1178
        %1251 = vmatpush1.msra.mxu0 %v1177
        %1252 = vmatprep.subr.mxu0 %v1180
        %1253 = vmatpush1.msra.mxu0 %v1179
        %1254 = vmatprep.subr.mxu0 %v1182
        %1255 = vmatpush1.msra.mxu0 %v1181
        %1256 = vmatprep.mubr.f32.mxu0 %v1189
        %1257 = vmatmul.mubr.f32.gmra.mrb[0].mxu0 %v1186
        %v1258 = vpop.f32.mrb[0].mxu0
        %v1259 = vadd.f32 0.0, %v1258
        %v1260 = vpop.f32.mrb[0].mxu0
        %v1261 = vadd.f32 0.0, %v1260
        %1262 = vdwg.mxu0
        %v1263 = vadd.f32 %v1114, %v1259
        %v1264 = vadd.f32 %v1116, %v1261
        %s1265 = scalar_lea.vmem %s3, 1536
        %v1266 = vld [vmem:[%s1265] sm:$0xff]
        %v1267 = vld [vmem:[%s1265 + $0x8] sm:$0xff]
        %v1268 = vld [vmem:[%s1265 + $0x10] sm:$0xff]
        %v1269 = vld [vmem:[%s1265 + $0x18] sm:$0xff]
        %v1270 = vld [vmem:[%s1265 + $0x20] sm:$0xff]
        %v1271 = vld [vmem:[%s1265 + $0x28] sm:$0xff]
        %v1272 = vld [vmem:[%s1265 + $0x30] sm:$0xff]
        %v1273 = vld [vmem:[%s1265 + $0x38] sm:$0xff]
        %v1274 = vld [vmem:[%s1265 + $0x40] sm:$0xff]
        %v1275 = vld [vmem:[%s1265 + $0x48] sm:$0xff]
        %v1276 = vld [vmem:[%s1265 + $0x50] sm:$0xff]
        %v1277 = vld [vmem:[%s1265 + $0x58] sm:$0xff]
        %v1278 = vld [vmem:[%s1265 + $0x60] sm:$0xff]
        %v1279 = vld [vmem:[%s1265 + $0x68] sm:$0xff]
        %v1280 = vld [vmem:[%s1265 + $0x70] sm:$0xff]
        %v1281 = vld [vmem:[%s1265 + $0x78] sm:$0xff]
        %v1282 = vld [vmem:[%s1265 + $0x80] sm:$0xff]
        %v1283 = vld [vmem:[%s1265 + $0x88] sm:$0xff]
        %v1284 = vld [vmem:[%s1265 + $0x90] sm:$0xff]
        %v1285 = vld [vmem:[%s1265 + $0x98] sm:$0xff]
        %v1286 = vld [vmem:[%s1265 + $0xa0] sm:$0xff]
        %v1287 = vld [vmem:[%s1265 + $0xa8] sm:$0xff]
        %v1288 = vld [vmem:[%s1265 + $0xb0] sm:$0xff]
        %v1289 = vld [vmem:[%s1265 + $0xb8] sm:$0xff]
        %v1290 = vld [vmem:[%s1265 + $0xc0] sm:$0xff]
        %v1291 = vld [vmem:[%s1265 + $0xc8] sm:$0xff]
        %v1292 = vld [vmem:[%s1265 + $0xd0] sm:$0xff]
        %v1293 = vld [vmem:[%s1265 + $0xd8] sm:$0xff]
        %v1294 = vld [vmem:[%s1265 + $0xe0] sm:$0xff]
        %v1295 = vld [vmem:[%s1265 + $0xe8] sm:$0xff]
        %v1296 = vld [vmem:[%s1265 + $0xf0] sm:$0xff]
        %v1297 = vld [vmem:[%s1265 + $0xf8] sm:$0xff]
        %v1298 = vld [vmem:[%s1265 + $0x100] sm:$0xff]
        %v1299 = vld [vmem:[%s1265 + $0x108] sm:$0xff]
        %v1300 = vld [vmem:[%s1265 + $0x110] sm:$0xff]
        %v1301 = vld [vmem:[%s1265 + $0x118] sm:$0xff]
        %v1302 = vld [vmem:[%s1265 + $0x120] sm:$0xff]
        %v1303 = vld [vmem:[%s1265 + $0x128] sm:$0xff]
        %v1304 = vld [vmem:[%s1265 + $0x130] sm:$0xff]
        %v1305 = vld [vmem:[%s1265 + $0x138] sm:$0xff]
        %v1306 = vld [vmem:[%s1265 + $0x140] sm:$0xff]
        %v1307 = vld [vmem:[%s1265 + $0x148] sm:$0xff]
        %v1308 = vld [vmem:[%s1265 + $0x150] sm:$0xff]
        %v1309 = vld [vmem:[%s1265 + $0x158] sm:$0xff]
        %v1310 = vld [vmem:[%s1265 + $0x160] sm:$0xff]
        %v1311 = vld [vmem:[%s1265 + $0x168] sm:$0xff]
        %v1312 = vld [vmem:[%s1265 + $0x170] sm:$0xff]
        %v1313 = vld [vmem:[%s1265 + $0x178] sm:$0xff]
        %v1314 = vld [vmem:[%s1265 + $0x180] sm:$0xff]
        %v1315 = vld [vmem:[%s1265 + $0x188] sm:$0xff]
        %v1316 = vld [vmem:[%s1265 + $0x190] sm:$0xff]
        %v1317 = vld [vmem:[%s1265 + $0x198] sm:$0xff]
        %v1318 = vld [vmem:[%s1265 + $0x1a0] sm:$0xff]
        %v1319 = vld [vmem:[%s1265 + $0x1a8] sm:$0xff]
        %v1320 = vld [vmem:[%s1265 + $0x1b0] sm:$0xff]
        %v1321 = vld [vmem:[%s1265 + $0x1b8] sm:$0xff]
        %v1322 = vld [vmem:[%s1265 + $0x1c0] sm:$0xff]
        %v1323 = vld [vmem:[%s1265 + $0x1c8] sm:$0xff]
        %v1324 = vld [vmem:[%s1265 + $0x1d0] sm:$0xff]
        %v1325 = vld [vmem:[%s1265 + $0x1d8] sm:$0xff]
        %v1326 = vld [vmem:[%s1265 + $0x1e0] sm:$0xff]
        %v1327 = vld [vmem:[%s1265 + $0x1e8] sm:$0xff]
        %v1328 = vld [vmem:[%s1265 + $0x1f0] sm:$0xff]
        %v1329 = vld [vmem:[%s1265 + $0x1f8] sm:$0xff]
        %vm1330 = vcmask 1044480
        %v1331 = vrot.slane %v830, 3
        %v1332 = vrot.slane %v832, 3
        %v1333 = vsel %vm1330, %v1331, %v1332
        %v1334 = vrot.slane %v831, 3
        %v1335 = vrot.slane %v833, 3
        %v1336 = vsel %vm1330, %v1334, %v1335
        %1339 = vmatprep.subr.mxu0 %v1267
        %1340 = vmatpush1.msra.mxu0 %v1266
        %1341 = vmatprep.subr.mxu0 %v1269
        %1342 = vmatpush1.msra.mxu0 %v1268
        %1343 = vmatprep.subr.mxu0 %v1271
        %1344 = vmatpush1.msra.mxu0 %v1270
        %1345 = vmatprep.subr.mxu0 %v1273
        %1346 = vmatpush1.msra.mxu0 %v1272
        %1347 = vmatprep.subr.mxu0 %v1275
        %1348 = vmatpush1.msra.mxu0 %v1274
        %1349 = vmatprep.subr.mxu0 %v1277
        %1350 = vmatpush1.msra.mxu0 %v1276
        %1351 = vmatprep.subr.mxu0 %v1279
        %1352 = vmatpush1.msra.mxu0 %v1278
        %1353 = vmatprep.subr.mxu0 %v1281
        %1354 = vmatpush1.msra.mxu0 %v1280
        %1355 = vmatprep.subr.mxu0 %v1283
        %1356 = vmatpush1.msra.mxu0 %v1282
        %1357 = vmatprep.subr.mxu0 %v1285
        %1358 = vmatpush1.msra.mxu0 %v1284
        %1359 = vmatprep.subr.mxu0 %v1287
        %1360 = vmatpush1.msra.mxu0 %v1286
        %1361 = vmatprep.subr.mxu0 %v1289
        %1362 = vmatpush1.msra.mxu0 %v1288
        %1363 = vmatprep.subr.mxu0 %v1291
        %1364 = vmatpush1.msra.mxu0 %v1290
        %1365 = vmatprep.subr.mxu0 %v1293
        %1366 = vmatpush1.msra.mxu0 %v1292
        %1367 = vmatprep.subr.mxu0 %v1295
        %1368 = vmatpush1.msra.mxu0 %v1294
        %1369 = vmatprep.subr.mxu0 %v1297
        %1370 = vmatpush1.msra.mxu0 %v1296
        %1371 = vmatprep.subr.mxu0 %v1299
        %1372 = vmatpush1.msra.mxu0 %v1298
        %1373 = vmatprep.subr.mxu0 %v1301
        %1374 = vmatpush1.msra.mxu0 %v1300
        %1375 = vmatprep.subr.mxu0 %v1303
        %1376 = vmatpush1.msra.mxu0 %v1302
        %1377 = vmatprep.subr.mxu0 %v1305
        %1378 = vmatpush1.msra.mxu0 %v1304
        %1379 = vmatprep.subr.mxu0 %v1307
        %1380 = vmatpush1.msra.mxu0 %v1306
        %1381 = vmatprep.subr.mxu0 %v1309
        %1382 = vmatpush1.msra.mxu0 %v1308
        %1383 = vmatprep.subr.mxu0 %v1311
        %1384 = vmatpush1.msra.mxu0 %v1310
        %1385 = vmatprep.subr.mxu0 %v1313
        %1386 = vmatpush1.msra.mxu0 %v1312
        %1387 = vmatprep.subr.mxu0 %v1315
        %1388 = vmatpush1.msra.mxu0 %v1314
        %1389 = vmatprep.subr.mxu0 %v1317
        %1390 = vmatpush1.msra.mxu0 %v1316
        %1391 = vmatprep.subr.mxu0 %v1319
        %1392 = vmatpush1.msra.mxu0 %v1318
        %1393 = vmatprep.subr.mxu0 %v1321
        %1394 = vmatpush1.msra.mxu0 %v1320
        %1395 = vmatprep.subr.mxu0 %v1323
        %1396 = vmatpush1.msra.mxu0 %v1322
        %1397 = vmatprep.subr.mxu0 %v1325
        %1398 = vmatpush1.msra.mxu0 %v1324
        %1399 = vmatprep.subr.mxu0 %v1327
        %1400 = vmatpush1.msra.mxu0 %v1326
        %1401 = vmatprep.subr.mxu0 %v1329
        %1402 = vmatpush1.msra.mxu0 %v1328
        %1403 = vmatprep.mubr.f32.mxu0 %v1336
        %1404 = vmatmul.mubr.f32.gmra.mrb[0].mxu0 %v1333
        %v1405 = vpop.f32.mrb[0].mxu0
        %v1406 = vadd.f32 0.0, %v1405
        %v1407 = vpop.f32.mrb[0].mxu0
        %v1408 = vadd.f32 0.0, %v1407
        %1409 = vdwg.mxu0
        %v1410 = vadd.f32 %v1263, %v1406
        %v1411 = vadd.f32 %v1264, %v1408
        %s1412 = scalar_lea.vmem %s3, 2048
        %v1413 = vld [vmem:[%s1412] sm:$0xff]
        %v1414 = vld [vmem:[%s1412 + $0x8] sm:$0xff]
        %v1415 = vld [vmem:[%s1412 + $0x10] sm:$0xff]
        %v1416 = vld [vmem:[%s1412 + $0x18] sm:$0xff]
        %v1417 = vld [vmem:[%s1412 + $0x20] sm:$0xff]
        %v1418 = vld [vmem:[%s1412 + $0x28] sm:$0xff]
        %v1419 = vld [vmem:[%s1412 + $0x30] sm:$0xff]
        %v1420 = vld [vmem:[%s1412 + $0x38] sm:$0xff]
        %v1421 = vld [vmem:[%s1412 + $0x40] sm:$0xff]
        %v1422 = vld [vmem:[%s1412 + $0x48] sm:$0xff]
        %v1423 = vld [vmem:[%s1412 + $0x50] sm:$0xff]
        %v1424 = vld [vmem:[%s1412 + $0x58] sm:$0xff]
        %v1425 = vld [vmem:[%s1412 + $0x60] sm:$0xff]
        %v1426 = vld [vmem:[%s1412 + $0x68] sm:$0xff]
        %v1427 = vld [vmem:[%s1412 + $0x70] sm:$0xff]
        %v1428 = vld [vmem:[%s1412 + $0x78] sm:$0xff]
        %v1429 = vld [vmem:[%s1412 + $0x80] sm:$0xff]
        %v1430 = vld [vmem:[%s1412 + $0x88] sm:$0xff]
        %v1431 = vld [vmem:[%s1412 + $0x90] sm:$0xff]
        %v1432 = vld [vmem:[%s1412 + $0x98] sm:$0xff]
        %v1433 = vld [vmem:[%s1412 + $0xa0] sm:$0xff]
        %v1434 = vld [vmem:[%s1412 + $0xa8] sm:$0xff]
        %v1435 = vld [vmem:[%s1412 + $0xb0] sm:$0xff]
        %v1436 = vld [vmem:[%s1412 + $0xb8] sm:$0xff]
        %v1437 = vld [vmem:[%s1412 + $0xc0] sm:$0xff]
        %v1438 = vld [vmem:[%s1412 + $0xc8] sm:$0xff]
        %v1439 = vld [vmem:[%s1412 + $0xd0] sm:$0xff]
        %v1440 = vld [vmem:[%s1412 + $0xd8] sm:$0xff]
        %v1441 = vld [vmem:[%s1412 + $0xe0] sm:$0xff]
        %v1442 = vld [vmem:[%s1412 + $0xe8] sm:$0xff]
        %v1443 = vld [vmem:[%s1412 + $0xf0] sm:$0xff]
        %v1444 = vld [vmem:[%s1412 + $0xf8] sm:$0xff]
        %v1445 = vld [vmem:[%s1412 + $0x100] sm:$0xff]
        %v1446 = vld [vmem:[%s1412 + $0x108] sm:$0xff]
        %v1447 = vld [vmem:[%s1412 + $0x110] sm:$0xff]
        %v1448 = vld [vmem:[%s1412 + $0x118] sm:$0xff]
        %v1449 = vld [vmem:[%s1412 + $0x120] sm:$0xff]
        %v1450 = vld [vmem:[%s1412 + $0x128] sm:$0xff]
        %v1451 = vld [vmem:[%s1412 + $0x130] sm:$0xff]
        %v1452 = vld [vmem:[%s1412 + $0x138] sm:$0xff]
        %v1453 = vld [vmem:[%s1412 + $0x140] sm:$0xff]
        %v1454 = vld [vmem:[%s1412 + $0x148] sm:$0xff]
        %v1455 = vld [vmem:[%s1412 + $0x150] sm:$0xff]
        %v1456 = vld [vmem:[%s1412 + $0x158] sm:$0xff]
        %v1457 = vld [vmem:[%s1412 + $0x160] sm:$0xff]
        %v1458 = vld [vmem:[%s1412 + $0x168] sm:$0xff]
        %v1459 = vld [vmem:[%s1412 + $0x170] sm:$0xff]
        %v1460 = vld [vmem:[%s1412 + $0x178] sm:$0xff]
        %v1461 = vld [vmem:[%s1412 + $0x180] sm:$0xff]
        %v1462 = vld [vmem:[%s1412 + $0x188] sm:$0xff]
        %v1463 = vld [vmem:[%s1412 + $0x190] sm:$0xff]
        %v1464 = vld [vmem:[%s1412 + $0x198] sm:$0xff]
        %v1465 = vld [vmem:[%s1412 + $0x1a0] sm:$0xff]
        %v1466 = vld [vmem:[%s1412 + $0x1a8] sm:$0xff]
        %v1467 = vld [vmem:[%s1412 + $0x1b0] sm:$0xff]
        %v1468 = vld [vmem:[%s1412 + $0x1b8] sm:$0xff]
        %v1469 = vld [vmem:[%s1412 + $0x1c0] sm:$0xff]
        %v1470 = vld [vmem:[%s1412 + $0x1c8] sm:$0xff]
        %v1471 = vld [vmem:[%s1412 + $0x1d0] sm:$0xff]
        %v1472 = vld [vmem:[%s1412 + $0x1d8] sm:$0xff]
        %v1473 = vld [vmem:[%s1412 + $0x1e0] sm:$0xff]
        %v1474 = vld [vmem:[%s1412 + $0x1e8] sm:$0xff]
        %v1475 = vld [vmem:[%s1412 + $0x1f0] sm:$0xff]
        %v1476 = vld [vmem:[%s1412 + $0x1f8] sm:$0xff]
        %v1477 = vrot.slane %v830, 4
        %v1478 = vrot.slane %v832, 4
        %v1479 = vsel %vm470, %v1477, %v1478
        %v1480 = vrot.slane %v831, 4
        %v1481 = vrot.slane %v833, 4
        %v1482 = vsel %vm470, %v1480, %v1481
        %1485 = vmatprep.subr.mxu0 %v1414
        %1486 = vmatpush1.msra.mxu0 %v1413
        %1487 = vmatprep.subr.mxu0 %v1416
        %1488 = vmatpush1.msra.mxu0 %v1415
        %1489 = vmatprep.subr.mxu0 %v1418
        %1490 = vmatpush1.msra.mxu0 %v1417
        %1491 = vmatprep.subr.mxu0 %v1420
        %1492 = vmatpush1.msra.mxu0 %v1419
        %1493 = vmatprep.subr.mxu0 %v1422
        %1494 = vmatpush1.msra.mxu0 %v1421
        %1495 = vmatprep.subr.mxu0 %v1424
        %1496 = vmatpush1.msra.mxu0 %v1423
        %1497 = vmatprep.subr.mxu0 %v1426
        %1498 = vmatpush1.msra.mxu0 %v1425
        %1499 = vmatprep.subr.mxu0 %v1428
        %1500 = vmatpush1.msra.mxu0 %v1427
        %1501 = vmatprep.subr.mxu0 %v1430
        %1502 = vmatpush1.msra.mxu0 %v1429
        %1503 = vmatprep.subr.mxu0 %v1432
        %1504 = vmatpush1.msra.mxu0 %v1431
        %1505 = vmatprep.subr.mxu0 %v1434
        %1506 = vmatpush1.msra.mxu0 %v1433
        %1507 = vmatprep.subr.mxu0 %v1436
        %1508 = vmatpush1.msra.mxu0 %v1435
        %1509 = vmatprep.subr.mxu0 %v1438
        %1510 = vmatpush1.msra.mxu0 %v1437
        %1511 = vmatprep.subr.mxu0 %v1440
        %1512 = vmatpush1.msra.mxu0 %v1439
        %1513 = vmatprep.subr.mxu0 %v1442
        %1514 = vmatpush1.msra.mxu0 %v1441
        %1515 = vmatprep.subr.mxu0 %v1444
        %1516 = vmatpush1.msra.mxu0 %v1443
        %1517 = vmatprep.subr.mxu0 %v1446
        %1518 = vmatpush1.msra.mxu0 %v1445
        %1519 = vmatprep.subr.mxu0 %v1448
        %1520 = vmatpush1.msra.mxu0 %v1447
        %1521 = vmatprep.subr.mxu0 %v1450
        %1522 = vmatpush1.msra.mxu0 %v1449
        %1523 = vmatprep.subr.mxu0 %v1452
        %1524 = vmatpush1.msra.mxu0 %v1451
        %1525 = vmatprep.subr.mxu0 %v1454
        %1526 = vmatpush1.msra.mxu0 %v1453
        %1527 = vmatprep.subr.mxu0 %v1456
        %1528 = vmatpush1.msra.mxu0 %v1455
        %1529 = vmatprep.subr.mxu0 %v1458
        %1530 = vmatpush1.msra.mxu0 %v1457
        %1531 = vmatprep.subr.mxu0 %v1460
        %1532 = vmatpush1.msra.mxu0 %v1459
        %1533 = vmatprep.subr.mxu0 %v1462
        %1534 = vmatpush1.msra.mxu0 %v1461
        %1535 = vmatprep.subr.mxu0 %v1464
        %1536 = vmatpush1.msra.mxu0 %v1463
        %1537 = vmatprep.subr.mxu0 %v1466
        %1538 = vmatpush1.msra.mxu0 %v1465
        %1539 = vmatprep.subr.mxu0 %v1468
        %1540 = vmatpush1.msra.mxu0 %v1467
        %1541 = vmatprep.subr.mxu0 %v1470
        %1542 = vmatpush1.msra.mxu0 %v1469
        %1543 = vmatprep.subr.mxu0 %v1472
        %1544 = vmatpush1.msra.mxu0 %v1471
        %1545 = vmatprep.subr.mxu0 %v1474
        %1546 = vmatpush1.msra.mxu0 %v1473
        %1547 = vmatprep.subr.mxu0 %v1476
        %1548 = vmatpush1.msra.mxu0 %v1475
        %1549 = vmatprep.mubr.f32.mxu0 %v1482
        %1550 = vmatmul.mubr.f32.gmra.mrb[0].mxu0 %v1479
        %v1551 = vpop.f32.mrb[0].mxu0
        %v1552 = vadd.f32 0.0, %v1551
        %v1553 = vpop.f32.mrb[0].mxu0
        %v1554 = vadd.f32 0.0, %v1553
        %1555 = vdwg.mxu0
        %v1556 = vadd.f32 %v1410, %v1552
        %v1557 = vadd.f32 %v1411, %v1554
        %v1558 = vld [vmem:[%s5] sm:$0xf]
        %vm1559 = vcmask 64512
        %v1561 = vsel %vm1559, %v1558, 0
        %1563 = vmatprep.subr.mxu0 %v1557
        %1564 = vmatpush1.msra.mxu0 %v1556
        %1565 = vmatprep.subr.mxu0 0.0
        %1566 = vmatpush1.msra.mxu0 0.0
        %1567 = vmatprep.subr.mxu0 0.0
        %1568 = vmatpush1.msra.mxu0 0.0
        %1569 = vmatprep.subr.mxu0 0.0
        %1570 = vmatpush1.msra.mxu0 0.0
        %1571 = vmatprep.subr.mxu0 0.0
        %1572 = vmatpush1.msra.mxu0 0.0
        %1573 = vmatprep.subr.mxu0 0.0
        %1574 = vmatpush1.msra.mxu0 0.0
        %1575 = vmatprep.subr.mxu0 0.0
        %1576 = vmatpush1.msra.mxu0 0.0
        %1577 = vmatprep.subr.mxu0 0.0
        %1578 = vmatpush1.msra.mxu0 0.0
        %1579 = vmatprep.subr.mxu0 0.0
        %1580 = vmatpush1.msra.mxu0 0.0
        %1581 = vmatprep.subr.mxu0 0.0
        %1582 = vmatpush1.msra.mxu0 0.0
        %1583 = vmatprep.subr.mxu0 0.0
        %1584 = vmatpush1.msra.mxu0 0.0
        %1585 = vmatprep.subr.mxu0 0.0
        %1586 = vmatpush1.msra.mxu0 0.0
        %1587 = vmatprep.subr.mxu0 0.0
        %1588 = vmatpush1.msra.mxu0 0.0
        %1589 = vmatprep.subr.mxu0 0.0
        %1590 = vmatpush1.msra.mxu0 0.0
        %1591 = vmatprep.subr.mxu0 0.0
        %1592 = vmatpush1.msra.mxu0 0.0
        %1593 = vmatprep.subr.mxu0 0.0
        %1594 = vmatpush1.msra.mxu0 0.0
        %1595 = vmatprep.subr.mxu0 0.0
        %1596 = vmatpush1.msra.mxu0 0.0
        %1597 = vmatprep.subr.mxu0 0.0
        %1598 = vmatpush1.msra.mxu0 0.0
        %1599 = vmatprep.subr.mxu0 0.0
        %1600 = vmatpush1.msra.mxu0 0.0
        %1601 = vmatprep.subr.mxu0 0.0
        %1602 = vmatpush1.msra.mxu0 0.0
        %1603 = vmatprep.subr.mxu0 0.0
        %1604 = vmatpush1.msra.mxu0 0.0
        %1605 = vmatprep.subr.mxu0 0.0
        %1606 = vmatpush1.msra.mxu0 0.0
        %1607 = vmatprep.subr.mxu0 0.0
        %1608 = vmatpush1.msra.mxu0 0.0
        %1609 = vmatprep.subr.mxu0 0.0
        %1610 = vmatpush1.msra.mxu0 0.0
        %1611 = vmatprep.subr.mxu0 0.0
        %1612 = vmatpush1.msra.mxu0 0.0
        %1613 = vmatprep.subr.mxu0 0.0
        %1614 = vmatpush1.msra.mxu0 0.0
        %1615 = vmatprep.subr.mxu0 0.0
        %1616 = vmatpush1.msra.mxu0 0.0
        %1617 = vmatprep.subr.mxu0 0.0
        %1618 = vmatpush1.msra.mxu0 0.0
        %1619 = vmatprep.subr.mxu0 0.0
        %1620 = vmatpush1.msra.mxu0 0.0
        %1621 = vmatprep.subr.mxu0 0.0
        %1622 = vmatpush1.msra.mxu0 0.0
        %1623 = vmatprep.subr.mxu0 0.0
        %1624 = vmatpush1.msra.mxu0 0.0
        %1625 = vmatprep.subr.mxu0 0.0
        %1626 = vmatpush1.msra.mxu0 0.0
        %1627 = vmatprep.mubr.f32.mxu0 0.0
        %1628 = vmatmul.mubr.f32.gmra.mrb[0].mxu0 %v1561
        %v1629 = vpop.f32.mrb[0].mxu0
        %v1630 = vadd.f32 0.0, %v1629
        %v1631 = vpop.f32.mrb[0].mxu0
        %v1632 = vadd.f32 0.0, %v1631
        %1633 = vdwg.mxu0
        %s1634 = scalar_lea.vmem %s5, 4
        %v1635 = vld [vmem:[%s1634] sm:$0xf]
        %v1637 = vsel %vm1559, %v1635, 0
        %1639 = vmatprep.subr.mxu0 %v1557
        %1640 = vmatpush1.msra.mxu0 %v1556
        %1641 = vmatprep.subr.mxu0 0.0
        %1642 = vmatpush1.msra.mxu0 0.0
        %1643 = vmatprep.subr.mxu0 0.0
        %1644 = vmatpush1.msra.mxu0 0.0
        %1645 = vmatprep.subr.mxu0 0.0
        %1646 = vmatpush1.msra.mxu0 0.0
        %1647 = vmatprep.subr.mxu0 0.0
        %1648 = vmatpush1.msra.mxu0 0.0
        %1649 = vmatprep.subr.mxu0 0.0
        %1650 = vmatpush1.msra.mxu0 0.0
        %1651 = vmatprep.subr.mxu0 0.0
        %1652 = vmatpush1.msra.mxu0 0.0
        %1653 = vmatprep.subr.mxu0 0.0
        %1654 = vmatpush1.msra.mxu0 0.0
        %1655 = vmatprep.subr.mxu0 0.0
        %1656 = vmatpush1.msra.mxu0 0.0
        %1657 = vmatprep.subr.mxu0 0.0
        %1658 = vmatpush1.msra.mxu0 0.0
        %1659 = vmatprep.subr.mxu0 0.0
        %1660 = vmatpush1.msra.mxu0 0.0
        %1661 = vmatprep.subr.mxu0 0.0
        %1662 = vmatpush1.msra.mxu0 0.0
        %1663 = vmatprep.subr.mxu0 0.0
        %1664 = vmatpush1.msra.mxu0 0.0
        %1665 = vmatprep.subr.mxu0 0.0
        %1666 = vmatpush1.msra.mxu0 0.0
        %1667 = vmatprep.subr.mxu0 0.0
        %1668 = vmatpush1.msra.mxu0 0.0
        %1669 = vmatprep.subr.mxu0 0.0
        %1670 = vmatpush1.msra.mxu0 0.0
        %1671 = vmatprep.subr.mxu0 0.0
        %1672 = vmatpush1.msra.mxu0 0.0
        %1673 = vmatprep.subr.mxu0 0.0
        %1674 = vmatpush1.msra.mxu0 0.0
        %1675 = vmatprep.subr.mxu0 0.0
        %1676 = vmatpush1.msra.mxu0 0.0
        %1677 = vmatprep.subr.mxu0 0.0
        %1678 = vmatpush1.msra.mxu0 0.0
        %1679 = vmatprep.subr.mxu0 0.0
        %1680 = vmatpush1.msra.mxu0 0.0
        %1681 = vmatprep.subr.mxu0 0.0
        %1682 = vmatpush1.msra.mxu0 0.0
        %1683 = vmatprep.subr.mxu0 0.0
        %1684 = vmatpush1.msra.mxu0 0.0
        %1685 = vmatprep.subr.mxu0 0.0
        %1686 = vmatpush1.msra.mxu0 0.0
        %1687 = vmatprep.subr.mxu0 0.0
        %1688 = vmatpush1.msra.mxu0 0.0
        %1689 = vmatprep.subr.mxu0 0.0
        %1690 = vmatpush1.msra.mxu0 0.0
        %1691 = vmatprep.subr.mxu0 0.0
        %1692 = vmatpush1.msra.mxu0 0.0
        %1693 = vmatprep.subr.mxu0 0.0
        %1694 = vmatpush1.msra.mxu0 0.0
        %1695 = vmatprep.subr.mxu0 0.0
        %1696 = vmatpush1.msra.mxu0 0.0
        %1697 = vmatprep.subr.mxu0 0.0
        %1698 = vmatpush1.msra.mxu0 0.0
        %1699 = vmatprep.subr.mxu0 0.0
        %1700 = vmatpush1.msra.mxu0 0.0
        %1701 = vmatprep.subr.mxu0 0.0
        %1702 = vmatpush1.msra.mxu0 0.0
        %1703 = vmatprep.mubr.f32.mxu0 0.0
        %1704 = vmatmul.mubr.f32.gmra.mrb[0].mxu0 %v1637
        %v1705 = vpop.f32.mrb[0].mxu0
        %v1706 = vadd.f32 0.0, %v1705
        %v1707 = vpop.f32.mrb[0].mxu0
        %v1708 = vadd.f32 0.0, %v1707
        %1709 = vdwg.mxu0
        %v1710 = vmax.f32 %v1630, %v1706
        %v1711 = vmax.f32 %v1632, %v1708
        %v1712 = vmax.f32 %v1710, %v1711
        %v1713 = vld [vmem:[%s4] sm:$0x1]
        %v1715 = vlaneseq
        %v1716 = vshrl.u32 %v1715, 7
        %v1717 = vsub.s32 0, %v1716
        %v1718 = vrot.slane %v1713, %v1717
        %v1720 = vadd.f32 %v1712, %v1718
        %v1721 = vmax.f32 %v1720, 0.0
        %v1722 = vld [vmem:[#allocation5] sm:$0xff]
        %v1723 = vld [vmem:[#allocation5 + $0x8] sm:$0xff]
        %v1724 = vld [vmem:[#allocation5 + $0x10] sm:$0xff]
        %v1725 = vld [vmem:[#allocation5 + $0x18] sm:$0xff]
        %v1726 = vld [vmem:[#allocation5 + $0x20] sm:$0xff]
        %v1727 = vld [vmem:[#allocation5 + $0x28] sm:$0xff]
        %v1728 = vld [vmem:[#allocation5 + $0x30] sm:$0xff]
        %v1729 = vld [vmem:[#allocation5 + $0x38] sm:$0xff]
        %v1730 = vld [vmem:[#allocation5 + $0x40] sm:$0xff]
        %v1731 = vld [vmem:[#allocation5 + $0x48] sm:$0xff]
        %v1732 = vld [vmem:[#allocation5 + $0x50] sm:$0xff]
        %v1733 = vld [vmem:[#allocation5 + $0x58] sm:$0xff]
        %v1734 = vld [vmem:[#allocation5 + $0x60] sm:$0xff]
        %v1735 = vld [vmem:[#allocation5 + $0x68] sm:$0xff]
        %v1736 = vld [vmem:[#allocation5 + $0x70] sm:$0xff]
        %v1737 = vld [vmem:[#allocation5 + $0x78] sm:$0xff]
        %v1738 = vld [vmem:[#allocation5 + $0x80] sm:$0xff]
        %v1739 = vld [vmem:[#allocation5 + $0x88] sm:$0xff]
        %v1740 = vld [vmem:[#allocation5 + $0x90] sm:$0xff]
        %v1741 = vld [vmem:[#allocation5 + $0x98] sm:$0xff]
        %v1742 = vld [vmem:[#allocation5 + $0xa0] sm:$0xff]
        %v1743 = vld [vmem:[#allocation5 + $0xa8] sm:$0xff]
        %v1744 = vld [vmem:[#allocation5 + $0xb0] sm:$0xff]
        %v1745 = vld [vmem:[#allocation5 + $0xb8] sm:$0xff]
        %v1746 = vld [vmem:[#allocation5 + $0xc0] sm:$0xff]
        %v1747 = vld [vmem:[#allocation5 + $0xc8] sm:$0xff]
        %v1748 = vld [vmem:[#allocation5 + $0xd0] sm:$0xff]
        %v1749 = vld [vmem:[#allocation5 + $0xd8] sm:$0xff]
        %v1750 = vld [vmem:[#allocation5 + $0xe0] sm:$0xff]
        %v1751 = vld [vmem:[#allocation5 + $0xe8] sm:$0xff]
        %v1752 = vld [vmem:[#allocation5 + $0xf0] sm:$0xff]
        %v1753 = vld [vmem:[#allocation5 + $0xf8] sm:$0xff]
        %v1754 = vld [vmem:[#allocation5 + $0x100] sm:$0xff]
        %v1755 = vld [vmem:[#allocation5 + $0x108] sm:$0xff]
        %v1756 = vld [vmem:[#allocation5 + $0x110] sm:$0xff]
        %v1757 = vld [vmem:[#allocation5 + $0x118] sm:$0xff]
        %v1758 = vld [vmem:[#allocation5 + $0x120] sm:$0xff]
        %v1759 = vld [vmem:[#allocation5 + $0x128] sm:$0xff]
        %v1760 = vld [vmem:[#allocation5 + $0x130] sm:$0xff]
        %v1761 = vld [vmem:[#allocation5 + $0x138] sm:$0xff]
        %v1762 = vld [vmem:[#allocation5 + $0x140] sm:$0xff]
        %v1763 = vld [vmem:[#allocation5 + $0x148] sm:$0xff]
        %v1764 = vld [vmem:[#allocation5 + $0x150] sm:$0xff]
        %v1765 = vld [vmem:[#allocation5 + $0x158] sm:$0xff]
        %v1766 = vld [vmem:[#allocation5 + $0x160] sm:$0xff]
        %v1767 = vld [vmem:[#allocation5 + $0x168] sm:$0xff]
        %v1768 = vld [vmem:[#allocation5 + $0x170] sm:$0xff]
        %v1769 = vld [vmem:[#allocation5 + $0x178] sm:$0xff]
        %v1770 = vld [vmem:[#allocation5 + $0x180] sm:$0xff]
        %v1771 = vld [vmem:[#allocation5 + $0x188] sm:$0xff]
        %v1772 = vld [vmem:[#allocation5 + $0x190] sm:$0xff]
        %v1773 = vld [vmem:[#allocation5 + $0x198] sm:$0xff]
        %v1774 = vld [vmem:[#allocation5 + $0x1a0] sm:$0xff]
        %v1775 = vld [vmem:[#allocation5 + $0x1a8] sm:$0xff]
        %v1776 = vld [vmem:[#allocation5 + $0x1b0] sm:$0xff]
        %v1777 = vld [vmem:[#allocation5 + $0x1b8] sm:$0xff]
        %v1778 = vld [vmem:[#allocation5 + $0x1c0] sm:$0xff]
        %v1779 = vld [vmem:[#allocation5 + $0x1c8] sm:$0xff]
        %v1780 = vld [vmem:[#allocation5 + $0x1d0] sm:$0xff]
        %v1781 = vld [vmem:[#allocation5 + $0x1d8] sm:$0xff]
        %v1782 = vld [vmem:[#allocation5 + $0x1e0] sm:$0xff]
        %v1783 = vld [vmem:[#allocation5 + $0x1e8] sm:$0xff]
        %v1784 = vld [vmem:[#allocation5 + $0x1f0] sm:$0xff]
        %v1785 = vld [vmem:[#allocation5 + $0x1f8] sm:$0xff]
        %s1786 = scalar_lea.vmem [#allocation5], 512
        %v1787 = vld [vmem:[%s1786] sm:$0xff]
        %v1788 = vld [vmem:[%s1786 + $0x8] sm:$0xff]
        %v1789 = vld [vmem:[%s1786 + $0x10] sm:$0xff]
        %v1790 = vld [vmem:[%s1786 + $0x18] sm:$0xff]
        %v1791 = vld [vmem:[%s1786 + $0x20] sm:$0xff]
        %v1792 = vld [vmem:[%s1786 + $0x28] sm:$0xff]
        %v1793 = vld [vmem:[%s1786 + $0x30] sm:$0xff]
        %v1794 = vld [vmem:[%s1786 + $0x38] sm:$0xff]
        %v1795 = vld [vmem:[%s1786 + $0x40] sm:$0xff]
        %v1796 = vld [vmem:[%s1786 + $0x48] sm:$0xff]
        %v1797 = vld [vmem:[%s1786 + $0x50] sm:$0xff]
        %v1798 = vld [vmem:[%s1786 + $0x58] sm:$0xff]
        %v1799 = vld [vmem:[%s1786 + $0x60] sm:$0xff]
        %v1800 = vld [vmem:[%s1786 + $0x68] sm:$0xff]
        %v1801 = vld [vmem:[%s1786 + $0x70] sm:$0xff]
        %v1802 = vld [vmem:[%s1786 + $0x78] sm:$0xff]
        %v1803 = vld [vmem:[%s1786 + $0x80] sm:$0xff]
        %v1804 = vld [vmem:[%s1786 + $0x88] sm:$0xff]
        %v1805 = vld [vmem:[%s1786 + $0x90] sm:$0xff]
        %v1806 = vld [vmem:[%s1786 + $0x98] sm:$0xff]
        %v1807 = vld [vmem:[%s1786 + $0xa0] sm:$0xff]
        %v1808 = vld [vmem:[%s1786 + $0xa8] sm:$0xff]
        %v1809 = vld [vmem:[%s1786 + $0xb0] sm:$0xff]
        %v1810 = vld [vmem:[%s1786 + $0xb8] sm:$0xff]
        %v1811 = vld [vmem:[%s1786 + $0xc0] sm:$0xff]
        %v1812 = vld [vmem:[%s1786 + $0xc8] sm:$0xff]
        %v1813 = vld [vmem:[%s1786 + $0xd0] sm:$0xff]
        %v1814 = vld [vmem:[%s1786 + $0xd8] sm:$0xff]
        %v1815 = vld [vmem:[%s1786 + $0xe0] sm:$0xff]
        %v1816 = vld [vmem:[%s1786 + $0xe8] sm:$0xff]
        %v1817 = vld [vmem:[%s1786 + $0xf0] sm:$0xff]
        %v1818 = vld [vmem:[%s1786 + $0xf8] sm:$0xff]
        %v1819 = vld [vmem:[%s1786 + $0x100] sm:$0xff]
        %v1820 = vld [vmem:[%s1786 + $0x108] sm:$0xff]
        %v1821 = vld [vmem:[%s1786 + $0x110] sm:$0xff]
        %v1822 = vld [vmem:[%s1786 + $0x118] sm:$0xff]
        %v1823 = vld [vmem:[%s1786 + $0x120] sm:$0xff]
        %v1824 = vld [vmem:[%s1786 + $0x128] sm:$0xff]
        %v1825 = vld [vmem:[%s1786 + $0x130] sm:$0xff]
        %v1826 = vld [vmem:[%s1786 + $0x138] sm:$0xff]
        %v1827 = vld [vmem:[%s1786 + $0x140] sm:$0xff]
        %v1828 = vld [vmem:[%s1786 + $0x148] sm:$0xff]
        %v1829 = vld [vmem:[%s1786 + $0x150] sm:$0xff]
        %v1830 = vld [vmem:[%s1786 + $0x158] sm:$0xff]
        %v1831 = vld [vmem:[%s1786 + $0x160] sm:$0xff]
        %v1832 = vld [vmem:[%s1786 + $0x168] sm:$0xff]
        %v1833 = vld [vmem:[%s1786 + $0x170] sm:$0xff]
        %v1834 = vld [vmem:[%s1786 + $0x178] sm:$0xff]
        %v1835 = vld [vmem:[%s1786 + $0x180] sm:$0xff]
        %v1836 = vld [vmem:[%s1786 + $0x188] sm:$0xff]
        %v1837 = vld [vmem:[%s1786 + $0x190] sm:$0xff]
        %v1838 = vld [vmem:[%s1786 + $0x198] sm:$0xff]
        %v1839 = vld [vmem:[%s1786 + $0x1a0] sm:$0xff]
        %v1840 = vld [vmem:[%s1786 + $0x1a8] sm:$0xff]
        %v1841 = vld [vmem:[%s1786 + $0x1b0] sm:$0xff]
        %v1842 = vld [vmem:[%s1786 + $0x1b8] sm:$0xff]
        %v1843 = vld [vmem:[%s1786 + $0x1c0] sm:$0xff]
        %v1844 = vld [vmem:[%s1786 + $0x1c8] sm:$0xff]
        %v1845 = vld [vmem:[%s1786 + $0x1d0] sm:$0xff]
        %v1846 = vld [vmem:[%s1786 + $0x1d8] sm:$0xff]
        %v1847 = vld [vmem:[%s1786 + $0x1e0] sm:$0xff]
        %v1848 = vld [vmem:[%s1786 + $0x1e8] sm:$0xff]
        %v1849 = vld [vmem:[%s1786 + $0x1f0] sm:$0xff]
        %v1850 = vld [vmem:[%s1786 + $0x1f8] sm:$0xff]
        %v1852 = vrot.slane %v1721, 1
        %1854 = vmatprep.subr.mxu0 %v1788
        %1855 = vmatpush1.msra.mxu0 %v1787
        %1856 = vmatprep.subr.mxu0 %v1792
        %1857 = vmatpush1.msra.mxu0 %v1791
        %1858 = vmatprep.subr.mxu0 %v1796
        %1859 = vmatpush1.msra.mxu0 %v1795
        %1860 = vmatprep.subr.mxu0 %v1800
        %1861 = vmatpush1.msra.mxu0 %v1799
        %1862 = vmatprep.subr.mxu0 %v1804
        %1863 = vmatpush1.msra.mxu0 %v1803
        %1864 = vmatprep.subr.mxu0 %v1808
        %1865 = vmatpush1.msra.mxu0 %v1807
        %1866 = vmatprep.subr.mxu0 %v1812
        %1867 = vmatpush1.msra.mxu0 %v1811
        %1868 = vmatprep.subr.mxu0 %v1816
        %1869 = vmatpush1.msra.mxu0 %v1815
        %1870 = vmatprep.subr.mxu0 %v1820
        %1871 = vmatpush1.msra.mxu0 %v1819
        %1872 = vmatprep.subr.mxu0 %v1824
        %1873 = vmatpush1.msra.mxu0 %v1823
        %1874 = vmatprep.subr.mxu0 %v1828
        %1875 = vmatpush1.msra.mxu0 %v1827
        %1876 = vmatprep.subr.mxu0 %v1832
        %1877 = vmatpush1.msra.mxu0 %v1831
        %1878 = vmatprep.subr.mxu0 %v1836
        %1879 = vmatpush1.msra.mxu0 %v1835
        %1880 = vmatprep.subr.mxu0 %v1840
        %1881 = vmatpush1.msra.mxu0 %v1839
        %1882 = vmatprep.subr.mxu0 %v1844
        %1883 = vmatpush1.msra.mxu0 %v1843
        %1884 = vmatprep.subr.mxu0 %v1848
        %1885 = vmatpush1.msra.mxu0 %v1847
        %1886 = vmatprep.subr.mxu0 0.0
        %1887 = vmatpush1.msra.mxu0 0.0
        %1888 = vmatprep.subr.mxu0 0.0
        %1889 = vmatpush1.msra.mxu0 0.0
        %1890 = vmatprep.subr.mxu0 0.0
        %1891 = vmatpush1.msra.mxu0 0.0
        %1892 = vmatprep.subr.mxu0 0.0
        %1893 = vmatpush1.msra.mxu0 0.0
        %1894 = vmatprep.subr.mxu0 0.0
        %1895 = vmatpush1.msra.mxu0 0.0
        %1896 = vmatprep.subr.mxu0 0.0
        %1897 = vmatpush1.msra.mxu0 0.0
        %1898 = vmatprep.subr.mxu0 0.0
        %1899 = vmatpush1.msra.mxu0 0.0
        %1900 = vmatprep.subr.mxu0 0.0
        %1901 = vmatpush1.msra.mxu0 0.0
        %1902 = vmatprep.subr.mxu0 0.0
        %1903 = vmatpush1.msra.mxu0 0.0
        %1904 = vmatprep.subr.mxu0 0.0
        %1905 = vmatpush1.msra.mxu0 0.0
        %1906 = vmatprep.subr.mxu0 0.0
        %1907 = vmatpush1.msra.mxu0 0.0
        %1908 = vmatprep.subr.mxu0 0.0
        %1909 = vmatpush1.msra.mxu0 0.0
        %1910 = vmatprep.subr.mxu0 0.0
        %1911 = vmatpush1.msra.mxu0 0.0
        %1912 = vmatprep.subr.mxu0 0.0
        %1913 = vmatpush1.msra.mxu0 0.0
        %1914 = vmatprep.subr.mxu0 0.0
        %1915 = vmatpush1.msra.mxu0 0.0
        %1916 = vmatprep.subr.mxu0 0.0
        %1917 = vmatpush1.msra.mxu0 0.0
        %1918 = vmatprep.mubr.f32.mxu0 0.0
        %1919 = vmatmul.mubr.f32.gmra.mrb[0].mxu0 %v1852
        %v1920 = vpop.f32.mrb[0].mxu0
        %v1921 = vadd.f32 0.0, %v1920
        %v1922 = vpop.f32.mrb[0].mxu0
        %v1923 = vadd.f32 0.0, %v1922
        %1924 = vdwg.mxu0
        %1925 = vmatprep.subr.mxu0 %v1790
        %1926 = vmatpush1.msra.mxu0 %v1789
        %1927 = vmatprep.subr.mxu0 %v1794
        %1928 = vmatpush1.msra.mxu0 %v1793
        %1929 = vmatprep.subr.mxu0 %v1798
        %1930 = vmatpush1.msra.mxu0 %v1797
        %1931 = vmatprep.subr.mxu0 %v1802
        %1932 = vmatpush1.msra.mxu0 %v1801
        %1933 = vmatprep.subr.mxu0 %v1806
        %1934 = vmatpush1.msra.mxu0 %v1805
        %1935 = vmatprep.subr.mxu0 %v1810
        %1936 = vmatpush1.msra.mxu0 %v1809
        %1937 = vmatprep.subr.mxu0 %v1814
        %1938 = vmatpush1.msra.mxu0 %v1813
        %1939 = vmatprep.subr.mxu0 %v1818
        %1940 = vmatpush1.msra.mxu0 %v1817
        %1941 = vmatprep.subr.mxu0 %v1822
        %1942 = vmatpush1.msra.mxu0 %v1821
        %1943 = vmatprep.subr.mxu0 %v1826
        %1944 = vmatpush1.msra.mxu0 %v1825
        %1945 = vmatprep.subr.mxu0 %v1830
        %1946 = vmatpush1.msra.mxu0 %v1829
        %1947 = vmatprep.subr.mxu0 %v1834
        %1948 = vmatpush1.msra.mxu0 %v1833
        %1949 = vmatprep.subr.mxu0 %v1838
        %1950 = vmatpush1.msra.mxu0 %v1837
        %1951 = vmatprep.subr.mxu0 %v1842
        %1952 = vmatpush1.msra.mxu0 %v1841
        %1953 = vmatprep.subr.mxu0 %v1846
        %1954 = vmatpush1.msra.mxu0 %v1845
        %1955 = vmatprep.subr.mxu0 %v1850
        %1956 = vmatpush1.msra.mxu0 %v1849
        %1957 = vmatprep.subr.mxu0 0.0
        %1958 = vmatpush1.msra.mxu0 0.0
        %1959 = vmatprep.subr.mxu0 0.0
        %1960 = vmatpush1.msra.mxu0 0.0
        %1961 = vmatprep.subr.mxu0 0.0
        %1962 = vmatpush1.msra.mxu0 0.0
        %1963 = vmatprep.subr.mxu0 0.0
        %1964 = vmatpush1.msra.mxu0 0.0
        %1965 = vmatprep.subr.mxu0 0.0
        %1966 = vmatpush1.msra.mxu0 0.0
        %1967 = vmatprep.subr.mxu0 0.0
        %1968 = vmatpush1.msra.mxu0 0.0
        %1969 = vmatprep.subr.mxu0 0.0
        %1970 = vmatpush1.msra.mxu0 0.0
        %1971 = vmatprep.subr.mxu0 0.0
        %1972 = vmatpush1.msra.mxu0 0.0
        %1973 = vmatprep.subr.mxu0 0.0
        %1974 = vmatpush1.msra.mxu0 0.0
        %1975 = vmatprep.subr.mxu0 0.0
        %1976 = vmatpush1.msra.mxu0 0.0
        %1977 = vmatprep.subr.mxu0 0.0
        %1978 = vmatpush1.msra.mxu0 0.0
        %1979 = vmatprep.subr.mxu0 0.0
        %1980 = vmatpush1.msra.mxu0 0.0
        %1981 = vmatprep.subr.mxu0 0.0
        %1982 = vmatpush1.msra.mxu0 0.0
        %1983 = vmatprep.subr.mxu0 0.0
        %1984 = vmatpush1.msra.mxu0 0.0
        %1985 = vmatprep.subr.mxu0 0.0
        %1986 = vmatpush1.msra.mxu0 0.0
        %1987 = vmatprep.subr.mxu0 0.0
        %1988 = vmatpush1.msra.mxu0 0.0
        %1989 = vmatprep.mubr.f32.mxu0 0.0
        %1990 = vmatmul.mubr.f32.gmra.mrb[0].mxu0 %v1852
        %v1991 = vpop.f32.mrb[0].mxu0
        %v1992 = vadd.f32 0.0, %v1991
        %v1993 = vpop.f32.mrb[0].mxu0
        %v1994 = vadd.f32 0.0, %v1993
        %1995 = vdwg.mxu0
        %1996 = vmatprep.subr.mxu0 %v1723
        %1997 = vmatpush1.msra.mxu0 %v1722
        %1998 = vmatprep.subr.mxu0 %v1727
        %1999 = vmatpush1.msra.mxu0 %v1726
        %2000 = vmatprep.subr.mxu0 %v1731
        %2001 = vmatpush1.msra.mxu0 %v1730
        %2002 = vmatprep.subr.mxu0 %v1735
        %2003 = vmatpush1.msra.mxu0 %v1734
        %2004 = vmatprep.subr.mxu0 %v1739
        %2005 = vmatpush1.msra.mxu0 %v1738
        %2006 = vmatprep.subr.mxu0 %v1743
        %2007 = vmatpush1.msra.mxu0 %v1742
        %2008 = vmatprep.subr.mxu0 %v1747
        %2009 = vmatpush1.msra.mxu0 %v1746
        %2010 = vmatprep.subr.mxu0 %v1751
        %2011 = vmatpush1.msra.mxu0 %v1750
        %2012 = vmatprep.subr.mxu0 %v1755
        %2013 = vmatpush1.msra.mxu0 %v1754
        %2014 = vmatprep.subr.mxu0 %v1759
        %2015 = vmatpush1.msra.mxu0 %v1758
        %2016 = vmatprep.subr.mxu0 %v1763
        %2017 = vmatpush1.msra.mxu0 %v1762
        %2018 = vmatprep.subr.mxu0 %v1767
        %2019 = vmatpush1.msra.mxu0 %v1766
        %2020 = vmatprep.subr.mxu0 %v1771
        %2021 = vmatpush1.msra.mxu0 %v1770
        %2022 = vmatprep.subr.mxu0 %v1775
        %2023 = vmatpush1.msra.mxu0 %v1774
        %2024 = vmatprep.subr.mxu0 %v1779
        %2025 = vmatpush1.msra.mxu0 %v1778
        %2026 = vmatprep.subr.mxu0 %v1783
        %2027 = vmatpush1.msra.mxu0 %v1782
        %2028 = vmatprep.subr.mxu0 0.0
        %2029 = vmatpush1.msra.mxu0 0.0
        %2030 = vmatprep.subr.mxu0 0.0
        %2031 = vmatpush1.msra.mxu0 0.0
        %2032 = vmatprep.subr.mxu0 0.0
        %2033 = vmatpush1.msra.mxu0 0.0
        %2034 = vmatprep.subr.mxu0 0.0
        %2035 = vmatpush1.msra.mxu0 0.0
        %2036 = vmatprep.subr.mxu0 0.0
        %2037 = vmatpush1.msra.mxu0 0.0
        %2038 = vmatprep.subr.mxu0 0.0
        %2039 = vmatpush1.msra.mxu0 0.0
        %2040 = vmatprep.subr.mxu0 0.0
        %2041 = vmatpush1.msra.mxu0 0.0
        %2042 = vmatprep.subr.mxu0 0.0
        %2043 = vmatpush1.msra.mxu0 0.0
        %2044 = vmatprep.subr.mxu0 0.0
        %2045 = vmatpush1.msra.mxu0 0.0
        %2046 = vmatprep.subr.mxu0 0.0
        %2047 = vmatpush1.msra.mxu0 0.0
        %2048 = vmatprep.subr.mxu0 0.0
        %2049 = vmatpush1.msra.mxu0 0.0
        %2050 = vmatprep.subr.mxu0 0.0
        %2051 = vmatpush1.msra.mxu0 0.0
        %2052 = vmatprep.subr.mxu0 0.0
        %2053 = vmatpush1.msra.mxu0 0.0
        %2054 = vmatprep.subr.mxu0 0.0
        %2055 = vmatpush1.msra.mxu0 0.0
        %2056 = vmatprep.subr.mxu0 0.0
        %2057 = vmatpush1.msra.mxu0 0.0
        %2058 = vmatprep.subr.mxu0 0.0
        %2059 = vmatpush1.msra.mxu0 0.0
        %2060 = vmatprep.mubr.f32.mxu0 0.0
        %2061 = vmatmul.mubr.f32.gmra.mrb[0].mxu0 %v1721
        %v2062 = vpop.f32.mrb[0].mxu0
        %v2063 = vadd.f32 %v1921, %v2062
        %v2064 = vpop.f32.mrb[0].mxu0
        %v2065 = vadd.f32 %v1923, %v2064
        %2066 = vdwg.mxu0
        %2067 = vmatprep.subr.mxu0 %v1725
        %2068 = vmatpush1.msra.mxu0 %v1724
        %2069 = vmatprep.subr.mxu0 %v1729
        %2070 = vmatpush1.msra.mxu0 %v1728
        %2071 = vmatprep.subr.mxu0 %v1733
        %2072 = vmatpush1.msra.mxu0 %v1732
        %2073 = vmatprep.subr.mxu0 %v1737
        %2074 = vmatpush1.msra.mxu0 %v1736
        %2075 = vmatprep.subr.mxu0 %v1741
        %2076 = vmatpush1.msra.mxu0 %v1740
        %2077 = vmatprep.subr.mxu0 %v1745
        %2078 = vmatpush1.msra.mxu0 %v1744
        %2079 = vmatprep.subr.mxu0 %v1749
        %2080 = vmatpush1.msra.mxu0 %v1748
        %2081 = vmatprep.subr.mxu0 %v1753
        %2082 = vmatpush1.msra.mxu0 %v1752
        %2083 = vmatprep.subr.mxu0 %v1757
        %2084 = vmatpush1.msra.mxu0 %v1756
        %2085 = vmatprep.subr.mxu0 %v1761
        %2086 = vmatpush1.msra.mxu0 %v1760
        %2087 = vmatprep.subr.mxu0 %v1765
        %2088 = vmatpush1.msra.mxu0 %v1764
        %2089 = vmatprep.subr.mxu0 %v1769
        %2090 = vmatpush1.msra.mxu0 %v1768
        %2091 = vmatprep.subr.mxu0 %v1773
        %2092 = vmatpush1.msra.mxu0 %v1772
        %2093 = vmatprep.subr.mxu0 %v1777
        %2094 = vmatpush1.msra.mxu0 %v1776
        %2095 = vmatprep.subr.mxu0 %v1781
        %2096 = vmatpush1.msra.mxu0 %v1780
        %2097 = vmatprep.subr.mxu0 %v1785
        %2098 = vmatpush1.msra.mxu0 %v1784
        %2099 = vmatprep.subr.mxu0 0.0
        %2100 = vmatpush1.msra.mxu0 0.0
        %2101 = vmatprep.subr.mxu0 0.0
        %2102 = vmatpush1.msra.mxu0 0.0
        %2103 = vmatprep.subr.mxu0 0.0
        %2104 = vmatpush1.msra.mxu0 0.0
        %2105 = vmatprep.subr.mxu0 0.0
        %2106 = vmatpush1.msra.mxu0 0.0
        %2107 = vmatprep.subr.mxu0 0.0
        %2108 = vmatpush1.msra.mxu0 0.0
        %2109 = vmatprep.subr.mxu0 0.0
        %2110 = vmatpush1.msra.mxu0 0.0
        %2111 = vmatprep.subr.mxu0 0.0
        %2112 = vmatpush1.msra.mxu0 0.0
        %2113 = vmatprep.subr.mxu0 0.0
        %2114 = vmatpush1.msra.mxu0 0.0
        %2115 = vmatprep.subr.mxu0 0.0
        %2116 = vmatpush1.msra.mxu0 0.0
        %2117 = vmatprep.subr.mxu0 0.0
        %2118 = vmatpush1.msra.mxu0 0.0
        %2119 = vmatprep.subr.mxu0 0.0
        %2120 = vmatpush1.msra.mxu0 0.0
        %2121 = vmatprep.subr.mxu0 0.0
        %2122 = vmatpush1.msra.mxu0 0.0
        %2123 = vmatprep.subr.mxu0 0.0
        %2124 = vmatpush1.msra.mxu0 0.0
        %2125 = vmatprep.subr.mxu0 0.0
        %2126 = vmatpush1.msra.mxu0 0.0
        %2127 = vmatprep.subr.mxu0 0.0
        %2128 = vmatpush1.msra.mxu0 0.0
        %2129 = vmatprep.subr.mxu0 0.0
        %2130 = vmatpush1.msra.mxu0 0.0
        %2131 = vmatprep.mubr.f32.mxu0 0.0
        %2132 = vmatmul.mubr.f32.gmra.mrb[0].mxu0 %v1721
        %v2133 = vpop.f32.mrb[0].mxu0
        %v2134 = vadd.f32 %v1992, %v2133
        %v2135 = vpop.f32.mrb[0].mxu0
        %v2136 = vadd.f32 %v1994, %v2135
        %2137 = vdwg.mxu0
        %s2138 = scalar_lea.vmem [#allocation5], 1024
        %v2139 = vld [vmem:[%s2138] sm:$0xff]
        %v2140 = vld [vmem:[%s2138 + $0x8] sm:$0xff]
        %v2141 = vld [vmem:[%s2138 + $0x10] sm:$0xff]
        %v2142 = vld [vmem:[%s2138 + $0x18] sm:$0xff]
        %v2143 = vld [vmem:[%s2138 + $0x20] sm:$0xff]
        %v2144 = vld [vmem:[%s2138 + $0x28] sm:$0xff]
        %v2145 = vld [vmem:[%s2138 + $0x30] sm:$0xff]
        %v2146 = vld [vmem:[%s2138 + $0x38] sm:$0xff]
        %v2147 = vld [vmem:[%s2138 + $0x40] sm:$0xff]
        %v2148 = vld [vmem:[%s2138 + $0x48] sm:$0xff]
        %v2149 = vld [vmem:[%s2138 + $0x50] sm:$0xff]
        %v2150 = vld [vmem:[%s2138 + $0x58] sm:$0xff]
        %v2151 = vld [vmem:[%s2138 + $0x60] sm:$0xff]
        %v2152 = vld [vmem:[%s2138 + $0x68] sm:$0xff]
        %v2153 = vld [vmem:[%s2138 + $0x70] sm:$0xff]
        %v2154 = vld [vmem:[%s2138 + $0x78] sm:$0xff]
        %v2155 = vld [vmem:[%s2138 + $0x80] sm:$0xff]
        %v2156 = vld [vmem:[%s2138 + $0x88] sm:$0xff]
        %v2157 = vld [vmem:[%s2138 + $0x90] sm:$0xff]
        %v2158 = vld [vmem:[%s2138 + $0x98] sm:$0xff]
        %v2159 = vld [vmem:[%s2138 + $0xa0] sm:$0xff]
        %v2160 = vld [vmem:[%s2138 + $0xa8] sm:$0xff]
        %v2161 = vld [vmem:[%s2138 + $0xb0] sm:$0xff]
        %v2162 = vld [vmem:[%s2138 + $0xb8] sm:$0xff]
        %v2163 = vld [vmem:[%s2138 + $0xc0] sm:$0xff]
        %v2164 = vld [vmem:[%s2138 + $0xc8] sm:$0xff]
        %v2165 = vld [vmem:[%s2138 + $0xd0] sm:$0xff]
        %v2166 = vld [vmem:[%s2138 + $0xd8] sm:$0xff]
        %v2167 = vld [vmem:[%s2138 + $0xe0] sm:$0xff]
        %v2168 = vld [vmem:[%s2138 + $0xe8] sm:$0xff]
        %v2169 = vld [vmem:[%s2138 + $0xf0] sm:$0xff]
        %v2170 = vld [vmem:[%s2138 + $0xf8] sm:$0xff]
        %v2171 = vld [vmem:[%s2138 + $0x100] sm:$0xff]
        %v2172 = vld [vmem:[%s2138 + $0x108] sm:$0xff]
        %v2173 = vld [vmem:[%s2138 + $0x110] sm:$0xff]
        %v2174 = vld [vmem:[%s2138 + $0x118] sm:$0xff]
        %v2175 = vld [vmem:[%s2138 + $0x120] sm:$0xff]
        %v2176 = vld [vmem:[%s2138 + $0x128] sm:$0xff]
        %v2177 = vld [vmem:[%s2138 + $0x130] sm:$0xff]
        %v2178 = vld [vmem:[%s2138 + $0x138] sm:$0xff]
        %v2179 = vld [vmem:[%s2138 + $0x140] sm:$0xff]
        %v2180 = vld [vmem:[%s2138 + $0x148] sm:$0xff]
        %v2181 = vld [vmem:[%s2138 + $0x150] sm:$0xff]
        %v2182 = vld [vmem:[%s2138 + $0x158] sm:$0xff]
        %v2183 = vld [vmem:[%s2138 + $0x160] sm:$0xff]
        %v2184 = vld [vmem:[%s2138 + $0x168] sm:$0xff]
        %v2185 = vld [vmem:[%s2138 + $0x170] sm:$0xff]
        %v2186 = vld [vmem:[%s2138 + $0x178] sm:$0xff]
        %v2187 = vld [vmem:[%s2138 + $0x180] sm:$0xff]
        %v2188 = vld [vmem:[%s2138 + $0x188] sm:$0xff]
        %v2189 = vld [vmem:[%s2138 + $0x190] sm:$0xff]
        %v2190 = vld [vmem:[%s2138 + $0x198] sm:$0xff]
        %v2191 = vld [vmem:[%s2138 + $0x1a0] sm:$0xff]
        %v2192 = vld [vmem:[%s2138 + $0x1a8] sm:$0xff]
        %v2193 = vld [vmem:[%s2138 + $0x1b0] sm:$0xff]
        %v2194 = vld [vmem:[%s2138 + $0x1b8] sm:$0xff]
        %v2195 = vld [vmem:[%s2138 + $0x1c0] sm:$0xff]
        %v2196 = vld [vmem:[%s2138 + $0x1c8] sm:$0xff]
        %v2197 = vld [vmem:[%s2138 + $0x1d0] sm:$0xff]
        %v2198 = vld [vmem:[%s2138 + $0x1d8] sm:$0xff]
        %v2199 = vld [vmem:[%s2138 + $0x1e0] sm:$0xff]
        %v2200 = vld [vmem:[%s2138 + $0x1e8] sm:$0xff]
        %v2201 = vld [vmem:[%s2138 + $0x1f0] sm:$0xff]
        %v2202 = vld [vmem:[%s2138 + $0x1f8] sm:$0xff]
        %v2203 = vrot.slane %v1721, 2
        %2205 = vmatprep.subr.mxu0 %v2140
        %2206 = vmatpush1.msra.mxu0 %v2139
        %2207 = vmatprep.subr.mxu0 %v2144
        %2208 = vmatpush1.msra.mxu0 %v2143
        %2209 = vmatprep.subr.mxu0 %v2148
        %2210 = vmatpush1.msra.mxu0 %v2147
        %2211 = vmatprep.subr.mxu0 %v2152
        %2212 = vmatpush1.msra.mxu0 %v2151
        %2213 = vmatprep.subr.mxu0 %v2156
        %2214 = vmatpush1.msra.mxu0 %v2155
        %2215 = vmatprep.subr.mxu0 %v2160
        %2216 = vmatpush1.msra.mxu0 %v2159
        %2217 = vmatprep.subr.mxu0 %v2164
        %2218 = vmatpush1.msra.mxu0 %v2163
        %2219 = vmatprep.subr.mxu0 %v2168
        %2220 = vmatpush1.msra.mxu0 %v2167
        %2221 = vmatprep.subr.mxu0 %v2172
        %2222 = vmatpush1.msra.mxu0 %v2171
        %2223 = vmatprep.subr.mxu0 %v2176
        %2224 = vmatpush1.msra.mxu0 %v2175
        %2225 = vmatprep.subr.mxu0 %v2180
        %2226 = vmatpush1.msra.mxu0 %v2179
        %2227 = vmatprep.subr.mxu0 %v2184
        %2228 = vmatpush1.msra.mxu0 %v2183
        %2229 = vmatprep.subr.mxu0 %v2188
        %2230 = vmatpush1.msra.mxu0 %v2187
        %2231 = vmatprep.subr.mxu0 %v2192
        %2232 = vmatpush1.msra.mxu0 %v2191
        %2233 = vmatprep.subr.mxu0 %v2196
        %2234 = vmatpush1.msra.mxu0 %v2195
        %2235 = vmatprep.subr.mxu0 %v2200
        %2236 = vmatpush1.msra.mxu0 %v2199
        %2237 = vmatprep.subr.mxu0 0.0
        %2238 = vmatpush1.msra.mxu0 0.0
        %2239 = vmatprep.subr.mxu0 0.0
        %2240 = vmatpush1.msra.mxu0 0.0
        %2241 = vmatprep.subr.mxu0 0.0
        %2242 = vmatpush1.msra.mxu0 0.0
        %2243 = vmatprep.subr.mxu0 0.0
        %2244 = vmatpush1.msra.mxu0 0.0
        %2245 = vmatprep.subr.mxu0 0.0
        %2246 = vmatpush1.msra.mxu0 0.0
        %2247 = vmatprep.subr.mxu0 0.0
        %2248 = vmatpush1.msra.mxu0 0.0
        %2249 = vmatprep.subr.mxu0 0.0
        %2250 = vmatpush1.msra.mxu0 0.0
        %2251 = vmatprep.subr.mxu0 0.0
        %2252 = vmatpush1.msra.mxu0 0.0
        %2253 = vmatprep.subr.mxu0 0.0
        %2254 = vmatpush1.msra.mxu0 0.0
        %2255 = vmatprep.subr.mxu0 0.0
        %2256 = vmatpush1.msra.mxu0 0.0
        %2257 = vmatprep.subr.mxu0 0.0
        %2258 = vmatpush1.msra.mxu0 0.0
        %2259 = vmatprep.subr.mxu0 0.0
        %2260 = vmatpush1.msra.mxu0 0.0
        %2261 = vmatprep.subr.mxu0 0.0
        %2262 = vmatpush1.msra.mxu0 0.0
        %2263 = vmatprep.subr.mxu0 0.0
        %2264 = vmatpush1.msra.mxu0 0.0
        %2265 = vmatprep.subr.mxu0 0.0
        %2266 = vmatpush1.msra.mxu0 0.0
        %2267 = vmatprep.subr.mxu0 0.0
        %2268 = vmatpush1.msra.mxu0 0.0
        %2269 = vmatprep.mubr.f32.mxu0 0.0
        %2270 = vmatmul.mubr.f32.gmra.mrb[0].mxu0 %v2203
        %v2271 = vpop.f32.mrb[0].mxu0
        %v2272 = vadd.f32 0.0, %v2271
        %v2273 = vpop.f32.mrb[0].mxu0
        %v2274 = vadd.f32 0.0, %v2273
        %2275 = vdwg.mxu0
        %2276 = vmatprep.subr.mxu0 %v2142
        %2277 = vmatpush1.msra.mxu0 %v2141
        %2278 = vmatprep.subr.mxu0 %v2146
        %2279 = vmatpush1.msra.mxu0 %v2145
        %2280 = vmatprep.subr.mxu0 %v2150
        %2281 = vmatpush1.msra.mxu0 %v2149
        %2282 = vmatprep.subr.mxu0 %v2154
        %2283 = vmatpush1.msra.mxu0 %v2153
        %2284 = vmatprep.subr.mxu0 %v2158
        %2285 = vmatpush1.msra.mxu0 %v2157
        %2286 = vmatprep.subr.mxu0 %v2162
        %2287 = vmatpush1.msra.mxu0 %v2161
        %2288 = vmatprep.subr.mxu0 %v2166
        %2289 = vmatpush1.msra.mxu0 %v2165
        %2290 = vmatprep.subr.mxu0 %v2170
        %2291 = vmatpush1.msra.mxu0 %v2169
        %2292 = vmatprep.subr.mxu0 %v2174
        %2293 = vmatpush1.msra.mxu0 %v2173
        %2294 = vmatprep.subr.mxu0 %v2178
        %2295 = vmatpush1.msra.mxu0 %v2177
        %2296 = vmatprep.subr.mxu0 %v2182
        %2297 = vmatpush1.msra.mxu0 %v2181
        %2298 = vmatprep.subr.mxu0 %v2186
        %2299 = vmatpush1.msra.mxu0 %v2185
        %2300 = vmatprep.subr.mxu0 %v2190
        %2301 = vmatpush1.msra.mxu0 %v2189
        %2302 = vmatprep.subr.mxu0 %v2194
        %2303 = vmatpush1.msra.mxu0 %v2193
        %2304 = vmatprep.subr.mxu0 %v2198
        %2305 = vmatpush1.msra.mxu0 %v2197
        %2306 = vmatprep.subr.mxu0 %v2202
        %2307 = vmatpush1.msra.mxu0 %v2201
        %2308 = vmatprep.subr.mxu0 0.0
        %2309 = vmatpush1.msra.mxu0 0.0
        %2310 = vmatprep.subr.mxu0 0.0
        %2311 = vmatpush1.msra.mxu0 0.0
        %2312 = vmatprep.subr.mxu0 0.0
        %2313 = vmatpush1.msra.mxu0 0.0
        %2314 = vmatprep.subr.mxu0 0.0
        %2315 = vmatpush1.msra.mxu0 0.0
        %2316 = vmatprep.subr.mxu0 0.0
        %2317 = vmatpush1.msra.mxu0 0.0
        %2318 = vmatprep.subr.mxu0 0.0
        %2319 = vmatpush1.msra.mxu0 0.0
        %2320 = vmatprep.subr.mxu0 0.0
        %2321 = vmatpush1.msra.mxu0 0.0
        %2322 = vmatprep.subr.mxu0 0.0
        %2323 = vmatpush1.msra.mxu0 0.0
        %2324 = vmatprep.subr.mxu0 0.0
        %2325 = vmatpush1.msra.mxu0 0.0
        %2326 = vmatprep.subr.mxu0 0.0
        %2327 = vmatpush1.msra.mxu0 0.0
        %2328 = vmatprep.subr.mxu0 0.0
        %2329 = vmatpush1.msra.mxu0 0.0
        %2330 = vmatprep.subr.mxu0 0.0
        %2331 = vmatpush1.msra.mxu0 0.0
        %2332 = vmatprep.subr.mxu0 0.0
        %2333 = vmatpush1.msra.mxu0 0.0
        %2334 = vmatprep.subr.mxu0 0.0
        %2335 = vmatpush1.msra.mxu0 0.0
        %2336 = vmatprep.subr.mxu0 0.0
        %2337 = vmatpush1.msra.mxu0 0.0
        %2338 = vmatprep.subr.mxu0 0.0
        %2339 = vmatpush1.msra.mxu0 0.0
        %2340 = vmatprep.mubr.f32.mxu0 0.0
        %2341 = vmatmul.mubr.f32.gmra.mrb[0].mxu0 %v2203
        %v2342 = vpop.f32.mrb[0].mxu0
        %v2343 = vadd.f32 0.0, %v2342
        %v2344 = vpop.f32.mrb[0].mxu0
        %v2345 = vadd.f32 0.0, %v2344
        %2346 = vdwg.mxu0
        %v2347 = vadd.f32 %v2063, %v2272
        %v2348 = vadd.f32 %v2065, %v2274
        %v2349 = vadd.f32 %v2134, %v2343
        %v2350 = vadd.f32 %v2136, %v2345
        %s2351 = scalar_lea.vmem [#allocation5], 1536
        %v2352 = vld [vmem:[%s2351] sm:$0xff]
        %v2353 = vld [vmem:[%s2351 + $0x8] sm:$0xff]
        %v2354 = vld [vmem:[%s2351 + $0x10] sm:$0xff]
        %v2355 = vld [vmem:[%s2351 + $0x18] sm:$0xff]
        %v2356 = vld [vmem:[%s2351 + $0x20] sm:$0xff]
        %v2357 = vld [vmem:[%s2351 + $0x28] sm:$0xff]
        %v2358 = vld [vmem:[%s2351 + $0x30] sm:$0xff]
        %v2359 = vld [vmem:[%s2351 + $0x38] sm:$0xff]
        %v2360 = vld [vmem:[%s2351 + $0x40] sm:$0xff]
        %v2361 = vld [vmem:[%s2351 + $0x48] sm:$0xff]
        %v2362 = vld [vmem:[%s2351 + $0x50] sm:$0xff]
        %v2363 = vld [vmem:[%s2351 + $0x58] sm:$0xff]
        %v2364 = vld [vmem:[%s2351 + $0x60] sm:$0xff]
        %v2365 = vld [vmem:[%s2351 + $0x68] sm:$0xff]
        %v2366 = vld [vmem:[%s2351 + $0x70] sm:$0xff]
        %v2367 = vld [vmem:[%s2351 + $0x78] sm:$0xff]
        %v2368 = vld [vmem:[%s2351 + $0x80] sm:$0xff]
        %v2369 = vld [vmem:[%s2351 + $0x88] sm:$0xff]
        %v2370 = vld [vmem:[%s2351 + $0x90] sm:$0xff]
        %v2371 = vld [vmem:[%s2351 + $0x98] sm:$0xff]
        %v2372 = vld [vmem:[%s2351 + $0xa0] sm:$0xff]
        %v2373 = vld [vmem:[%s2351 + $0xa8] sm:$0xff]
        %v2374 = vld [vmem:[%s2351 + $0xb0] sm:$0xff]
        %v2375 = vld [vmem:[%s2351 + $0xb8] sm:$0xff]
        %v2376 = vld [vmem:[%s2351 + $0xc0] sm:$0xff]
        %v2377 = vld [vmem:[%s2351 + $0xc8] sm:$0xff]
        %v2378 = vld [vmem:[%s2351 + $0xd0] sm:$0xff]
        %v2379 = vld [vmem:[%s2351 + $0xd8] sm:$0xff]
        %v2380 = vld [vmem:[%s2351 + $0xe0] sm:$0xff]
        %v2381 = vld [vmem:[%s2351 + $0xe8] sm:$0xff]
        %v2382 = vld [vmem:[%s2351 + $0xf0] sm:$0xff]
        %v2383 = vld [vmem:[%s2351 + $0xf8] sm:$0xff]
        %v2384 = vld [vmem:[%s2351 + $0x100] sm:$0xff]
        %v2385 = vld [vmem:[%s2351 + $0x108] sm:$0xff]
        %v2386 = vld [vmem:[%s2351 + $0x110] sm:$0xff]
        %v2387 = vld [vmem:[%s2351 + $0x118] sm:$0xff]
        %v2388 = vld [vmem:[%s2351 + $0x120] sm:$0xff]
        %v2389 = vld [vmem:[%s2351 + $0x128] sm:$0xff]
        %v2390 = vld [vmem:[%s2351 + $0x130] sm:$0xff]
        %v2391 = vld [vmem:[%s2351 + $0x138] sm:$0xff]
        %v2392 = vld [vmem:[%s2351 + $0x140] sm:$0xff]
        %v2393 = vld [vmem:[%s2351 + $0x148] sm:$0xff]
        %v2394 = vld [vmem:[%s2351 + $0x150] sm:$0xff]
        %v2395 = vld [vmem:[%s2351 + $0x158] sm:$0xff]
        %v2396 = vld [vmem:[%s2351 + $0x160] sm:$0xff]
        %v2397 = vld [vmem:[%s2351 + $0x168] sm:$0xff]
        %v2398 = vld [vmem:[%s2351 + $0x170] sm:$0xff]
        %v2399 = vld [vmem:[%s2351 + $0x178] sm:$0xff]
        %v2400 = vld [vmem:[%s2351 + $0x180] sm:$0xff]
        %v2401 = vld [vmem:[%s2351 + $0x188] sm:$0xff]
        %v2402 = vld [vmem:[%s2351 + $0x190] sm:$0xff]
        %v2403 = vld [vmem:[%s2351 + $0x198] sm:$0xff]
        %v2404 = vld [vmem:[%s2351 + $0x1a0] sm:$0xff]
        %v2405 = vld [vmem:[%s2351 + $0x1a8] sm:$0xff]
        %v2406 = vld [vmem:[%s2351 + $0x1b0] sm:$0xff]
        %v2407 = vld [vmem:[%s2351 + $0x1b8] sm:$0xff]
        %v2408 = vld [vmem:[%s2351 + $0x1c0] sm:$0xff]
        %v2409 = vld [vmem:[%s2351 + $0x1c8] sm:$0xff]
        %v2410 = vld [vmem:[%s2351 + $0x1d0] sm:$0xff]
        %v2411 = vld [vmem:[%s2351 + $0x1d8] sm:$0xff]
        %v2412 = vld [vmem:[%s2351 + $0x1e0] sm:$0xff]
        %v2413 = vld [vmem:[%s2351 + $0x1e8] sm:$0xff]
        %v2414 = vld [vmem:[%s2351 + $0x1f0] sm:$0xff]
        %v2415 = vld [vmem:[%s2351 + $0x1f8] sm:$0xff]
        %v2416 = vrot.slane %v1721, 3
        %2418 = vmatprep.subr.mxu0 %v2353
        %2419 = vmatpush1.msra.mxu0 %v2352
        %2420 = vmatprep.subr.mxu0 %v2357
        %2421 = vmatpush1.msra.mxu0 %v2356
        %2422 = vmatprep.subr.mxu0 %v2361
        %2423 = vmatpush1.msra.mxu0 %v2360
        %2424 = vmatprep.subr.mxu0 %v2365
        %2425 = vmatpush1.msra.mxu0 %v2364
        %2426 = vmatprep.subr.mxu0 %v2369
        %2427 = vmatpush1.msra.mxu0 %v2368
        %2428 = vmatprep.subr.mxu0 %v2373
        %2429 = vmatpush1.msra.mxu0 %v2372
        %2430 = vmatprep.subr.mxu0 %v2377
        %2431 = vmatpush1.msra.mxu0 %v2376
        %2432 = vmatprep.subr.mxu0 %v2381
        %2433 = vmatpush1.msra.mxu0 %v2380
        %2434 = vmatprep.subr.mxu0 %v2385
        %2435 = vmatpush1.msra.mxu0 %v2384
        %2436 = vmatprep.subr.mxu0 %v2389
        %2437 = vmatpush1.msra.mxu0 %v2388
        %2438 = vmatprep.subr.mxu0 %v2393
        %2439 = vmatpush1.msra.mxu0 %v2392
        %2440 = vmatprep.subr.mxu0 %v2397
        %2441 = vmatpush1.msra.mxu0 %v2396
        %2442 = vmatprep.subr.mxu0 %v2401
        %2443 = vmatpush1.msra.mxu0 %v2400
        %2444 = vmatprep.subr.mxu0 %v2405
        %2445 = vmatpush1.msra.mxu0 %v2404
        %2446 = vmatprep.subr.mxu0 %v2409
        %2447 = vmatpush1.msra.mxu0 %v2408
        %2448 = vmatprep.subr.mxu0 %v2413
        %2449 = vmatpush1.msra.mxu0 %v2412
        %2450 = vmatprep.subr.mxu0 0.0
        %2451 = vmatpush1.msra.mxu0 0.0
        %2452 = vmatprep.subr.mxu0 0.0
        %2453 = vmatpush1.msra.mxu0 0.0
        %2454 = vmatprep.subr.mxu0 0.0
        %2455 = vmatpush1.msra.mxu0 0.0
        %2456 = vmatprep.subr.mxu0 0.0
        %2457 = vmatpush1.msra.mxu0 0.0
        %2458 = vmatprep.subr.mxu0 0.0
        %2459 = vmatpush1.msra.mxu0 0.0
        %2460 = vmatprep.subr.mxu0 0.0
        %2461 = vmatpush1.msra.mxu0 0.0
        %2462 = vmatprep.subr.mxu0 0.0
        %2463 = vmatpush1.msra.mxu0 0.0
        %2464 = vmatprep.subr.mxu0 0.0
        %2465 = vmatpush1.msra.mxu0 0.0
        %2466 = vmatprep.subr.mxu0 0.0
        %2467 = vmatpush1.msra.mxu0 0.0
        %2468 = vmatprep.subr.mxu0 0.0
        %2469 = vmatpush1.msra.mxu0 0.0
        %2470 = vmatprep.subr.mxu0 0.0
        %2471 = vmatpush1.msra.mxu0 0.0
        %2472 = vmatprep.subr.mxu0 0.0
        %2473 = vmatpush1.msra.mxu0 0.0
        %2474 = vmatprep.subr.mxu0 0.0
        %2475 = vmatpush1.msra.mxu0 0.0
        %2476 = vmatprep.subr.mxu0 0.0
        %2477 = vmatpush1.msra.mxu0 0.0
        %2478 = vmatprep.subr.mxu0 0.0
        %2479 = vmatpush1.msra.mxu0 0.0
        %2480 = vmatprep.subr.mxu0 0.0
        %2481 = vmatpush1.msra.mxu0 0.0
        %2482 = vmatprep.mubr.f32.mxu0 0.0
        %2483 = vmatmul.mubr.f32.gmra.mrb[0].mxu0 %v2416
        %v2484 = vpop.f32.mrb[0].mxu0
        %v2485 = vadd.f32 0.0, %v2484
        %v2486 = vpop.f32.mrb[0].mxu0
        %v2487 = vadd.f32 0.0, %v2486
        %2488 = vdwg.mxu0
        %2489 = vmatprep.subr.mxu0 %v2355
        %2490 = vmatpush1.msra.mxu0 %v2354
        %2491 = vmatprep.subr.mxu0 %v2359
        %2492 = vmatpush1.msra.mxu0 %v2358
        %2493 = vmatprep.subr.mxu0 %v2363
        %2494 = vmatpush1.msra.mxu0 %v2362
        %2495 = vmatprep.subr.mxu0 %v2367
        %2496 = vmatpush1.msra.mxu0 %v2366
        %2497 = vmatprep.subr.mxu0 %v2371
        %2498 = vmatpush1.msra.mxu0 %v2370
        %2499 = vmatprep.subr.mxu0 %v2375
        %2500 = vmatpush1.msra.mxu0 %v2374
        %2501 = vmatprep.subr.mxu0 %v2379
        %2502 = vmatpush1.msra.mxu0 %v2378
        %2503 = vmatprep.subr.mxu0 %v2383
        %2504 = vmatpush1.msra.mxu0 %v2382
        %2505 = vmatprep.subr.mxu0 %v2387
        %2506 = vmatpush1.msra.mxu0 %v2386
        %2507 = vmatprep.subr.mxu0 %v2391
        %2508 = vmatpush1.msra.mxu0 %v2390
        %2509 = vmatprep.subr.mxu0 %v2395
        %2510 = vmatpush1.msra.mxu0 %v2394
        %2511 = vmatprep.subr.mxu0 %v2399
        %2512 = vmatpush1.msra.mxu0 %v2398
        %2513 = vmatprep.subr.mxu0 %v2403
        %2514 = vmatpush1.msra.mxu0 %v2402
        %2515 = vmatprep.subr.mxu0 %v2407
        %2516 = vmatpush1.msra.mxu0 %v2406
        %2517 = vmatprep.subr.mxu0 %v2411
        %2518 = vmatpush1.msra.mxu0 %v2410
        %2519 = vmatprep.subr.mxu0 %v2415
        %2520 = vmatpush1.msra.mxu0 %v2414
        %2521 = vmatprep.subr.mxu0 0.0
        %2522 = vmatpush1.msra.mxu0 0.0
        %2523 = vmatprep.subr.mxu0 0.0
        %2524 = vmatpush1.msra.mxu0 0.0
        %2525 = vmatprep.subr.mxu0 0.0
        %2526 = vmatpush1.msra.mxu0 0.0
        %2527 = vmatprep.subr.mxu0 0.0
        %2528 = vmatpush1.msra.mxu0 0.0
        %2529 = vmatprep.subr.mxu0 0.0
        %2530 = vmatpush1.msra.mxu0 0.0
        %2531 = vmatprep.subr.mxu0 0.0
        %2532 = vmatpush1.msra.mxu0 0.0
        %2533 = vmatprep.subr.mxu0 0.0
        %2534 = vmatpush1.msra.mxu0 0.0
        %2535 = vmatprep.subr.mxu0 0.0
        %2536 = vmatpush1.msra.mxu0 0.0
        %2537 = vmatprep.subr.mxu0 0.0
        %2538 = vmatpush1.msra.mxu0 0.0
        %2539 = vmatprep.subr.mxu0 0.0
        %2540 = vmatpush1.msra.mxu0 0.0
        %2541 = vmatprep.subr.mxu0 0.0
        %2542 = vmatpush1.msra.mxu0 0.0
        %2543 = vmatprep.subr.mxu0 0.0
        %2544 = vmatpush1.msra.mxu0 0.0
        %2545 = vmatprep.subr.mxu0 0.0
        %2546 = vmatpush1.msra.mxu0 0.0
        %2547 = vmatprep.subr.mxu0 0.0
        %2548 = vmatpush1.msra.mxu0 0.0
        %2549 = vmatprep.subr.mxu0 0.0
        %2550 = vmatpush1.msra.mxu0 0.0
        %2551 = vmatprep.subr.mxu0 0.0
        %2552 = vmatpush1.msra.mxu0 0.0
        %2553 = vmatprep.mubr.f32.mxu0 0.0
        %2554 = vmatmul.mubr.f32.gmra.mrb[0].mxu0 %v2416
        %v2555 = vpop.f32.mrb[0].mxu0
        %v2556 = vadd.f32 0.0, %v2555
        %v2557 = vpop.f32.mrb[0].mxu0
        %v2558 = vadd.f32 0.0, %v2557
        %2559 = vdwg.mxu0
        %v2560 = vadd.f32 %v2347, %v2485
        %v2561 = vadd.f32 %v2348, %v2487
        %v2562 = vadd.f32 %v2349, %v2556
        %v2563 = vadd.f32 %v2350, %v2558
        %v2564 = vld [vmem:[%s7] sm:$0xf]
        %v2566 = vlaneseq
        %v2567 = vshrl.u32 %v2566, 7
        %v2568 = vsub.s32 0, %v2567
        %v2569 = vrot.slane %v2564, %v2568
        %v2570 = vlaneseq
        %v2571 = vshrl.u32 %v2570, 7
        %v2572 = vsub.s32 1, %v2571
        %v2573 = vrot.slane %v2564, %v2572
        %v2574 = vlaneseq
        %v2575 = vshrl.u32 %v2574, 7
        %v2576 = vsub.s32 2, %v2575
        %v2577 = vrot.slane %v2564, %v2576
        %v2578 = vlaneseq
        %v2579 = vshrl.u32 %v2578, 7
        %v2580 = vsub.s32 3, %v2579
        %v2581 = vrot.slane %v2564, %v2580
        %v2586 = vadd.f32 %v2560, %v2569
        %v2587 = vadd.f32 %v2561, %v2573
        %v2588 = vadd.f32 %v2562, %v2577
        %v2589 = vadd.f32 %v2563, %v2581
        %v2590 = vmax.f32 %v2586, 0.0
        %v2591 = vmax.f32 %v2587, 0.0
        %v2592 = vmax.f32 %v2588, 0.0
        %v2593 = vmax.f32 %v2589, 0.0
        %v2594 = vld [vmem:[%s8] sm:$0xff]
        %v2595 = vld [vmem:[%s8 + $0x8] sm:$0xff]
        %v2596 = vld [vmem:[%s8 + $0x10] sm:$0xff]
        %v2597 = vld [vmem:[%s8 + $0x18] sm:$0xff]
        %v2598 = vld [vmem:[%s8 + $0x20] sm:$0xff]
        %v2599 = vld [vmem:[%s8 + $0x28] sm:$0xff]
        %v2600 = vld [vmem:[%s8 + $0x30] sm:$0xff]
        %v2601 = vld [vmem:[%s8 + $0x38] sm:$0xff]
        %v2602 = vld [vmem:[%s8 + $0x40] sm:$0xff]
        %v2603 = vld [vmem:[%s8 + $0x48] sm:$0xff]
        %v2604 = vld [vmem:[%s8 + $0x50] sm:$0xff]
        %v2605 = vld [vmem:[%s8 + $0x58] sm:$0xff]
        %v2606 = vld [vmem:[%s8 + $0x60] sm:$0xff]
        %v2607 = vld [vmem:[%s8 + $0x68] sm:$0xff]
        %v2608 = vld [vmem:[%s8 + $0x70] sm:$0xff]
        %v2609 = vld [vmem:[%s8 + $0x78] sm:$0xff]
        %v2610 = vld [vmem:[%s8 + $0x80] sm:$0xff]
        %v2611 = vld [vmem:[%s8 + $0x88] sm:$0xff]
        %v2612 = vld [vmem:[%s8 + $0x90] sm:$0xff]
        %v2613 = vld [vmem:[%s8 + $0x98] sm:$0xff]
        %v2614 = vld [vmem:[%s8 + $0xa0] sm:$0xff]
        %v2615 = vld [vmem:[%s8 + $0xa8] sm:$0xff]
        %v2616 = vld [vmem:[%s8 + $0xb0] sm:$0xff]
        %v2617 = vld [vmem:[%s8 + $0xb8] sm:$0xff]
        %v2618 = vld [vmem:[%s8 + $0xc0] sm:$0xff]
        %v2619 = vld [vmem:[%s8 + $0xc8] sm:$0xff]
        %v2620 = vld [vmem:[%s8 + $0xd0] sm:$0xff]
        %v2621 = vld [vmem:[%s8 + $0xd8] sm:$0xff]
        %v2622 = vld [vmem:[%s8 + $0xe0] sm:$0xff]
        %v2623 = vld [vmem:[%s8 + $0xe8] sm:$0xff]
        %v2624 = vld [vmem:[%s8 + $0xf0] sm:$0xff]
        %v2625 = vld [vmem:[%s8 + $0xf8] sm:$0xff]
        %v2626 = vld [vmem:[%s8 + $0x100] sm:$0xff]
        %v2627 = vld [vmem:[%s8 + $0x108] sm:$0xff]
        %v2628 = vld [vmem:[%s8 + $0x110] sm:$0xff]
        %v2629 = vld [vmem:[%s8 + $0x118] sm:$0xff]
        %v2630 = vld [vmem:[%s8 + $0x120] sm:$0xff]
        %v2631 = vld [vmem:[%s8 + $0x128] sm:$0xff]
        %v2632 = vld [vmem:[%s8 + $0x130] sm:$0xff]
        %v2633 = vld [vmem:[%s8 + $0x138] sm:$0xff]
        %v2634 = vld [vmem:[%s8 + $0x140] sm:$0xff]
        %v2635 = vld [vmem:[%s8 + $0x148] sm:$0xff]
        %v2636 = vld [vmem:[%s8 + $0x150] sm:$0xff]
        %v2637 = vld [vmem:[%s8 + $0x158] sm:$0xff]
        %v2638 = vld [vmem:[%s8 + $0x160] sm:$0xff]
        %v2639 = vld [vmem:[%s8 + $0x168] sm:$0xff]
        %v2640 = vld [vmem:[%s8 + $0x170] sm:$0xff]
        %v2641 = vld [vmem:[%s8 + $0x178] sm:$0xff]
        %v2642 = vld [vmem:[%s8 + $0x180] sm:$0xff]
        %v2643 = vld [vmem:[%s8 + $0x188] sm:$0xff]
        %v2644 = vld [vmem:[%s8 + $0x190] sm:$0xff]
        %v2645 = vld [vmem:[%s8 + $0x198] sm:$0xff]
        %v2646 = vld [vmem:[%s8 + $0x1a0] sm:$0xff]
        %v2647 = vld [vmem:[%s8 + $0x1a8] sm:$0xff]
        %v2648 = vld [vmem:[%s8 + $0x1b0] sm:$0xff]
        %v2649 = vld [vmem:[%s8 + $0x1b8] sm:$0xff]
        %v2650 = vld [vmem:[%s8 + $0x1c0] sm:$0xff]
        %v2651 = vld [vmem:[%s8 + $0x1c8] sm:$0xff]
        %v2652 = vld [vmem:[%s8 + $0x1d0] sm:$0xff]
        %v2653 = vld [vmem:[%s8 + $0x1d8] sm:$0xff]
        %v2654 = vld [vmem:[%s8 + $0x1e0] sm:$0xff]
        %v2655 = vld [vmem:[%s8 + $0x1e8] sm:$0xff]
        %v2656 = vld [vmem:[%s8 + $0x1f0] sm:$0xff]
        %v2657 = vld [vmem:[%s8 + $0x1f8] sm:$0xff]
        %v2658 = vld [vmem:[%s9] sm:$0x1]
        %2659 = vmatprep.subr.mxu0 0.0
        %2660 = vmatpush1.msra.mxu0 %v2594
        %2661 = vmatprep.subr.mxu0 0.0
        %2662 = vmatpush1.msra.mxu0 %v2595
        %2663 = vmatprep.subr.mxu0 0.0
        %2664 = vmatpush1.msra.mxu0 %v2596
        %2665 = vmatprep.subr.mxu0 0.0
        %2666 = vmatpush1.msra.mxu0 %v2597
        %2667 = vmatprep.subr.mxu0 0.0
        %2668 = vmatpush1.msra.mxu0 %v2598
        %2669 = vmatprep.subr.mxu0 0.0
        %2670 = vmatpush1.msra.mxu0 %v2599
        %2671 = vmatprep.subr.mxu0 0.0
        %2672 = vmatpush1.msra.mxu0 %v2600
        %2673 = vmatprep.subr.mxu0 0.0
        %2674 = vmatpush1.msra.mxu0 %v2601
        %2675 = vmatprep.subr.mxu0 0.0
        %2676 = vmatpush1.msra.mxu0 %v2602
        %2677 = vmatprep.subr.mxu0 0.0
        %2678 = vmatpush1.msra.mxu0 %v2603
        %2679 = vmatprep.subr.mxu0 0.0
        %2680 = vmatpush1.msra.mxu0 %v2604
        %2681 = vmatprep.subr.mxu0 0.0
        %2682 = vmatpush1.msra.mxu0 %v2605
        %2683 = vmatprep.subr.mxu0 0.0
        %2684 = vmatpush1.msra.mxu0 %v2606
        %2685 = vmatprep.subr.mxu0 0.0
        %2686 = vmatpush1.msra.mxu0 %v2607
        %2687 = vmatprep.subr.mxu0 0.0
        %2688 = vmatpush1.msra.mxu0 %v2608
        %2689 = vmatprep.subr.mxu0 0.0
        %2690 = vmatpush1.msra.mxu0 %v2609
        %2691 = vmatprep.subr.mxu0 0.0
        %2692 = vmatpush1.msra.mxu0 %v2610
        %2693 = vmatprep.subr.mxu0 0.0
        %2694 = vmatpush1.msra.mxu0 %v2611
        %2695 = vmatprep.subr.mxu0 0.0
        %2696 = vmatpush1.msra.mxu0 %v2612
        %2697 = vmatprep.subr.mxu0 0.0
        %2698 = vmatpush1.msra.mxu0 %v2613
        %2699 = vmatprep.subr.mxu0 0.0
        %2700 = vmatpush1.msra.mxu0 %v2614
        %2701 = vmatprep.subr.mxu0 0.0
        %2702 = vmatpush1.msra.mxu0 %v2615
        %2703 = vmatprep.subr.mxu0 0.0
        %2704 = vmatpush1.msra.mxu0 %v2616
        %2705 = vmatprep.subr.mxu0 0.0
        %2706 = vmatpush1.msra.mxu0 %v2617
        %2707 = vmatprep.subr.mxu0 0.0
        %2708 = vmatpush1.msra.mxu0 %v2618
        %2709 = vmatprep.subr.mxu0 0.0
        %2710 = vmatpush1.msra.mxu0 %v2619
        %2711 = vmatprep.subr.mxu0 0.0
        %2712 = vmatpush1.msra.mxu0 %v2620
        %2713 = vmatprep.subr.mxu0 0.0
        %2714 = vmatpush1.msra.mxu0 %v2621
        %2715 = vmatprep.subr.mxu0 0.0
        %2716 = vmatpush1.msra.mxu0 %v2622
        %2717 = vmatprep.subr.mxu0 0.0
        %2718 = vmatpush1.msra.mxu0 %v2623
        %2719 = vmatprep.subr.mxu0 0.0
        %2720 = vmatpush1.msra.mxu0 %v2624
        %2721 = vmatprep.subr.mxu0 0.0
        %2722 = vmatpush1.msra.mxu0 %v2625
        %2723 = vmatprep.mubr.f32.mxu0 %v2591
        %2724 = vmatmul.mubr.f32.gmra.mrb[0].mxu0 %v2590
        %v2725 = vpop.f32.mrb[0].mxu0
        %v2726 = vadd.f32 %v2658, %v2725
        %v2727 = vpop.f32.mrb[0].mxu0
        %2728 = vdwg.mxu0
        %2729 = vmatprep.subr.mxu0 0.0
        %2730 = vmatpush1.msra.mxu0 %v2626
        %2731 = vmatprep.subr.mxu0 0.0
        %2732 = vmatpush1.msra.mxu0 %v2627
        %2733 = vmatprep.subr.mxu0 0.0
        %2734 = vmatpush1.msra.mxu0 %v2628
        %2735 = vmatprep.subr.mxu0 0.0
        %2736 = vmatpush1.msra.mxu0 %v2629
        %2737 = vmatprep.subr.mxu0 0.0
        %2738 = vmatpush1.msra.mxu0 %v2630
        %2739 = vmatprep.subr.mxu0 0.0
        %2740 = vmatpush1.msra.mxu0 %v2631
        %2741 = vmatprep.subr.mxu0 0.0
        %2742 = vmatpush1.msra.mxu0 %v2632
        %2743 = vmatprep.subr.mxu0 0.0
        %2744 = vmatpush1.msra.mxu0 %v2633
        %2745 = vmatprep.subr.mxu0 0.0
        %2746 = vmatpush1.msra.mxu0 %v2634
        %2747 = vmatprep.subr.mxu0 0.0
        %2748 = vmatpush1.msra.mxu0 %v2635
        %2749 = vmatprep.subr.mxu0 0.0
        %2750 = vmatpush1.msra.mxu0 %v2636
        %2751 = vmatprep.subr.mxu0 0.0
        %2752 = vmatpush1.msra.mxu0 %v2637
        %2753 = vmatprep.subr.mxu0 0.0
        %2754 = vmatpush1.msra.mxu0 %v2638
        %2755 = vmatprep.subr.mxu0 0.0
        %2756 = vmatpush1.msra.mxu0 %v2639
        %2757 = vmatprep.subr.mxu0 0.0
        %2758 = vmatpush1.msra.mxu0 %v2640
        %2759 = vmatprep.subr.mxu0 0.0
        %2760 = vmatpush1.msra.mxu0 %v2641
        %2761 = vmatprep.subr.mxu0 0.0
        %2762 = vmatpush1.msra.mxu0 %v2642
        %2763 = vmatprep.subr.mxu0 0.0
        %2764 = vmatpush1.msra.mxu0 %v2643
        %2765 = vmatprep.subr.mxu0 0.0
        %2766 = vmatpush1.msra.mxu0 %v2644
        %2767 = vmatprep.subr.mxu0 0.0
        %2768 = vmatpush1.msra.mxu0 %v2645
        %2769 = vmatprep.subr.mxu0 0.0
        %2770 = vmatpush1.msra.mxu0 %v2646
        %2771 = vmatprep.subr.mxu0 0.0
        %2772 = vmatpush1.msra.mxu0 %v2647
        %2773 = vmatprep.subr.mxu0 0.0
        %2774 = vmatpush1.msra.mxu0 %v2648
        %2775 = vmatprep.subr.mxu0 0.0
        %2776 = vmatpush1.msra.mxu0 %v2649
        %2777 = vmatprep.subr.mxu0 0.0
        %2778 = vmatpush1.msra.mxu0 %v2650
        %2779 = vmatprep.subr.mxu0 0.0
        %2780 = vmatpush1.msra.mxu0 %v2651
        %2781 = vmatprep.subr.mxu0 0.0
        %2782 = vmatpush1.msra.mxu0 %v2652
        %2783 = vmatprep.subr.mxu0 0.0
        %2784 = vmatpush1.msra.mxu0 %v2653
        %2785 = vmatprep.subr.mxu0 0.0
        %2786 = vmatpush1.msra.mxu0 %v2654
        %2787 = vmatprep.subr.mxu0 0.0
        %2788 = vmatpush1.msra.mxu0 %v2655
        %2789 = vmatprep.subr.mxu0 0.0
        %2790 = vmatpush1.msra.mxu0 %v2656
        %2791 = vmatprep.subr.mxu0 0.0
        %2792 = vmatpush1.msra.mxu0 %v2657
        %2793 = vmatprep.mubr.f32.mxu0 %v2593
        %2794 = vmatmul.mubr.f32.gmra.mrb[0].mxu0 %v2592
        %v2795 = vpop.f32.mrb[0].mxu0
        %v2796 = vadd.f32 %v2726, %v2795
        %v2797 = vpop.f32.mrb[0].mxu0
        %2798 = vdwg.mxu0
        %vm2799 = vcmask 73728
        %2800 = vst.msk [vmem:[%s381] sm:$0x1] %vm2799, %v2796
        %s2801 = sand.u32 %s249, 1
        %s2802 = scalar_lea.sflag [#allocation4], %s2801
        %s2803 = sand.u32 %s249, 1
        %s2804 = scalar_lea.vmem [#allocation7], %s2803
        // Predicated region
        $region69: #{net_forward.1} parent=59 // pred_check
          %p2805 = pneg %p259
        $region70: #{net_forward.1} parent=59 // pred_check_branch
          %2807 = sbr.rel (%p2805) target = $region72
        $region71: #{net_forward.1} parent=59 // pred_region
          %s2809 = ssub.s32 16, 16
          %2810 = vsyncadd %s2802, %s2809
          %s2811 = smul.addr %s26, 16
          %s2812 = scalar_lea.hbm %s10, %s2811
          %s2814 = sshll.u32 %s2804, 4
          %s2815 = int_to_ptr.vmem [resolvable:$true] %s2814
          %2817 = dma.vmem_to_hbm [thread:$0]  %s2815, 16, %s2812, %s2802
        $region72: #{net_forward.1} parent=59 // pred_fallthru
          _
      $region60: #{net_forward.1} parent=5 // pred_fallthru
        _
      %p2818 = scmp.le.s32.totalorder 2, %s21
      // Predicated region
      $region73: #{net_forward.1} parent=5 // pred_check
        %p2819 = pneg %p2818
      $region74: #{net_forward.1} parent=5 // pred_check_branch
        %2821 = sbr.rel (%p2819) target = $region76
      $region75: #{net_forward.1} parent=5 // pred_region
        %s2822 = ssub.s32 %s21, 2
        // Predicated region
        $region77: #{net_forward.1} parent=75 // pred_check
          %p2823 = pneg %p265
        $region78: #{net_forward.1} parent=75 // pred_check_branch
          %2825 = sbr.rel (%p2823) target = $region80
        $region79: #{net_forward.1} parent=75 // pred_region
          %s2826 = sand.u32 %s250, 1
          %s2827 = scalar_lea.sflag [#allocation4], %s2826
          %s2828 = sand.u32 %s250, 1
          %s2829 = scalar_lea.vmem [#allocation7], %s2828
          %2830 = dma.done %s2827, 16
        $region80: #{net_forward.1} parent=75 // pred_fallthru
          _
      $region76: #{net_forward.1} parent=5 // pred_fallthru
        _
    $region6: #{net_forward.1} parent=1 // loop_footer
      %s25 = sadd.s32 1, %s21
    $region7: #{net_forward.1} parent=1 // loop_footer_branch
      %20 = sbr.rel target = $region3
    $region8: #{net_forward.1} parent=1 // loop_exit
      _
    %2831 = vsyncpa [#allocation3], 1
    %s2832 = scalar_lea.sflag [#allocation3], 1
    %2833 = vsyncpa %s2832, 1
    %2834 = vsyncpa [#allocation6], 1
    %2835 = vsyncpa [#allocation4], 1
    %s2836 = scalar_lea.sflag [#allocation4], 1
    %2837 = vsyncpa %s2836, 1

</llo_original>
